<compile_context>
chip_gen: v7x
topology: tpu7x:2x2x1
jax: 0.10.0
libtpu: 0.0.40
codegen_flags: <defaults>
</compile_context>

<pallas_src>
import jax
import jax.numpy as jnp
from jax.experimental import pallas as pl
from jax.experimental.pallas import tpu as pltpu


# ----------------------------- Pallas kernel ------------------------------ #
def _policy_mlp_kernel(x_ref, w1_ref, b1_ref, w2_ref, b2_ref, out_ref, h_ref):
    # x:  (tm, H)  bf16     w1: (H, F)   bf16    b1: (1, F)  f32
    # w2: (F, tv)  bf16     b2: (1, tv)  f32     out: (tm, tv) bf16
    # h_ref: VMEM scratch (tm, F) bf16 -- layer-1 activations, computed once
    # per row tile (vocab grid index == 0) and reused for every vocab tile.
    @pl.when(pl.program_id(1) == 0)
    def _():
        h = jnp.dot(x_ref[...], w1_ref[...],
                    preferred_element_type=jnp.float32)
        h = jnp.maximum(h + b1_ref[...], 0.0)      # f32 VPU (v5e has no bf16 VALU)
        h_ref[...] = h.astype(jnp.bfloat16)

    o = jnp.dot(h_ref[...], w2_ref[...], preferred_element_type=jnp.float32)
    out_ref[...] = (o + b2_ref[...]).astype(out_ref.dtype)


def _pick_row_tile(M, tm):
    """Pick a row tile that divides M (avoids pad/slice copies) when possible."""
    tm = min(tm, M)
    if M % tm == 0:
        return tm, False
    for cand in (512, 384, 256, 128, 64, 32, 16, 8):
        if cand <= tm and M % cand == 0:
            return cand, False
    return tm, True            # fall back to padding the last row tile


def policy_forward_pallas(hidden_states, w1, b1, w2, b2, *, tm=256, tv=1024,
                          out_dtype=jnp.bfloat16):
    """Synthetic policy: logits = relu(x @ w1 + b1) @ w2 + b2 (tiled Pallas)."""
    B, S, H = hidden_states.shape
    F = w1.shape[1]
    V = w2.shape[1]
    assert H % 128 == 0 and F % 128 == 0, "hidden/ffn must be 128-aligned"
    assert V % 128 == 0, "vocab must be 128-aligned"

    # Vocab tile: largest lane-dense multiple of 128 dividing V, <= tv.
    tv = min(tv, V)
    if V % tv != 0:
        for cand in range(tv - tv % 128, 127, -128):
            if V % cand == 0:
                tv = cand
                break
    assert V % tv == 0

    M = B * S
    tm, need_pad = _pick_row_tile(M, tm)
    Mp = pl.cdiv(M, tm) * tm

    x2d = hidden_states.reshape(M, H)
    if x2d.dtype != jnp.bfloat16:
        x2d = x2d.astype(jnp.bfloat16)
    if need_pad:
        x2d = jnp.pad(x2d, ((0, Mp - M), (0, 0)))

    w1b = w1 if w1.dtype == jnp.bfloat16 else w1.astype(jnp.bfloat16)
    w2b = w2 if w2.dtype == jnp.bfloat16 else w2.astype(jnp.bfloat16)
    b1f = b1.reshape(1, F).astype(jnp.float32)
    b2f = b2.reshape(1, V).astype(jnp.float32)

    n_m = Mp // tm
    n_v = V // tv
    out_bytes = jnp.dtype(out_dtype).itemsize

    # Layer 1 now runs once per row tile (no n_v recompute); w2/b2 are
    # re-streamed once per row tile.
    cost = pl.CostEstimate(
        flops=2 * Mp * H * F + 2 * Mp * F * V,
        transcendentals=0,
        bytes_accessed=(Mp * H * 2) + (H * F * 2) + (F * 4)
                       + n_m * (F * V * 2 + V * 4) + (Mp * V * out_bytes),
    )

    # Per-step VMEM: double-buffered input/output blocks + the h scratch.
    blk_bytes = (tm * H * 2 + H * F * 2 + F * 4 + F * tv * 2 + tv * 4
                 + tm * tv * out_bytes)
    vmem_need = 2 * blk_bytes + tm * F * 2
    vmem_limit = max(32 << 20, min(vmem_need + (4 << 20), 48 << 20))

    grid_spec = pltpu.PrefetchScalarGridSpec(
        num_scalar_prefetch=0,
        # Row axis OUTER ('parallel' -> megacore on v7x), vocab axis INNER
        # ('arbitrary' -> h scratch reuse along it is legal). x/w1/b1 block
        # indices are constant along the inner axis, so they stay VMEM-resident
        # while vocab tiles stream.
        grid=(n_m, n_v),
        in_specs=[
            pl.BlockSpec((tm, H), lambda m, v: (m, 0)),    # x: once per row tile
            pl.BlockSpec((H, F), lambda m, v: (0, 0)),     # w1 resident
            pl.BlockSpec((1, F), lambda m, v: (0, 0)),     # b1 resident
            pl.BlockSpec((F, tv), lambda m, v: (0, v)),    # w2 panel streams
            pl.BlockSpec((1, tv), lambda m, v: (0, v)),    # b2 panel
        ],
        out_specs=pl.BlockSpec((tm, tv), lambda m, v: (m, v)),
        scratch_shapes=[pltpu.VMEM((tm, F), jnp.bfloat16)],  # cached layer-1 act
    )

    out = pl.pallas_call(
        _policy_mlp_kernel,
        out_shape=jax.ShapeDtypeStruct((Mp, V), out_dtype),
        grid_spec=grid_spec,
        compiler_params=pltpu.CompilerParams(
            dimension_semantics=("parallel", "arbitrary"),
            vmem_limit_bytes=int(vmem_limit),
        ),
        cost_estimate=cost,
    )(x2d, w1b, b1f, w2b, b2f)

    if need_pad:
        out = out[:M]
    return out.reshape(B, S, V)


# --------------------------- Module equivalents ---------------------------- #
class SyntheticPolicy:
    """Small deterministic policy (2-layer MLP logits head) backed by Pallas."""

    def __init__(self, hidden=256, ffn=256, vocab=2048, key=None):
        key = jax.random.PRNGKey(0) if key is None else key
        k1, k2, k3, k4 = jax.random.split(key, 4)
        # Master weights in f32; kernel-ready bf16 copies cached ONCE here so
        # the per-forward path does no f32->bf16 conversion passes over HBM.
        self.w1 = jax.random.normal(k1, (hidden, ffn), jnp.float32) / jnp.sqrt(hidden)
        self.w2 = jax.random.normal(k2, (ffn, vocab), jnp.float32) / jnp.sqrt(ffn)
        self.b1 = 0.1 * jax.random.normal(k3, (1, ffn), jnp.float32)
        self.b2 = 0.1 * jax.random.normal(k4, (1, vocab), jnp.float32)
        self.w1_bf16 = self.w1.astype(jnp.bfloat16)
        self.w2_bf16 = self.w2.astype(jnp.bfloat16)
        self.b1_f32 = self.b1
        self.b2_f32 = self.b2

    def __call__(self, hidden_states, **unused_kwargs):
        return policy_forward_pallas(hidden_states, self.w1_bf16, self.b1_f32,
                                     self.w2_bf16, self.b2_f32)


class PolicyAndValueWrapper:
    """Exact semantic port of the PyTorch wrapper: forward(**kwargs) -> policy(**kwargs)."""

    def __init__(self, policy) -> None:
        self.policy = policy

    def forward(self, **kwargs):
        return self.policy(**kwargs)

    __call__ = forward


# --------------------------------- Main ------------------------------------ #
if __name__ == "__main__":
    key = jax.random.PRNGKey(0)
    k_x, k_p = jax.random.split(key)

    # Small but non-trivial: M = B*S = 512 -> 2 row tiles (tm=256), V = 2048 ->
    # 2 vocab tiles (tv=1024), so the h-reuse path across vocab tiles is hit.
    batch, seq, hidden, ffn, vocab = 2, 256, 256, 256, 2048
    hidden_states = jax.random.normal(k_x, (batch, seq, hidden), jnp.float32)

    policy = SyntheticPolicy(hidden=hidden, ffn=ffn, vocab=vocab, key=k_p)
    wrapper = PolicyAndValueWrapper(policy)

    logits = wrapper(hidden_states=hidden_states)
    logits = jax.block_until_ready(logits)

    # Pure-JAX reference using the identical bf16-in / f32-accumulate path,
    # rounded to the same bf16 output dtype.
    xb = hidden_states.reshape(-1, hidden).astype(jnp.bfloat16)
    h = jnp.dot(xb, policy.w1_bf16, preferred_element_type=jnp.float32)
    h = jnp.maximum(h + policy.b1_f32, 0.0)
    ref = jnp.dot(h.astype(jnp.bfloat16), policy.w2_bf16,
                  preferred_element_type=jnp.float32) + policy.b2_f32
    ref = ref.astype(jnp.bfloat16).astype(jnp.float32).reshape(batch, seq, vocab)

    got = logits.astype(jnp.float32)
    assert logits.shape == (batch, seq, vocab)
    assert logits.dtype == jnp.bfloat16
    max_err = float(jnp.max(jnp.abs(got - ref)))
    assert jnp.allclose(got, ref, atol=1e-1, rtol=5e-2), max_err

    print("KERNEL_OK")
</pallas_src>

<mosaic_0001>
module attributes {stable_mosaic.version = 11 : i64} {
  func.func @_policy_mlp_kernel(%arg0: i32, %arg1: i32, %arg2: memref<256x256xbf16, #tpu.memory_space<vmem>>, %arg3: memref<256x256xbf16, #tpu.memory_space<vmem>>, %arg4: memref<1x256xf32, #tpu.memory_space<vmem>>, %arg5: memref<256x1024xbf16, #tpu.memory_space<vmem>>, %arg6: memref<1x1024xf32, #tpu.memory_space<vmem>>, %arg7: memref<256x1024xbf16, #tpu.memory_space<vmem>>, %arg8: memref<256x256xbf16, #tpu.memory_space<vmem>>) attributes {dimension_semantics = [#tpu.dimension_semantics<parallel>, #tpu.dimension_semantics<arbitrary>], iteration_bounds = array<i64: 2, 2>, scalar_prefetch = 0 : i64, scratch_operands = 1 : i64, tpu.core_type = #tpu.core_type<tc>, window_params = [{transform_indices = @transform_0, window_bounds = array<i64: 256, 256>}, {pipeline_mode = #tpu.pipeline_mode<synchronous>, transform_indices = @transform_1, window_bounds = array<i64: 256, 256>}, {pipeline_mode = #tpu.pipeline_mode<synchronous>, transform_indices = @transform_2, window_bounds = array<i64: 1, 256>}, {transform_indices = @transform_3, window_bounds = array<i64: 256, 1024>}, {transform_indices = @transform_4, window_bounds = array<i64: 1, 1024>}, {transform_indices = @transform_5, window_bounds = array<i64: 256, 1024>}]} {
    %c0_i32 = arith.constant 0 : i32
    %0 = arith.cmpi eq, %arg1, %c0_i32 : i32
    %1 = arith.extui %0 : i1 to i32
    %c0_i32_0 = arith.constant 0 : i32
    %2 = arith.cmpi ne, %1, %c0_i32_0 : i32
    scf.if %2 {
      %c0_8 = arith.constant 0 : index
      %c0_9 = arith.constant 0 : index
      %11 = vector.load %arg2[%c0_8, %c0_9] : memref<256x256xbf16, #tpu.memory_space<vmem>>, vector<256x256xbf16>
      %c0_10 = arith.constant 0 : index
      %c0_11 = arith.constant 0 : index
      %12 = vector.load %arg3[%c0_10, %c0_11] : memref<256x256xbf16, #tpu.memory_space<vmem>>, vector<256x256xbf16>
      %cst_12 = arith.constant dense<0.000000e+00> : vector<256x256xf32>
      %13 = tpu.matmul %11, %12, %cst_12 {dimension_numbers = #tpu.dot_dimension_numbers<[1], [0], [0], [1], [0, 0, 1, 1], [], []>} : vector<256x256xbf16>, vector<256x256xbf16>, vector<256x256xf32> -> vector<256x256xf32>
      %c0_13 = arith.constant 0 : index
      %c0_14 = arith.constant 0 : index
      %14 = vector.load %arg4[%c0_13, %c0_14] : memref<1x256xf32, #tpu.memory_space<vmem>>, vector<1x256xf32>
      %15 = vector.broadcast %14 : vector<1x256xf32> to vector<256x256xf32>
      %16 = arith.addf %13, %15 : vector<256x256xf32>
      %cst_15 = arith.constant 0.000000e+00 : f32
      %17 = vector.broadcast %cst_15 : f32 to vector<256x256xf32>
      %18 = arith.maximumf %16, %17 : vector<256x256xf32>
      %19 = arith.truncf %18 : vector<256x256xf32> to vector<256x256xbf16>
      %c0_16 = arith.constant 0 : index
      %c0_17 = arith.constant 0 : index
      %20 = vector.load %arg8[%c0_16, %c0_17] : memref<256x256xbf16, #tpu.memory_space<vmem>>, vector<256x256xbf16>
      tpu.vector_store %arg8[%c0_16, %c0_17], %19 {strides = array<i32>} : memref<256x256xbf16, #tpu.memory_space<vmem>>, vector<256x256xbf16>,
    } else {
    }
    %c0 = arith.constant 0 : index
    %c0_1 = arith.constant 0 : index
    %3 = vector.load %arg8[%c0, %c0_1] : memref<256x256xbf16, #tpu.memory_space<vmem>>, vector<256x256xbf16>
    %c0_2 = arith.constant 0 : index
    %c0_3 = arith.constant 0 : index
    %4 = vector.load %arg5[%c0_2, %c0_3] : memref<256x1024xbf16, #tpu.memory_space<vmem>>, vector<256x1024xbf16>
    %cst = arith.constant dense<0.000000e+00> : vector<256x1024xf32>
    %5 = tpu.matmul %3, %4, %cst {dimension_numbers = #tpu.dot_dimension_numbers<[1], [0], [0], [1], [0, 0, 1, 1], [], []>} : vector<256x256xbf16>, vector<256x1024xbf16>, vector<256x1024xf32> -> vector<256x1024xf32>
    %c0_4 = arith.constant 0 : index
    %c0_5 = arith.constant 0 : index
    %6 = vector.load %arg6[%c0_4, %c0_5] : memref<1x1024xf32, #tpu.memory_space<vmem>>, vector<1x1024xf32>
    %7 = vector.broadcast %6 : vector<1x1024xf32> to vector<256x1024xf32>
    %8 = arith.addf %5, %7 : vector<256x1024xf32>
    %9 = arith.truncf %8 : vector<256x1024xf32> to vector<256x1024xbf16>
    %c0_6 = arith.constant 0 : index
    %c0_7 = arith.constant 0 : index
    %10 = vector.load %arg7[%c0_6, %c0_7] : memref<256x1024xbf16, #tpu.memory_space<vmem>>, vector<256x1024xbf16>
    tpu.vector_store %arg7[%c0_6, %c0_7], %9 {strides = array<i32>} : memref<256x1024xbf16, #tpu.memory_space<vmem>>, vector<256x1024xbf16>,
    return
  }
  func.func @transform_0(%arg0: i32, %arg1: i32) -> (i32, i32) {
    %c0_i32 = arith.constant 0 : i32
    %c0_i32_0 = arith.constant 0 : i32
    return %arg0, %c0_i32 : i32, i32
  }
  func.func @transform_1(%arg0: i32, %arg1: i32) -> (i32, i32) {
    %c0_i32 = arith.constant 0 : i32
    %c0_i32_0 = arith.constant 0 : i32
    %c0_i32_1 = arith.constant 0 : i32
    return %c0_i32, %c0_i32_0 : i32, i32
  }
  func.func @transform_2(%arg0: i32, %arg1: i32) -> (i32, i32) {
    %c0_i32 = arith.constant 0 : i32
    %c0_i32_0 = arith.constant 0 : i32
    %c0_i32_1 = arith.constant 0 : i32
    return %c0_i32, %c0_i32_0 : i32, i32
  }
  func.func @transform_3(%arg0: i32, %arg1: i32) -> (i32, i32) {
    %c0_i32 = arith.constant 0 : i32
    %c0_i32_0 = arith.constant 0 : i32
    return %c0_i32, %arg1 : i32, i32
  }
  func.func @transform_4(%arg0: i32, %arg1: i32) -> (i32, i32) {
    %c0_i32 = arith.constant 0 : i32
    %c0_i32_0 = arith.constant 0 : i32
    return %c0_i32, %arg1 : i32, i32
  }
  func.func @transform_5(%arg0: i32, %arg1: i32) -> (i32, i32) {
    %c0_i32 = arith.constant 0 : i32
    return %arg0, %arg1 : i32, i32
  }
}

</mosaic_0001>

<llo_original>
// kernel: tpu_custom_call.1
$region0: #{tpu_custom_call.1}
  #allocation0 [shape = 'u32[]', space=smem, size = 0x4, offset = 0x4, fixed_abs, tag = 'smem constant byte address 0x4 - core index']
  #allocation1 [shape = 'u32[144,128]{1,0:T(1,128)}', space=vmem, size = 0x12000, scoped, tag = 'internal scratch']
  #allocation2 [shape = 'bf16[256,256]{1,0:T(16,128)(2,1)}', space=vmem, size = 0x20000, scoped, tag = 'scratch operand']
  %s0 = inlined_call_operand.hbm [shape: bf16[512,256], index: 0, kind: input, shape index: {}]
  %s1 = inlined_call_operand.hbm [shape: bf16[256,256], index: 1, kind: input, shape index: {}]
  %s2 = inlined_call_operand.hbm [shape: f32[1,256], index: 2, kind: input, shape index: {}]
  %s3 = inlined_call_operand.hbm [shape: bf16[256,2048], index: 3, kind: input, shape index: {}]
  %s4 = inlined_call_operand.hbm [shape: f32[1,2048], index: 4, kind: input, shape index: {}]
  %s5 = inlined_call_operand.hbm [shape: bf16[512,2048], index: 5, kind: output, shape index: {}]
  %s6 = sld [smem:[#allocation0]]
  $region77: #{tpu_custom_call.1} parent=0
    _
  %s8 = ssub.s32 1, %s6
  %s9 = scalar_select 0, %s8, %s6
  $region1: #{tpu_custom_call.1} parent=0
    #allocation3 [shape = 'u8[262144]{0}', space=vmem, size = 0x40000, scoped, tag = 'input window, operand 0']
    #allocation4 [shape = 's32[2]{0}', space=sflag, size = 0x8, scoped, tag = 'scoped memory for tpu_custom_call.1']
    #allocation5 [shape = 's32[2]{0}', space=sflag, size = 0x8, scoped, tag = 'scoped memory for tpu_custom_call.1']
    #allocation6 [shape = 'u8[131072]{0}', space=vmem, size = 0x20000, scoped, tag = 'input window, operand 1, single buffered']
    #allocation7 [shape = 's32[1]{0}', space=sflag, size = 0x4, scoped, tag = 'scoped memory for tpu_custom_call.1']
    #allocation8 [shape = 'u8[1024]{0}', space=vmem, size = 0x400, scoped, tag = 'input window, operand 2, single buffered']
    #allocation9 [shape = 'u8[1048576]{0}', space=vmem, size = 0x100000, scoped, tag = 'input window, operand 3']
    #allocation10 [shape = 's32[2]{0}', space=sflag, size = 0x8, scoped, tag = 'scoped memory for tpu_custom_call.1']
    #allocation11 [shape = 'u8[8192]{0}', space=vmem, size = 0x2000, scoped, tag = 'input window, operand 4']
    #allocation12 [shape = 'u8[1048576]{0}', space=vmem, size = 0x100000, scoped, tag = 'output window, operand 0']
    %10 = vsyncpa [#allocation4], 0
    %s11 = scalar_lea.sflag [#allocation4], 1
    %12 = vsyncpa %s11, 0
    %13 = vsyncpa [#allocation7], 0
    %14 = vsyncpa [#allocation10], 0
    %s15 = scalar_lea.sflag [#allocation10], 1
    %16 = vsyncpa %s15, 0
    %17 = vsyncpa [#allocation5], 0
    %s18 = scalar_lea.sflag [#allocation5], 1
    %19 = vsyncpa %s18, 0
    loop: start=0, step=1, limit=6
    $region2: #{tpu_custom_call.1} parent=1 // loop_pre_header
      _
    $region3: #{tpu_custom_call.1} parent=1 // loop_header
      %s21 = sphi 0, %s25
      %p22 = scmp.ge.s32.totalorder %s21, 6
      %s28 = sphi 0, %s40
      %s29 = sphi 0, %s36
      %s30 = sphi 0, %s28
      %s31 = sphi 0, %s29
      %s32 = sphi 0, %s30
      %s33 = sphi 0, %s31
      %s43 = sphi 0, %s45
      %s46 = sphi 0, %s43
      %s47 = sphi 0, %s46
      %s63 = sphi 0, %s47
      %s67 = sphi 0, %s67
      %s69 = sphi 0, %s67
      %s70 = sphi 0, %s69
      %s84 = sphi 0, %s70
      %s88 = sphi 0, %s88
      %s90 = sphi 0, %s88
      %s91 = sphi 0, %s90
      %s105 = sphi 0, %s91
      %s111 = sphi 0, %s113
      %s114 = sphi 0, %s111
      %s115 = sphi 0, %s114
      %s131 = sphi 0, %s115
      %s137 = sphi 0, %s139
      %s140 = sphi 0, %s137
      %s141 = sphi 0, %s140
      %s157 = sphi 0, %s141
      %s165 = sphi 0, %s167
      %s168 = sphi 0, %s165
      %s169 = sphi 0, %s168
      %s185 = sphi 0, %s169
    $region4: #{tpu_custom_call.1} parent=1 // loop_header_branch
      %24 = sbr.rel (%p22) target = $region8
    $region5: #{tpu_custom_call.1} parent=1 // loop_body
      %s26 = ssub.s32 %s21, 1
      %s27 = ssub.s32 %s21, 2
      %s34 = sadd.s32 1, %s29
      %p35 = scmp.ge.s32.totalorder %s34, 2
      %s36 = scalar_select %p35, 0, %s34
      %s37 = sadd.s32 1, %s28
      %s38 = scalar_select %p35, %s37, %s28
      %p39 = scmp.ge.s32.totalorder %s38, 2
      %s40 = scalar_select %p39, 0, %s38
      %s41 = ssub.s32 %s28, %s40
      %p42 = scmp.eq.s32.totalorder %s41, 0
      %s44 = sadd.s32 %s43, 1
      %s45 = scalar_select %p42, %s43, %s44
      %p48 = pneg %p42
      %p49 = scmp.eq.s32.totalorder %s21, 3
      %p50 = por %p48, %p49
      %p51 = scmp.ne.s32.totalorder %s43, %s46
      %p52 = scmp.eq.s32.totalorder %s21, 0
      %p53 = por %p51, %p52
      %p54 = scmp.ne.s32.totalorder %s43, %s46
      %p55 = scmp.eq.s32.totalorder %s26, 3
      %p56 = por %p54, %p55
      %p57 = scmp.ne.s32.totalorder %s46, %s47
      %p58 = scmp.eq.s32.totalorder %s26, 0
      %p59 = por %p57, %p58
      %p60 = scmp.ne.s32.totalorder %s46, %s47
      %p61 = scmp.eq.s32.totalorder %s27, 3
      %p62 = por %p60, %p61
      %p64 = scmp.ne.s32.totalorder %s47, %s63
      %p65 = scmp.eq.s32.totalorder %s27, 0
      %p66 = por %p64, %p65
      %s68 = sadd.s32 %s67, 1
      %p71 = scmp.eq.s32.totalorder %s21, 3
      %p72 = scmp.ne.s32.totalorder %s67, %s69
      %p73 = scmp.eq.s32.totalorder %s21, 0
      %p74 = por %p72, %p73
      %p75 = scmp.ne.s32.totalorder %s67, %s69
      %p76 = scmp.eq.s32.totalorder %s26, 3
      %p77 = por %p75, %p76
      %p78 = scmp.ne.s32.totalorder %s69, %s70
      %p79 = scmp.eq.s32.totalorder %s26, 0
      %p80 = por %p78, %p79
      %p81 = scmp.ne.s32.totalorder %s69, %s70
      %p82 = scmp.eq.s32.totalorder %s27, 3
      %p83 = por %p81, %p82
      %p85 = scmp.ne.s32.totalorder %s70, %s84
      %p86 = scmp.eq.s32.totalorder %s27, 0
      %p87 = por %p85, %p86
      %s89 = sadd.s32 %s88, 1
      %p92 = scmp.eq.s32.totalorder %s21, 3
      %p93 = scmp.ne.s32.totalorder %s88, %s90
      %p94 = scmp.eq.s32.totalorder %s21, 0
      %p95 = por %p93, %p94
      %p96 = scmp.ne.s32.totalorder %s88, %s90
      %p97 = scmp.eq.s32.totalorder %s26, 3
      %p98 = por %p96, %p97
      %p99 = scmp.ne.s32.totalorder %s90, %s91
      %p100 = scmp.eq.s32.totalorder %s26, 0
      %p101 = por %p99, %p100
      %p102 = scmp.ne.s32.totalorder %s90, %s91
      %p103 = scmp.eq.s32.totalorder %s27, 3
      %p104 = por %p102, %p103
      %p106 = scmp.ne.s32.totalorder %s91, %s105
      %p107 = scmp.eq.s32.totalorder %s27, 0
      %p108 = por %p106, %p107
      %s109 = ssub.s32 %s29, %s36
      %p110 = scmp.eq.s32.totalorder %s109, 0
      %s112 = sadd.s32 %s111, 1
      %s113 = scalar_select %p110, %s111, %s112
      %p116 = pneg %p110
      %p117 = scmp.eq.s32.totalorder %s21, 3
      %p118 = por %p116, %p117
      %p119 = scmp.ne.s32.totalorder %s111, %s114
      %p120 = scmp.eq.s32.totalorder %s21, 0
      %p121 = por %p119, %p120
      %p122 = scmp.ne.s32.totalorder %s111, %s114
      %p123 = scmp.eq.s32.totalorder %s26, 3
      %p124 = por %p122, %p123
      %p125 = scmp.ne.s32.totalorder %s114, %s115
      %p126 = scmp.eq.s32.totalorder %s26, 0
      %p127 = por %p125, %p126
      %p128 = scmp.ne.s32.totalorder %s114, %s115
      %p129 = scmp.eq.s32.totalorder %s27, 3
      %p130 = por %p128, %p129
      %p132 = scmp.ne.s32.totalorder %s115, %s131
      %p133 = scmp.eq.s32.totalorder %s27, 0
      %p134 = por %p132, %p133
      %s135 = ssub.s32 %s29, %s36
      %p136 = scmp.eq.s32.totalorder %s135, 0
      %s138 = sadd.s32 %s137, 1
      %s139 = scalar_select %p136, %s137, %s138
      %p142 = pneg %p136
      %p143 = scmp.eq.s32.totalorder %s21, 3
      %p144 = por %p142, %p143
      %p145 = scmp.ne.s32.totalorder %s137, %s140
      %p146 = scmp.eq.s32.totalorder %s21, 0
      %p147 = por %p145, %p146
      %p148 = scmp.ne.s32.totalorder %s137, %s140
      %p149 = scmp.eq.s32.totalorder %s26, 3
      %p150 = por %p148, %p149
      %p151 = scmp.ne.s32.totalorder %s140, %s141
      %p152 = scmp.eq.s32.totalorder %s26, 0
      %p153 = por %p151, %p152
      %p154 = scmp.ne.s32.totalorder %s140, %s141
      %p155 = scmp.eq.s32.totalorder %s27, 3
      %p156 = por %p154, %p155
      %p158 = scmp.ne.s32.totalorder %s141, %s157
      %p159 = scmp.eq.s32.totalorder %s27, 0
      %p160 = por %p158, %p159
      %s161 = ssub.s32 %s28, %s40
      %s162 = ssub.s32 %s29, %s36
      %s163 = sor.u32 %s161, %s162
      %p164 = scmp.eq.s32.totalorder %s163, 0
      %s166 = sadd.s32 %s165, 1
      %s167 = scalar_select %p164, %s165, %s166
      %p170 = pneg %p164
      %p171 = scmp.eq.s32.totalorder %s21, 3
      %p172 = por %p170, %p171
      %p173 = scmp.ne.s32.totalorder %s165, %s168
      %p174 = scmp.eq.s32.totalorder %s21, 0
      %p175 = por %p173, %p174
      %p176 = scmp.ne.s32.totalorder %s165, %s168
      %p177 = scmp.eq.s32.totalorder %s26, 3
      %p178 = por %p176, %p177
      %p179 = scmp.ne.s32.totalorder %s168, %s169
      %p180 = scmp.eq.s32.totalorder %s26, 0
      %p181 = por %p179, %p180
      %p182 = scmp.ne.s32.totalorder %s168, %s169
      %p183 = scmp.eq.s32.totalorder %s27, 3
      %p184 = por %p182, %p183
      %p186 = scmp.ne.s32.totalorder %s169, %s185
      %p187 = scmp.eq.s32.totalorder %s27, 0
      %p188 = por %p186, %p187
      %p189 = scmp.le.s32.totalorder 1, %s21
      %p190 = scmp.lt.s32.totalorder %s21, 5
      %p191 = pnand %p189, %p190
      %p192 = pneg %p191
      // Predicated region
      $region9: #{tpu_custom_call.1} parent=5 // pred_check
        _
      $region10: #{tpu_custom_call.1} parent=5 // pred_check_branch
        %194 = sbr.rel (%p191) target = $region12
      $region11: #{tpu_custom_call.1} parent=5 // pred_region
        %s195 = ssub.s32 %s21, 1
        // Predicated region
        $region13: #{tpu_custom_call.1} parent=11 // pred_check
          %p196 = pneg %p80
        $region14: #{tpu_custom_call.1} parent=11 // pred_check_branch
          %198 = sbr.rel (%p196) target = $region16
        $region15: #{tpu_custom_call.1} parent=11 // pred_region
          %s200 = ssub.s32 4096, 4096
          %201 = vsyncadd [#allocation7], %s200
          %s202 = sshll.u32 [#allocation6], 4
          %s203 = int_to_ptr.vmem [resolvable:$true] %s202
          %208 = dma.hbm_to_vmem [thread:$0]  %s1, 4096, %s203, [#allocation7], 128, 128, 8
        $region16: #{tpu_custom_call.1} parent=11 // pred_fallthru
          _
        // Predicated region
        $region17: #{tpu_custom_call.1} parent=11 // pred_check
          %p209 = pneg %p101
        $region18: #{tpu_custom_call.1} parent=11 // pred_check_branch
          %211 = sbr.rel (%p209) target = $region20
        $region19: #{tpu_custom_call.1} parent=11 // pred_region
          %s213 = ssub.s32 32, 32
          %214 = vsyncadd [#allocation7], %s213
          %s216 = sshll.u32 [#allocation8], 4
          %s217 = int_to_ptr.vmem [resolvable:$true] %s216
          %219 = dma.hbm_to_vmem [thread:$0]  %s2, 32, %s217, [#allocation7]
        $region20: #{tpu_custom_call.1} parent=11 // pred_fallthru
          _
      $region12: #{tpu_custom_call.1} parent=5 // pred_fallthru
        _
      %p220 = scmp.lt.s32.totalorder %s21, 4
      // Predicated region
      $region21: #{tpu_custom_call.1} parent=5 // pred_check
        %p221 = pneg %p220
      $region22: #{tpu_custom_call.1} parent=5 // pred_check_branch
        %223 = sbr.rel (%p221) target = $region24
      $region23: #{tpu_custom_call.1} parent=5 // pred_region
        // Predicated region
        $region25: #{tpu_custom_call.1} parent=23 // pred_check
          %p224 = pneg %p53
        $region26: #{tpu_custom_call.1} parent=23 // pred_check_branch
          %226 = sbr.rel (%p224) target = $region28
        $region27: #{tpu_custom_call.1} parent=23 // pred_region
          %s227 = sand.u32 %s43, 1
          %s228 = scalar_lea.sflag [#allocation4], %s227
          %s229 = sand.u32 %s43, 1
          %s230 = smul.addr %s229, 256
          %s231 = scalar_lea.vmem [#allocation3], %s230
          %s232 = smul.u32 32, %s28
          %s234 = ssub.s32 4096, 4096
          %235 = vsyncadd %s228, %s234
          %s236 = smul.addr %s232, 2
          %s237 = smul.addr %s236, 64
          %s238 = scalar_lea.hbm %s0, %s237
          %s239 = sshll.u32 %s231, 4
          %s240 = int_to_ptr.vmem [resolvable:$true] %s239
          %245 = dma.hbm_to_vmem [thread:$0]  %s238, 4096, %s240, %s228, 128, 128, 8
        $region28: #{tpu_custom_call.1} parent=23 // pred_fallthru
          _
        // Predicated region
        $region29: #{tpu_custom_call.1} parent=23 // pred_check
          %p246 = pneg %p121
        $region30: #{tpu_custom_call.1} parent=23 // pred_check_branch
          %248 = sbr.rel (%p246) target = $region32
        $region31: #{tpu_custom_call.1} parent=23 // pred_region
          %s249 = sand.u32 %s21, 1
          %s250 = scalar_lea.sflag [#allocation10], %s249
          %s251 = sand.u32 %s111, 1
          %s252 = smul.addr %s251, 1024
          %s253 = scalar_lea.vmem [#allocation9], %s252
          %s254 = smul.u32 8, %s29
          %s256 = ssub.s32 16384, 16384
          %257 = vsyncadd %s250, %s256
          %s258 = smul.addr %s254, 64
          %s259 = scalar_lea.hbm %s3, %s258
          %s260 = sshll.u32 %s253, 4
          %s261 = int_to_ptr.vmem [resolvable:$true] %s260
          %266 = dma.hbm_to_vmem [thread:$0]  %s259, 16384, %s261, %s250, 1024, 512, 32
        $region32: #{tpu_custom_call.1} parent=23 // pred_fallthru
          _
        // Predicated region
        $region33: #{tpu_custom_call.1} parent=23 // pred_check
          %p267 = pneg %p147
        $region34: #{tpu_custom_call.1} parent=23 // pred_check_branch
          %269 = sbr.rel (%p267) target = $region36
        $region35: #{tpu_custom_call.1} parent=23 // pred_region
          %s270 = sand.u32 %s21, 1
          %s271 = scalar_lea.sflag [#allocation10], %s270
          %s272 = sand.u32 %s137, 1
          %s273 = smul.addr %s272, 8
          %s274 = scalar_lea.vmem [#allocation11], %s273
          %s275 = smul.u32 8, %s29
          %s277 = ssub.s32 128, 128
          %278 = vsyncadd %s271, %s277
          %s279 = smul.addr %s275, 16
          %s280 = scalar_lea.hbm %s4, %s279
          %s282 = sshll.u32 %s274, 4
          %s283 = int_to_ptr.vmem [resolvable:$true] %s282
          %285 = dma.hbm_to_vmem [thread:$0]  %s280, 128, %s283, %s271
        $region36: #{tpu_custom_call.1} parent=23 // pred_fallthru
          _
      $region24: #{tpu_custom_call.1} parent=5 // pred_fallthru
        _
      %p286 = scmp.le.s32.totalorder 1, %s21
      %p287 = scmp.lt.s32.totalorder %s21, 5
      %p288 = pnand %p286, %p287
      %p289 = pneg %p288
      // Predicated region
      $region37: #{tpu_custom_call.1} parent=5 // pred_check
        _
      $region38: #{tpu_custom_call.1} parent=5 // pred_check_branch
        %291 = sbr.rel (%p288) target = $region40
      $region39: #{tpu_custom_call.1} parent=5 // pred_region
        %s292 = ssub.s32 %s21, 1
        %s293 = sand.u32 %s46, 1
        %s294 = scalar_lea.sflag [#allocation4], %s293
        %s295 = sand.u32 %s46, 1
        %s296 = smul.addr %s295, 256
        %s297 = scalar_lea.vmem [#allocation3], %s296
        // Predicated region
        $region41: #{tpu_custom_call.1} parent=39 // pred_check
          %p298 = pneg %p59
        $region42: #{tpu_custom_call.1} parent=39 // pred_check_branch
          %300 = sbr.rel (%p298) target = $region44
        $region43: #{tpu_custom_call.1} parent=39 // pred_region
          %301 = dma.done %s294, 4096
        $region44: #{tpu_custom_call.1} parent=39 // pred_fallthru
          _
        // Predicated region
        $region45: #{tpu_custom_call.1} parent=39 // pred_check
          %p302 = pneg %p80
        $region46: #{tpu_custom_call.1} parent=39 // pred_check_branch
          %304 = sbr.rel (%p302) target = $region48
        $region47: #{tpu_custom_call.1} parent=39 // pred_region
          %305 = dma.done [#allocation7], 4096
        $region48: #{tpu_custom_call.1} parent=39 // pred_fallthru
          _
        // Predicated region
        $region49: #{tpu_custom_call.1} parent=39 // pred_check
          %p306 = pneg %p101
        $region50: #{tpu_custom_call.1} parent=39 // pred_check_branch
          %308 = sbr.rel (%p306) target = $region52
        $region51: #{tpu_custom_call.1} parent=39 // pred_region
          %309 = dma.done [#allocation7], 32
        $region52: #{tpu_custom_call.1} parent=39 // pred_fallthru
          _
        %s310 = sand.u32 %s26, 1
        %s311 = scalar_lea.sflag [#allocation10], %s310
        %s312 = sand.u32 %s114, 1
        %s313 = smul.addr %s312, 1024
        %s314 = scalar_lea.vmem [#allocation9], %s313
        // Predicated region
        $region53: #{tpu_custom_call.1} parent=39 // pred_check
          %p315 = pneg %p127
        $region54: #{tpu_custom_call.1} parent=39 // pred_check_branch
          %317 = sbr.rel (%p315) target = $region56
        $region55: #{tpu_custom_call.1} parent=39 // pred_region
          %318 = dma.done %s311, 16384
        $region56: #{tpu_custom_call.1} parent=39 // pred_fallthru
          _
        %s319 = sand.u32 %s26, 1
        %s320 = scalar_lea.sflag [#allocation10], %s319
        %s321 = sand.u32 %s140, 1
        %s322 = smul.addr %s321, 8
        %s323 = scalar_lea.vmem [#allocation11], %s322
        // Predicated region
        $region57: #{tpu_custom_call.1} parent=39 // pred_check
          %p324 = pneg %p153
        $region58: #{tpu_custom_call.1} parent=39 // pred_check_branch
          %326 = sbr.rel (%p324) target = $region60
        $region59: #{tpu_custom_call.1} parent=39 // pred_region
          %327 = dma.done %s320, 128
        $region60: #{tpu_custom_call.1} parent=39 // pred_fallthru
          _
        %s328 = sand.u32 %s46, 1
        %s329 = scalar_lea.sflag [#allocation4], %s328
        %s330 = sand.u32 %s46, 1
        %s331 = smul.addr %s330, 256
        %s332 = scalar_lea.vmem [#allocation3], %s331
        %p333 = pneg %p59
        %p334 = pneg %p56
        %p335 = pneg %p80
        %p336 = pneg %p77
        %p337 = pneg %p101
        %p338 = pneg %p98
        %s339 = sand.u32 %s26, 1
        %s340 = scalar_lea.sflag [#allocation10], %s339
        %s341 = sand.u32 %s114, 1
        %s342 = smul.addr %s341, 1024
        %s343 = scalar_lea.vmem [#allocation9], %s342
        %p344 = pneg %p127
        %p345 = pneg %p124
        %s346 = sand.u32 %s26, 1
        %s347 = scalar_lea.sflag [#allocation10], %s346
        %s348 = sand.u32 %s140, 1
        %s349 = smul.addr %s348, 8
        %s350 = scalar_lea.vmem [#allocation11], %s349
        %p351 = pneg %p153
        %p352 = pneg %p150
        %p353 = pneg %p181
        %p354 = pneg %p178
        %s355 = sand.u32 %s168, 1
        %s356 = scalar_lea.sflag [#allocation5], %s355
        %s357 = sand.u32 %s168, 1
        %s358 = smul.addr %s357, 1024
        %s359 = scalar_lea.vmem [#allocation12], %s358
        %s360 = smul.u32 32, %s30
        %s361 = smul.u32 8, %s31
        %s362 = smul.u32 8, %s31
        %s363 = smul.u32 32, %s30
        %s364 = smul.u32 8, %s31
        %p365 = scmp.eq.s32.totalorder %s31, 0
        // Predicated region
        $region61: #{tpu_custom_call.1} parent=39 // pred_check
          %p366 = pneg %p365
        $region62: #{tpu_custom_call.1} parent=39 // pred_check_branch
          %368 = sbr.rel (%p366) target = $region64
        $region63: #{tpu_custom_call.1} parent=39 // pred_region
          %v369 = vld [vmem:[%s297] sm:$0xff]
          %v370 = vld [vmem:[%s297 + $0x8] sm:$0xff]
          %v371 = vld [vmem:[%s297 + $0x10] sm:$0xff]
          %v372 = vld [vmem:[%s297 + $0x18] sm:$0xff]
          %v373 = vld [vmem:[%s297 + $0x20] sm:$0xff]
          %v374 = vld [vmem:[%s297 + $0x28] sm:$0xff]
          %v375 = vld [vmem:[%s297 + $0x30] sm:$0xff]
          %v376 = vld [vmem:[%s297 + $0x38] sm:$0xff]
          %v377 = vld [vmem:[%s297 + $0x40] sm:$0xff]
          %v378 = vld [vmem:[%s297 + $0x48] sm:$0xff]
          %v379 = vld [vmem:[%s297 + $0x50] sm:$0xff]
          %v380 = vld [vmem:[%s297 + $0x58] sm:$0xff]
          %v381 = vld [vmem:[%s297 + $0x60] sm:$0xff]
          %v382 = vld [vmem:[%s297 + $0x68] sm:$0xff]
          %v383 = vld [vmem:[%s297 + $0x70] sm:$0xff]
          %v384 = vld [vmem:[%s297 + $0x78] sm:$0xff]
          %v385 = vld [vmem:[%s297 + $0x80] sm:$0xff]
          %v386 = vld [vmem:[%s297 + $0x88] sm:$0xff]
          %v387 = vld [vmem:[%s297 + $0x90] sm:$0xff]
          %v388 = vld [vmem:[%s297 + $0x98] sm:$0xff]
          %v389 = vld [vmem:[%s297 + $0xa0] sm:$0xff]
          %v390 = vld [vmem:[%s297 + $0xa8] sm:$0xff]
          %v391 = vld [vmem:[%s297 + $0xb0] sm:$0xff]
          %v392 = vld [vmem:[%s297 + $0xb8] sm:$0xff]
          %v393 = vld [vmem:[%s297 + $0xc0] sm:$0xff]
          %v394 = vld [vmem:[%s297 + $0xc8] sm:$0xff]
          %v395 = vld [vmem:[%s297 + $0xd0] sm:$0xff]
          %v396 = vld [vmem:[%s297 + $0xd8] sm:$0xff]
          %v397 = vld [vmem:[%s297 + $0xe0] sm:$0xff]
          %v398 = vld [vmem:[%s297 + $0xe8] sm:$0xff]
          %v399 = vld [vmem:[%s297 + $0xf0] sm:$0xff]
          %v400 = vld [vmem:[%s297 + $0xf8] sm:$0xff]
          %v401 = vld [vmem:[#allocation6] sm:$0xff]
          %v402 = vld [vmem:[#allocation6 + $0x8] sm:$0xff]
          %v403 = vld [vmem:[#allocation6 + $0x10] sm:$0xff]
          %v404 = vld [vmem:[#allocation6 + $0x18] sm:$0xff]
          %v405 = vld [vmem:[#allocation6 + $0x20] sm:$0xff]
          %v406 = vld [vmem:[#allocation6 + $0x28] sm:$0xff]
          %v407 = vld [vmem:[#allocation6 + $0x30] sm:$0xff]
          %v408 = vld [vmem:[#allocation6 + $0x38] sm:$0xff]
          %v409 = vld [vmem:[#allocation6 + $0x40] sm:$0xff]
          %v410 = vld [vmem:[#allocation6 + $0x48] sm:$0xff]
          %v411 = vld [vmem:[#allocation6 + $0x50] sm:$0xff]
          %v412 = vld [vmem:[#allocation6 + $0x58] sm:$0xff]
          %v413 = vld [vmem:[#allocation6 + $0x60] sm:$0xff]
          %v414 = vld [vmem:[#allocation6 + $0x68] sm:$0xff]
          %v415 = vld [vmem:[#allocation6 + $0x70] sm:$0xff]
          %v416 = vld [vmem:[#allocation6 + $0x78] sm:$0xff]
          %v417 = vld [vmem:[#allocation6 + $0x80] sm:$0xff]
          %v418 = vld [vmem:[#allocation6 + $0x88] sm:$0xff]
          %v419 = vld [vmem:[#allocation6 + $0x90] sm:$0xff]
          %v420 = vld [vmem:[#allocation6 + $0x98] sm:$0xff]
          %v421 = vld [vmem:[#allocation6 + $0xa0] sm:$0xff]
          %v422 = vld [vmem:[#allocation6 + $0xa8] sm:$0xff]
          %v423 = vld [vmem:[#allocation6 + $0xb0] sm:$0xff]
          %v424 = vld [vmem:[#allocation6 + $0xb8] sm:$0xff]
          %v425 = vld [vmem:[#allocation6 + $0xc0] sm:$0xff]
          %v426 = vld [vmem:[#allocation6 + $0xc8] sm:$0xff]
          %v427 = vld [vmem:[#allocation6 + $0xd0] sm:$0xff]
          %v428 = vld [vmem:[#allocation6 + $0xd8] sm:$0xff]
          %v429 = vld [vmem:[#allocation6 + $0xe0] sm:$0xff]
          %v430 = vld [vmem:[#allocation6 + $0xe8] sm:$0xff]
          %v431 = vld [vmem:[#allocation6 + $0xf0] sm:$0xff]
          %v432 = vld [vmem:[#allocation6 + $0xf8] sm:$0xff]
          %v433 = vld [vmem:[#allocation8] sm:$0x3]
          %v435 = vlaneseq
          %v436 = vshrl.u32 %v435, 7
          %v437 = vsub.s32 0, %v436
          %v438 = vrot.slane %v433, %v437
          %v439 = vlaneseq
          %v440 = vshrl.u32 %v439, 7
          %v441 = vsub.s32 1, %v440
          %v442 = vrot.slane %v433, %v441
          %v477 = vunpack.c.l.b16 %v369
          %v478 = vunpack.c.h.b16 %v369
          %v479 = vunpack.c.l.b16 %v370
          %v480 = vunpack.c.h.b16 %v370
          %v481 = vunpack.c.l.b16 %v371
          %v482 = vunpack.c.h.b16 %v371
          %v483 = vunpack.c.l.b16 %v372
          %v484 = vunpack.c.h.b16 %v372
          %v485 = vunpack.c.l.b16 %v373
          %v486 = vunpack.c.h.b16 %v373
          %v487 = vunpack.c.l.b16 %v374
          %v488 = vunpack.c.h.b16 %v374
          %v489 = vunpack.c.l.b16 %v375
          %v490 = vunpack.c.h.b16 %v375
          %v491 = vunpack.c.l.b16 %v376
          %v492 = vunpack.c.h.b16 %v376
          %v493 = vunpack.c.l.b16 %v377
          %v494 = vunpack.c.h.b16 %v377
          %v495 = vunpack.c.l.b16 %v378
          %v496 = vunpack.c.h.b16 %v378
          %v497 = vunpack.c.l.b16 %v379
          %v498 = vunpack.c.h.b16 %v379
          %v499 = vunpack.c.l.b16 %v380
          %v500 = vunpack.c.h.b16 %v380
          %v501 = vunpack.c.l.b16 %v381
          %v502 = vunpack.c.h.b16 %v381
          %v503 = vunpack.c.l.b16 %v382
          %v504 = vunpack.c.h.b16 %v382
          %v505 = vunpack.c.l.b16 %v383
          %v506 = vunpack.c.h.b16 %v383
          %v507 = vunpack.c.l.b16 %v384
          %v508 = vunpack.c.h.b16 %v384
          %v509 = vunpack.c.l.b16 %v385
          %v510 = vunpack.c.h.b16 %v385
          %v511 = vunpack.c.l.b16 %v386
          %v512 = vunpack.c.h.b16 %v386
          %v513 = vunpack.c.l.b16 %v387
          %v514 = vunpack.c.h.b16 %v387
          %v515 = vunpack.c.l.b16 %v388
          %v516 = vunpack.c.h.b16 %v388
          %v517 = vunpack.c.l.b16 %v389
          %v518 = vunpack.c.h.b16 %v389
          %v519 = vunpack.c.l.b16 %v390
          %v520 = vunpack.c.h.b16 %v390
          %v521 = vunpack.c.l.b16 %v391
          %v522 = vunpack.c.h.b16 %v391
          %v523 = vunpack.c.l.b16 %v392
          %v524 = vunpack.c.h.b16 %v392
          %v525 = vunpack.c.l.b16 %v393
          %v526 = vunpack.c.h.b16 %v393
          %v527 = vunpack.c.l.b16 %v394
          %v528 = vunpack.c.h.b16 %v394
          %v529 = vunpack.c.l.b16 %v395
          %v530 = vunpack.c.h.b16 %v395
          %v531 = vunpack.c.l.b16 %v396
          %v532 = vunpack.c.h.b16 %v396
          %v533 = vunpack.c.l.b16 %v397
          %v534 = vunpack.c.h.b16 %v397
          %v535 = vunpack.c.l.b16 %v398
          %v536 = vunpack.c.h.b16 %v398
          %v537 = vunpack.c.l.b16 %v399
          %v538 = vunpack.c.h.b16 %v399
          %v539 = vunpack.c.l.b16 %v400
          %v540 = vunpack.c.h.b16 %v400
          %v541 = vpack.c.b16 %v479, %v477
          %v542 = vpack.c.b16 %v480, %v478
          %v543 = vpack.c.b16 %v483, %v481
          %v544 = vpack.c.b16 %v484, %v482
          %v545 = vpack.c.b16 %v487, %v485
          %v546 = vpack.c.b16 %v488, %v486
          %v547 = vpack.c.b16 %v491, %v489
          %v548 = vpack.c.b16 %v492, %v490
          %v549 = vpack.c.b16 %v495, %v493
          %v550 = vpack.c.b16 %v496, %v494
          %v551 = vpack.c.b16 %v499, %v497
          %v552 = vpack.c.b16 %v500, %v498
          %v553 = vpack.c.b16 %v503, %v501
          %v554 = vpack.c.b16 %v504, %v502
          %v555 = vpack.c.b16 %v507, %v505
          %v556 = vpack.c.b16 %v508, %v506
          %v557 = vpack.c.b16 %v511, %v509
          %v558 = vpack.c.b16 %v512, %v510
          %v559 = vpack.c.b16 %v515, %v513
          %v560 = vpack.c.b16 %v516, %v514
          %v561 = vpack.c.b16 %v519, %v517
          %v562 = vpack.c.b16 %v520, %v518
          %v563 = vpack.c.b16 %v523, %v521
          %v564 = vpack.c.b16 %v524, %v522
          %v565 = vpack.c.b16 %v527, %v525
          %v566 = vpack.c.b16 %v528, %v526
          %v567 = vpack.c.b16 %v531, %v529
          %v568 = vpack.c.b16 %v532, %v530
          %v569 = vpack.c.b16 %v535, %v533
          %v570 = vpack.c.b16 %v536, %v534
          %v571 = vpack.c.b16 %v539, %v537
          %v572 = vpack.c.b16 %v540, %v538
          %v637 = vunpack.c.l.b16 %v401
          %v638 = vunpack.c.h.b16 %v401
          %v639 = vunpack.c.l.b16 %v402
          %v640 = vunpack.c.h.b16 %v402
          %v641 = vunpack.c.l.b16 %v403
          %v642 = vunpack.c.h.b16 %v403
          %v643 = vunpack.c.l.b16 %v404
          %v644 = vunpack.c.h.b16 %v404
          %v645 = vunpack.c.l.b16 %v405
          %v646 = vunpack.c.h.b16 %v405
          %v647 = vunpack.c.l.b16 %v406
          %v648 = vunpack.c.h.b16 %v406
          %v649 = vunpack.c.l.b16 %v407
          %v650 = vunpack.c.h.b16 %v407
          %v651 = vunpack.c.l.b16 %v408
          %v652 = vunpack.c.h.b16 %v408
          %v653 = vunpack.c.l.b16 %v409
          %v654 = vunpack.c.h.b16 %v409
          %v655 = vunpack.c.l.b16 %v410
          %v656 = vunpack.c.h.b16 %v410
          %v657 = vunpack.c.l.b16 %v411
          %v658 = vunpack.c.h.b16 %v411
          %v659 = vunpack.c.l.b16 %v412
          %v660 = vunpack.c.h.b16 %v412
          %v661 = vunpack.c.l.b16 %v413
          %v662 = vunpack.c.h.b16 %v413
          %v663 = vunpack.c.l.b16 %v414
          %v664 = vunpack.c.h.b16 %v414
          %v665 = vunpack.c.l.b16 %v415
          %v666 = vunpack.c.h.b16 %v415
          %v667 = vunpack.c.l.b16 %v416
          %v668 = vunpack.c.h.b16 %v416
          %v669 = vunpack.c.l.b16 %v417
          %v670 = vunpack.c.h.b16 %v417
          %v671 = vunpack.c.l.b16 %v418
          %v672 = vunpack.c.h.b16 %v418
          %v673 = vunpack.c.l.b16 %v419
          %v674 = vunpack.c.h.b16 %v419
          %v675 = vunpack.c.l.b16 %v420
          %v676 = vunpack.c.h.b16 %v420
          %v677 = vunpack.c.l.b16 %v421
          %v678 = vunpack.c.h.b16 %v421
          %v679 = vunpack.c.l.b16 %v422
          %v680 = vunpack.c.h.b16 %v422
          %v681 = vunpack.c.l.b16 %v423
          %v682 = vunpack.c.h.b16 %v423
          %v683 = vunpack.c.l.b16 %v424
          %v684 = vunpack.c.h.b16 %v424
          %v685 = vunpack.c.l.b16 %v425
          %v686 = vunpack.c.h.b16 %v425
          %v687 = vunpack.c.l.b16 %v426
          %v688 = vunpack.c.h.b16 %v426
          %v689 = vunpack.c.l.b16 %v427
          %v690 = vunpack.c.h.b16 %v427
          %v691 = vunpack.c.l.b16 %v428
          %v692 = vunpack.c.h.b16 %v428
          %v693 = vunpack.c.l.b16 %v429
          %v694 = vunpack.c.h.b16 %v429
          %v695 = vunpack.c.l.b16 %v430
          %v696 = vunpack.c.h.b16 %v430
          %v697 = vunpack.c.l.b16 %v431
          %v698 = vunpack.c.h.b16 %v431
          %v699 = vunpack.c.l.b16 %v432
          %v700 = vunpack.c.h.b16 %v432
          %v701 = vpack.c.b16 %v639, %v637
          %v702 = vpack.c.b16 %v640, %v638
          %v703 = vpack.c.b16 %v643, %v641
          %v704 = vpack.c.b16 %v644, %v642
          %v705 = vpack.c.b16 %v647, %v645
          %v706 = vpack.c.b16 %v648, %v646
          %v707 = vpack.c.b16 %v651, %v649
          %v708 = vpack.c.b16 %v652, %v650
          %v709 = vpack.c.b16 %v655, %v653
          %v710 = vpack.c.b16 %v656, %v654
          %v711 = vpack.c.b16 %v659, %v657
          %v712 = vpack.c.b16 %v660, %v658
          %v713 = vpack.c.b16 %v663, %v661
          %v714 = vpack.c.b16 %v664, %v662
          %v715 = vpack.c.b16 %v667, %v665
          %v716 = vpack.c.b16 %v668, %v666
          %v717 = vpack.c.b16 %v671, %v669
          %v718 = vpack.c.b16 %v672, %v670
          %v719 = vpack.c.b16 %v675, %v673
          %v720 = vpack.c.b16 %v676, %v674
          %v721 = vpack.c.b16 %v679, %v677
          %v722 = vpack.c.b16 %v680, %v678
          %v723 = vpack.c.b16 %v683, %v681
          %v724 = vpack.c.b16 %v684, %v682
          %v725 = vpack.c.b16 %v687, %v685
          %v726 = vpack.c.b16 %v688, %v686
          %v727 = vpack.c.b16 %v691, %v689
          %v728 = vpack.c.b16 %v692, %v690
          %v729 = vpack.c.b16 %v695, %v693
          %v730 = vpack.c.b16 %v696, %v694
          %v731 = vpack.c.b16 %v699, %v697
          %v732 = vpack.c.b16 %v700, %v698
          %765 = vmatprep.subr.bf16.mxu0 %v702
          %766 = vmatpush1.bf16.msra.mxu0 %v701
          %767 = vmatprep.subr.bf16.mxu0 %v704
          %768 = vmatpush1.bf16.msra.mxu0 %v703
          %769 = vmatprep.subr.bf16.mxu0 %v706
          %770 = vmatpush1.bf16.msra.mxu0 %v705
          %771 = vmatprep.subr.bf16.mxu0 %v708
          %772 = vmatpush1.bf16.msra.mxu0 %v707
          %773 = vmatprep.subr.bf16.mxu0 %v710
          %774 = vmatpush1.bf16.msra.mxu0 %v709
          %775 = vmatprep.subr.bf16.mxu0 %v712
          %776 = vmatpush1.bf16.msra.mxu0 %v711
          %777 = vmatprep.subr.bf16.mxu0 %v714
          %778 = vmatpush1.bf16.msra.mxu0 %v713
          %779 = vmatprep.subr.bf16.mxu0 %v716
          %780 = vmatpush1.bf16.msra.mxu0 %v715
          %781 = vmatprep.subr.bf16.mxu0 %v718
          %782 = vmatpush1.bf16.msra.mxu0 %v717
          %783 = vmatprep.subr.bf16.mxu0 %v720
          %784 = vmatpush1.bf16.msra.mxu0 %v719
          %785 = vmatprep.subr.bf16.mxu0 %v722
          %786 = vmatpush1.bf16.msra.mxu0 %v721
          %787 = vmatprep.subr.bf16.mxu0 %v724
          %788 = vmatpush1.bf16.msra.mxu0 %v723
          %789 = vmatprep.subr.bf16.mxu0 %v726
          %790 = vmatpush1.bf16.msra.mxu0 %v725
          %791 = vmatprep.subr.bf16.mxu0 %v728
          %792 = vmatpush1.bf16.msra.mxu0 %v727
          %793 = vmatprep.subr.bf16.mxu0 %v730
          %794 = vmatpush1.bf16.msra.mxu0 %v729
          %795 = vmatprep.subr.bf16.mxu0 %v732
          %796 = vmatpush1.bf16.msra.mxu0 %v731
          %797 = vmatprep.mubr.bf16.mxu0 %v542
          %798 = vmatmul.mubr.bf16.gmra.mrb[0].mxu0 %v541
          %v799 = vpop.f32.mrb[0].mxu0
          %v800 = vadd.f32 %v438, %v799
          %v801 = vpop.f32.mrb[0].mxu0
          %v802 = vadd.f32 %v442, %v801
          %v803 = vpop.f32.mrb[0].mxu0
          %v804 = vadd.f32 %v438, %v803
          %v805 = vpop.f32.mrb[0].mxu0
          %v806 = vadd.f32 %v442, %v805
          %807 = vmatprep.mubr.bf16.mxu0 %v544
          %808 = vmatmul.mubr.bf16.gmra.mrb[0].mxu0 %v543
          %v809 = vpop.f32.mrb[0].mxu0
          %v810 = vadd.f32 %v438, %v809
          %v811 = vpop.f32.mrb[0].mxu0
          %v812 = vadd.f32 %v442, %v811
          %v813 = vpop.f32.mrb[0].mxu0
          %v814 = vadd.f32 %v438, %v813
          %v815 = vpop.f32.mrb[0].mxu0
          %v816 = vadd.f32 %v442, %v815
          %817 = vmatprep.mubr.bf16.mxu0 %v546
          %818 = vmatmul.mubr.bf16.gmra.mrb[0].mxu0 %v545
          %v819 = vpop.f32.mrb[0].mxu0
          %v820 = vadd.f32 %v438, %v819
          %v821 = vpop.f32.mrb[0].mxu0
          %v822 = vadd.f32 %v442, %v821
          %v823 = vpop.f32.mrb[0].mxu0
          %v824 = vadd.f32 %v438, %v823
          %v825 = vpop.f32.mrb[0].mxu0
          %v826 = vadd.f32 %v442, %v825
          %827 = vmatprep.mubr.bf16.mxu0 %v548
          %828 = vmatmul.mubr.bf16.gmra.mrb[0].mxu0 %v547
          %v829 = vpop.f32.mrb[0].mxu0
          %v830 = vadd.f32 %v438, %v829
          %v831 = vpop.f32.mrb[0].mxu0
          %v832 = vadd.f32 %v442, %v831
          %v833 = vpop.f32.mrb[0].mxu0
          %v834 = vadd.f32 %v438, %v833
          %v835 = vpop.f32.mrb[0].mxu0
          %v836 = vadd.f32 %v442, %v835
          %837 = vmatprep.mubr.bf16.mxu0 %v550
          %838 = vmatmul.mubr.bf16.gmra.mrb[0].mxu0 %v549
          %v839 = vpop.f32.mrb[0].mxu0
          %v840 = vadd.f32 %v438, %v839
          %v841 = vpop.f32.mrb[0].mxu0
          %v842 = vadd.f32 %v442, %v841
          %v843 = vpop.f32.mrb[0].mxu0
          %v844 = vadd.f32 %v438, %v843
          %v845 = vpop.f32.mrb[0].mxu0
          %v846 = vadd.f32 %v442, %v845
          %847 = vmatprep.mubr.bf16.mxu0 %v552
          %848 = vmatmul.mubr.bf16.gmra.mrb[0].mxu0 %v551
          %v849 = vpop.f32.mrb[0].mxu0
          %v850 = vadd.f32 %v438, %v849
          %v851 = vpop.f32.mrb[0].mxu0
          %v852 = vadd.f32 %v442, %v851
          %v853 = vpop.f32.mrb[0].mxu0
          %v854 = vadd.f32 %v438, %v853
          %v855 = vpop.f32.mrb[0].mxu0
          %v856 = vadd.f32 %v442, %v855
          %857 = vmatprep.mubr.bf16.mxu0 %v554
          %858 = vmatmul.mubr.bf16.gmra.mrb[0].mxu0 %v553
          %v859 = vpop.f32.mrb[0].mxu0
          %v860 = vadd.f32 %v438, %v859
          %v861 = vpop.f32.mrb[0].mxu0
          %v862 = vadd.f32 %v442, %v861
          %v863 = vpop.f32.mrb[0].mxu0
          %v864 = vadd.f32 %v438, %v863
          %v865 = vpop.f32.mrb[0].mxu0
          %v866 = vadd.f32 %v442, %v865
          %867 = vmatprep.mubr.bf16.mxu0 %v556
          %868 = vmatmul.mubr.bf16.gmra.mrb[0].mxu0 %v555
          %v869 = vpop.f32.mrb[0].mxu0
          %v870 = vadd.f32 %v438, %v869
          %v871 = vpop.f32.mrb[0].mxu0
          %v872 = vadd.f32 %v442, %v871
          %v873 = vpop.f32.mrb[0].mxu0
          %v874 = vadd.f32 %v438, %v873
          %v875 = vpop.f32.mrb[0].mxu0
          %v876 = vadd.f32 %v442, %v875
          %877 = vmatprep.mubr.bf16.mxu0 %v558
          %878 = vmatmul.mubr.bf16.gmra.mrb[0].mxu0 %v557
          %v879 = vpop.f32.mrb[0].mxu0
          %v880 = vadd.f32 %v438, %v879
          %v881 = vpop.f32.mrb[0].mxu0
          %v882 = vadd.f32 %v442, %v881
          %v883 = vpop.f32.mrb[0].mxu0
          %v884 = vadd.f32 %v438, %v883
          %v885 = vpop.f32.mrb[0].mxu0
          %v886 = vadd.f32 %v442, %v885
          %887 = vmatprep.mubr.bf16.mxu0 %v560
          %888 = vmatmul.mubr.bf16.gmra.mrb[0].mxu0 %v559
          %v889 = vpop.f32.mrb[0].mxu0
          %v890 = vadd.f32 %v438, %v889
          %v891 = vpop.f32.mrb[0].mxu0
          %v892 = vadd.f32 %v442, %v891
          %v893 = vpop.f32.mrb[0].mxu0
          %v894 = vadd.f32 %v438, %v893
          %v895 = vpop.f32.mrb[0].mxu0
          %v896 = vadd.f32 %v442, %v895
          %897 = vmatprep.mubr.bf16.mxu0 %v562
          %898 = vmatmul.mubr.bf16.gmra.mrb[0].mxu0 %v561
          %v899 = vpop.f32.mrb[0].mxu0
          %v900 = vadd.f32 %v438, %v899
          %v901 = vpop.f32.mrb[0].mxu0
          %v902 = vadd.f32 %v442, %v901
          %v903 = vpop.f32.mrb[0].mxu0
          %v904 = vadd.f32 %v438, %v903
          %v905 = vpop.f32.mrb[0].mxu0
          %v906 = vadd.f32 %v442, %v905
          %907 = vmatprep.mubr.bf16.mxu0 %v564
          %908 = vmatmul.mubr.bf16.gmra.mrb[0].mxu0 %v563
          %v909 = vpop.f32.mrb[0].mxu0
          %v910 = vadd.f32 %v438, %v909
          %v911 = vpop.f32.mrb[0].mxu0
          %v912 = vadd.f32 %v442, %v911
          %v913 = vpop.f32.mrb[0].mxu0
          %v914 = vadd.f32 %v438, %v913
          %v915 = vpop.f32.mrb[0].mxu0
          %v916 = vadd.f32 %v442, %v915
          %917 = vmatprep.mubr.bf16.mxu0 %v566
          %918 = vmatmul.mubr.bf16.gmra.mrb[0].mxu0 %v565
          %v919 = vpop.f32.mrb[0].mxu0
          %v920 = vadd.f32 %v438, %v919
          %v921 = vpop.f32.mrb[0].mxu0
          %v922 = vadd.f32 %v442, %v921
          %v923 = vpop.f32.mrb[0].mxu0
          %v924 = vadd.f32 %v438, %v923
          %v925 = vpop.f32.mrb[0].mxu0
          %v926 = vadd.f32 %v442, %v925
          %927 = vmatprep.mubr.bf16.mxu0 %v568
          %928 = vmatmul.mubr.bf16.gmra.mrb[0].mxu0 %v567
          %v929 = vpop.f32.mrb[0].mxu0
          %v930 = vadd.f32 %v438, %v929
          %v931 = vpop.f32.mrb[0].mxu0
          %v932 = vadd.f32 %v442, %v931
          %v933 = vpop.f32.mrb[0].mxu0
          %v934 = vadd.f32 %v438, %v933
          %v935 = vpop.f32.mrb[0].mxu0
          %v936 = vadd.f32 %v442, %v935
          %937 = vmatprep.mubr.bf16.mxu0 %v570
          %938 = vmatmul.mubr.bf16.gmra.mrb[0].mxu0 %v569
          %v939 = vpop.f32.mrb[0].mxu0
          %v940 = vadd.f32 %v438, %v939
          %v941 = vpop.f32.mrb[0].mxu0
          %v942 = vadd.f32 %v442, %v941
          %v943 = vpop.f32.mrb[0].mxu0
          %v944 = vadd.f32 %v438, %v943
          %v945 = vpop.f32.mrb[0].mxu0
          %v946 = vadd.f32 %v442, %v945
          %947 = vmatprep.mubr.bf16.mxu0 %v572
          %948 = vmatmul.mubr.bf16.gmra.mrb[0].mxu0 %v571
          %v949 = vpop.f32.mrb[0].mxu0
          %v950 = vadd.f32 %v438, %v949
          %v951 = vpop.f32.mrb[0].mxu0
          %v952 = vadd.f32 %v442, %v951
          %v953 = vpop.f32.mrb[0].mxu0
          %v954 = vadd.f32 %v438, %v953
          %v955 = vpop.f32.mrb[0].mxu0
          %v956 = vadd.f32 %v442, %v955
          %957 = vdwg.mxu0
          %v958 = vmax.f32 %v800, 0.0
          %v959 = vmax.f32 %v802, 0.0
          %v960 = vmax.f32 %v804, 0.0
          %v961 = vmax.f32 %v806, 0.0
          %v962 = vmax.f32 %v810, 0.0
          %v963 = vmax.f32 %v812, 0.0
          %v964 = vmax.f32 %v814, 0.0
          %v965 = vmax.f32 %v816, 0.0
          %v966 = vmax.f32 %v820, 0.0
          %v967 = vmax.f32 %v822, 0.0
          %v968 = vmax.f32 %v824, 0.0
          %v969 = vmax.f32 %v826, 0.0
          %v970 = vmax.f32 %v830, 0.0
          %v971 = vmax.f32 %v832, 0.0
          %v972 = vmax.f32 %v834, 0.0
          %v973 = vmax.f32 %v836, 0.0
          %v974 = vmax.f32 %v840, 0.0
          %v975 = vmax.f32 %v842, 0.0
          %v976 = vmax.f32 %v844, 0.0
          %v977 = vmax.f32 %v846, 0.0
          %v978 = vmax.f32 %v850, 0.0
          %v979 = vmax.f32 %v852, 0.0
          %v980 = vmax.f32 %v854, 0.0
          %v981 = vmax.f32 %v856, 0.0
          %v982 = vmax.f32 %v860, 0.0
          %v983 = vmax.f32 %v862, 0.0
          %v984 = vmax.f32 %v864, 0.0
          %v985 = vmax.f32 %v866, 0.0
          %v986 = vmax.f32 %v870, 0.0
          %v987 = vmax.f32 %v872, 0.0
          %v988 = vmax.f32 %v874, 0.0
          %v989 = vmax.f32 %v876, 0.0
          %v990 = vmax.f32 %v880, 0.0
          %v991 = vmax.f32 %v882, 0.0
          %v992 = vmax.f32 %v884, 0.0
          %v993 = vmax.f32 %v886, 0.0
          %v994 = vmax.f32 %v890, 0.0
          %v995 = vmax.f32 %v892, 0.0
          %v996 = vmax.f32 %v894, 0.0
          %v997 = vmax.f32 %v896, 0.0
          %v998 = vmax.f32 %v900, 0.0
          %v999 = vmax.f32 %v902, 0.0
          %v1000 = vmax.f32 %v904, 0.0
          %v1001 = vmax.f32 %v906, 0.0
          %v1002 = vmax.f32 %v910, 0.0
          %v1003 = vmax.f32 %v912, 0.0
          %v1004 = vmax.f32 %v914, 0.0
          %v1005 = vmax.f32 %v916, 0.0
          %v1006 = vmax.f32 %v920, 0.0
          %v1007 = vmax.f32 %v922, 0.0
          %v1008 = vmax.f32 %v924, 0.0
          %v1009 = vmax.f32 %v926, 0.0
          %v1010 = vmax.f32 %v930, 0.0
          %v1011 = vmax.f32 %v932, 0.0
          %v1012 = vmax.f32 %v934, 0.0
          %v1013 = vmax.f32 %v936, 0.0
          %v1014 = vmax.f32 %v940, 0.0
          %v1015 = vmax.f32 %v942, 0.0
          %v1016 = vmax.f32 %v944, 0.0
          %v1017 = vmax.f32 %v946, 0.0
          %v1018 = vmax.f32 %v950, 0.0
          %v1019 = vmax.f32 %v952, 0.0
          %v1020 = vmax.f32 %v954, 0.0
          %v1021 = vmax.f32 %v956, 0.0
          %v1022 = vpack.c.bf16 %v960, %v958
          %v1023 = vpack.c.bf16 %v961, %v959
          %v1024 = vpack.c.bf16 %v964, %v962
          %v1025 = vpack.c.bf16 %v965, %v963
          %v1026 = vpack.c.bf16 %v968, %v966
          %v1027 = vpack.c.bf16 %v969, %v967
          %v1028 = vpack.c.bf16 %v972, %v970
          %v1029 = vpack.c.bf16 %v973, %v971
          %v1030 = vpack.c.bf16 %v976, %v974
          %v1031 = vpack.c.bf16 %v977, %v975
          %v1032 = vpack.c.bf16 %v980, %v978
          %v1033 = vpack.c.bf16 %v981, %v979
          %v1034 = vpack.c.bf16 %v984, %v982
          %v1035 = vpack.c.bf16 %v985, %v983
          %v1036 = vpack.c.bf16 %v988, %v986
          %v1037 = vpack.c.bf16 %v989, %v987
          %v1038 = vpack.c.bf16 %v992, %v990
          %v1039 = vpack.c.bf16 %v993, %v991
          %v1040 = vpack.c.bf16 %v996, %v994
          %v1041 = vpack.c.bf16 %v997, %v995
          %v1042 = vpack.c.bf16 %v1000, %v998
          %v1043 = vpack.c.bf16 %v1001, %v999
          %v1044 = vpack.c.bf16 %v1004, %v1002
          %v1045 = vpack.c.bf16 %v1005, %v1003
          %v1046 = vpack.c.bf16 %v1008, %v1006
          %v1047 = vpack.c.bf16 %v1009, %v1007
          %v1048 = vpack.c.bf16 %v1012, %v1010
          %v1049 = vpack.c.bf16 %v1013, %v1011
          %v1050 = vpack.c.bf16 %v1016, %v1014
          %v1051 = vpack.c.bf16 %v1017, %v1015
          %v1052 = vpack.c.bf16 %v1020, %v1018
          %v1053 = vpack.c.bf16 %v1021, %v1019
          %1054 = vst [vmem:[#allocation2] sm:$0xff] %v1022
          %1055 = vst [vmem:[#allocation2 + $0x8] sm:$0xff] %v1023
          %1056 = vst [vmem:[#allocation2 + $0x10] sm:$0xff] %v1024
          %1057 = vst [vmem:[#allocation2 + $0x18] sm:$0xff] %v1025
          %1058 = vst [vmem:[#allocation2 + $0x20] sm:$0xff] %v1026
          %1059 = vst [vmem:[#allocation2 + $0x28] sm:$0xff] %v1027
          %1060 = vst [vmem:[#allocation2 + $0x30] sm:$0xff] %v1028
          %1061 = vst [vmem:[#allocation2 + $0x38] sm:$0xff] %v1029
          %1062 = vst [vmem:[#allocation2 + $0x40] sm:$0xff] %v1030
          %1063 = vst [vmem:[#allocation2 + $0x48] sm:$0xff] %v1031
          %1064 = vst [vmem:[#allocation2 + $0x50] sm:$0xff] %v1032
          %1065 = vst [vmem:[#allocation2 + $0x58] sm:$0xff] %v1033
          %1066 = vst [vmem:[#allocation2 + $0x60] sm:$0xff] %v1034
          %1067 = vst [vmem:[#allocation2 + $0x68] sm:$0xff] %v1035
          %1068 = vst [vmem:[#allocation2 + $0x70] sm:$0xff] %v1036
          %1069 = vst [vmem:[#allocation2 + $0x78] sm:$0xff] %v1037
          %1070 = vst [vmem:[#allocation2 + $0x80] sm:$0xff] %v1038
          %1071 = vst [vmem:[#allocation2 + $0x88] sm:$0xff] %v1039
          %1072 = vst [vmem:[#allocation2 + $0x90] sm:$0xff] %v1040
          %1073 = vst [vmem:[#allocation2 + $0x98] sm:$0xff] %v1041
          %1074 = vst [vmem:[#allocation2 + $0xa0] sm:$0xff] %v1042
          %1075 = vst [vmem:[#allocation2 + $0xa8] sm:$0xff] %v1043
          %1076 = vst [vmem:[#allocation2 + $0xb0] sm:$0xff] %v1044
          %1077 = vst [vmem:[#allocation2 + $0xb8] sm:$0xff] %v1045
          %1078 = vst [vmem:[#allocation2 + $0xc0] sm:$0xff] %v1046
          %1079 = vst [vmem:[#allocation2 + $0xc8] sm:$0xff] %v1047
          %1080 = vst [vmem:[#allocation2 + $0xd0] sm:$0xff] %v1048
          %1081 = vst [vmem:[#allocation2 + $0xd8] sm:$0xff] %v1049
          %1082 = vst [vmem:[#allocation2 + $0xe0] sm:$0xff] %v1050
          %1083 = vst [vmem:[#allocation2 + $0xe8] sm:$0xff] %v1051
          %1084 = vst [vmem:[#allocation2 + $0xf0] sm:$0xff] %v1052
          %1085 = vst [vmem:[#allocation2 + $0xf8] sm:$0xff] %v1053
        $region64: #{tpu_custom_call.1} parent=39 // pred_fallthru
          _
        %v1086 = vld [vmem:[#allocation2] sm:$0xff]
        %v1087 = vld [vmem:[#allocation2 + $0x8] sm:$0xff]
        %v1088 = vld [vmem:[#allocation2 + $0x10] sm:$0xff]
        %v1089 = vld [vmem:[#allocation2 + $0x18] sm:$0xff]
        %v1090 = vld [vmem:[#allocation2 + $0x20] sm:$0xff]
        %v1091 = vld [vmem:[#allocation2 + $0x28] sm:$0xff]
        %v1092 = vld [vmem:[#allocation2 + $0x30] sm:$0xff]
        %v1093 = vld [vmem:[#allocation2 + $0x38] sm:$0xff]
        %v1094 = vld [vmem:[#allocation2 + $0x40] sm:$0xff]
        %v1095 = vld [vmem:[#allocation2 + $0x48] sm:$0xff]
        %v1096 = vld [vmem:[#allocation2 + $0x50] sm:$0xff]
        %v1097 = vld [vmem:[#allocation2 + $0x58] sm:$0xff]
        %v1098 = vld [vmem:[#allocation2 + $0x60] sm:$0xff]
        %v1099 = vld [vmem:[#allocation2 + $0x68] sm:$0xff]
        %v1100 = vld [vmem:[#allocation2 + $0x70] sm:$0xff]
        %v1101 = vld [vmem:[#allocation2 + $0x78] sm:$0xff]
        %v1102 = vld [vmem:[#allocation2 + $0x80] sm:$0xff]
        %v1103 = vld [vmem:[#allocation2 + $0x88] sm:$0xff]
        %v1104 = vld [vmem:[#allocation2 + $0x90] sm:$0xff]
        %v1105 = vld [vmem:[#allocation2 + $0x98] sm:$0xff]
        %v1106 = vld [vmem:[#allocation2 + $0xa0] sm:$0xff]
        %v1107 = vld [vmem:[#allocation2 + $0xa8] sm:$0xff]
        %v1108 = vld [vmem:[#allocation2 + $0xb0] sm:$0xff]
        %v1109 = vld [vmem:[#allocation2 + $0xb8] sm:$0xff]
        %v1110 = vld [vmem:[#allocation2 + $0xc0] sm:$0xff]
        %v1111 = vld [vmem:[#allocation2 + $0xc8] sm:$0xff]
        %v1112 = vld [vmem:[#allocation2 + $0xd0] sm:$0xff]
        %v1113 = vld [vmem:[#allocation2 + $0xd8] sm:$0xff]
        %v1114 = vld [vmem:[#allocation2 + $0xe0] sm:$0xff]
        %v1115 = vld [vmem:[#allocation2 + $0xe8] sm:$0xff]
        %v1116 = vld [vmem:[#allocation2 + $0xf0] sm:$0xff]
        %v1117 = vld [vmem:[#allocation2 + $0xf8] sm:$0xff]
        %v1118 = vld [vmem:[%s314] sm:$0xff]
        %v1119 = vld [vmem:[%s314 + $0x8] sm:$0xff]
        %v1120 = vld [vmem:[%s314 + $0x10] sm:$0xff]
        %v1121 = vld [vmem:[%s314 + $0x18] sm:$0xff]
        %v1122 = vld [vmem:[%s314 + $0x20] sm:$0xff]
        %v1123 = vld [vmem:[%s314 + $0x28] sm:$0xff]
        %v1124 = vld [vmem:[%s314 + $0x30] sm:$0xff]
        %v1125 = vld [vmem:[%s314 + $0x38] sm:$0xff]
        %v1126 = vld [vmem:[%s314 + $0x40] sm:$0xff]
        %v1127 = vld [vmem:[%s314 + $0x48] sm:$0xff]
        %v1128 = vld [vmem:[%s314 + $0x50] sm:$0xff]
        %v1129 = vld [vmem:[%s314 + $0x58] sm:$0xff]
        %v1130 = vld [vmem:[%s314 + $0x60] sm:$0xff]
        %v1131 = vld [vmem:[%s314 + $0x68] sm:$0xff]
        %v1132 = vld [vmem:[%s314 + $0x70] sm:$0xff]
        %v1133 = vld [vmem:[%s314 + $0x78] sm:$0xff]
        %v1134 = vld [vmem:[%s314 + $0x80] sm:$0xff]
        %v1135 = vld [vmem:[%s314 + $0x88] sm:$0xff]
        %v1136 = vld [vmem:[%s314 + $0x90] sm:$0xff]
        %v1137 = vld [vmem:[%s314 + $0x98] sm:$0xff]
        %v1138 = vld [vmem:[%s314 + $0xa0] sm:$0xff]
        %v1139 = vld [vmem:[%s314 + $0xa8] sm:$0xff]
        %v1140 = vld [vmem:[%s314 + $0xb0] sm:$0xff]
        %v1141 = vld [vmem:[%s314 + $0xb8] sm:$0xff]
        %v1142 = vld [vmem:[%s314 + $0xc0] sm:$0xff]
        %v1143 = vld [vmem:[%s314 + $0xc8] sm:$0xff]
        %v1144 = vld [vmem:[%s314 + $0xd0] sm:$0xff]
        %v1145 = vld [vmem:[%s314 + $0xd8] sm:$0xff]
        %v1146 = vld [vmem:[%s314 + $0xe0] sm:$0xff]
        %v1147 = vld [vmem:[%s314 + $0xe8] sm:$0xff]
        %v1148 = vld [vmem:[%s314 + $0xf0] sm:$0xff]
        %v1149 = vld [vmem:[%s314 + $0xf8] sm:$0xff]
        %v1150 = vld [vmem:[%s314 + $0x100] sm:$0xff]
        %v1151 = vld [vmem:[%s314 + $0x108] sm:$0xff]
        %v1152 = vld [vmem:[%s314 + $0x110] sm:$0xff]
        %v1153 = vld [vmem:[%s314 + $0x118] sm:$0xff]
        %v1154 = vld [vmem:[%s314 + $0x120] sm:$0xff]
        %v1155 = vld [vmem:[%s314 + $0x128] sm:$0xff]
        %v1156 = vld [vmem:[%s314 + $0x130] sm:$0xff]
        %v1157 = vld [vmem:[%s314 + $0x138] sm:$0xff]
        %v1158 = vld [vmem:[%s314 + $0x140] sm:$0xff]
        %v1159 = vld [vmem:[%s314 + $0x148] sm:$0xff]
        %v1160 = vld [vmem:[%s314 + $0x150] sm:$0xff]
        %v1161 = vld [vmem:[%s314 + $0x158] sm:$0xff]
        %v1162 = vld [vmem:[%s314 + $0x160] sm:$0xff]
        %v1163 = vld [vmem:[%s314 + $0x168] sm:$0xff]
        %v1164 = vld [vmem:[%s314 + $0x170] sm:$0xff]
        %v1165 = vld [vmem:[%s314 + $0x178] sm:$0xff]
        %v1166 = vld [vmem:[%s314 + $0x180] sm:$0xff]
        %v1167 = vld [vmem:[%s314 + $0x188] sm:$0xff]
        %v1168 = vld [vmem:[%s314 + $0x190] sm:$0xff]
        %v1169 = vld [vmem:[%s314 + $0x198] sm:$0xff]
        %v1170 = vld [vmem:[%s314 + $0x1a0] sm:$0xff]
        %v1171 = vld [vmem:[%s314 + $0x1a8] sm:$0xff]
        %v1172 = vld [vmem:[%s314 + $0x1b0] sm:$0xff]
        %v1173 = vld [vmem:[%s314 + $0x1b8] sm:$0xff]
        %v1174 = vld [vmem:[%s314 + $0x1c0] sm:$0xff]
        %v1175 = vld [vmem:[%s314 + $0x1c8] sm:$0xff]
        %v1176 = vld [vmem:[%s314 + $0x1d0] sm:$0xff]
        %v1177 = vld [vmem:[%s314 + $0x1d8] sm:$0xff]
        %v1178 = vld [vmem:[%s314 + $0x1e0] sm:$0xff]
        %v1179 = vld [vmem:[%s314 + $0x1e8] sm:$0xff]
        %v1180 = vld [vmem:[%s314 + $0x1f0] sm:$0xff]
        %v1181 = vld [vmem:[%s314 + $0x1f8] sm:$0xff]
        %v1182 = vld [vmem:[%s314 + $0x200] sm:$0xff]
        %v1183 = vld [vmem:[%s314 + $0x208] sm:$0xff]
        %v1184 = vld [vmem:[%s314 + $0x210] sm:$0xff]
        %v1185 = vld [vmem:[%s314 + $0x218] sm:$0xff]
        %v1186 = vld [vmem:[%s314 + $0x220] sm:$0xff]
        %v1187 = vld [vmem:[%s314 + $0x228] sm:$0xff]
        %v1188 = vld [vmem:[%s314 + $0x230] sm:$0xff]
        %v1189 = vld [vmem:[%s314 + $0x238] sm:$0xff]
        %v1190 = vld [vmem:[%s314 + $0x240] sm:$0xff]
        %v1191 = vld [vmem:[%s314 + $0x248] sm:$0xff]
        %v1192 = vld [vmem:[%s314 + $0x250] sm:$0xff]
        %v1193 = vld [vmem:[%s314 + $0x258] sm:$0xff]
        %v1194 = vld [vmem:[%s314 + $0x260] sm:$0xff]
        %v1195 = vld [vmem:[%s314 + $0x268] sm:$0xff]
        %v1196 = vld [vmem:[%s314 + $0x270] sm:$0xff]
        %v1197 = vld [vmem:[%s314 + $0x278] sm:$0xff]
        %v1198 = vld [vmem:[%s314 + $0x280] sm:$0xff]
        %v1199 = vld [vmem:[%s314 + $0x288] sm:$0xff]
        %v1200 = vld [vmem:[%s314 + $0x290] sm:$0xff]
        %v1201 = vld [vmem:[%s314 + $0x298] sm:$0xff]
        %v1202 = vld [vmem:[%s314 + $0x2a0] sm:$0xff]
        %v1203 = vld [vmem:[%s314 + $0x2a8] sm:$0xff]
        %v1204 = vld [vmem:[%s314 + $0x2b0] sm:$0xff]
        %v1205 = vld [vmem:[%s314 + $0x2b8] sm:$0xff]
        %v1206 = vld [vmem:[%s314 + $0x2c0] sm:$0xff]
        %v1207 = vld [vmem:[%s314 + $0x2c8] sm:$0xff]
        %v1208 = vld [vmem:[%s314 + $0x2d0] sm:$0xff]
        %v1209 = vld [vmem:[%s314 + $0x2d8] sm:$0xff]
        %v1210 = vld [vmem:[%s314 + $0x2e0] sm:$0xff]
        %v1211 = vld [vmem:[%s314 + $0x2e8] sm:$0xff]
        %v1212 = vld [vmem:[%s314 + $0x2f0] sm:$0xff]
        %v1213 = vld [vmem:[%s314 + $0x2f8] sm:$0xff]
        %v1214 = vld [vmem:[%s314 + $0x300] sm:$0xff]
        %v1215 = vld [vmem:[%s314 + $0x308] sm:$0xff]
        %v1216 = vld [vmem:[%s314 + $0x310] sm:$0xff]
        %v1217 = vld [vmem:[%s314 + $0x318] sm:$0xff]
        %v1218 = vld [vmem:[%s314 + $0x320] sm:$0xff]
        %v1219 = vld [vmem:[%s314 + $0x328] sm:$0xff]
        %v1220 = vld [vmem:[%s314 + $0x330] sm:$0xff]
        %v1221 = vld [vmem:[%s314 + $0x338] sm:$0xff]
        %v1222 = vld [vmem:[%s314 + $0x340] sm:$0xff]
        %v1223 = vld [vmem:[%s314 + $0x348] sm:$0xff]
        %v1224 = vld [vmem:[%s314 + $0x350] sm:$0xff]
        %v1225 = vld [vmem:[%s314 + $0x358] sm:$0xff]
        %v1226 = vld [vmem:[%s314 + $0x360] sm:$0xff]
        %v1227 = vld [vmem:[%s314 + $0x368] sm:$0xff]
        %v1228 = vld [vmem:[%s314 + $0x370] sm:$0xff]
        %v1229 = vld [vmem:[%s314 + $0x378] sm:$0xff]
        %v1230 = vld [vmem:[%s314 + $0x380] sm:$0xff]
        %v1231 = vld [vmem:[%s314 + $0x388] sm:$0xff]
        %v1232 = vld [vmem:[%s314 + $0x390] sm:$0xff]
        %v1233 = vld [vmem:[%s314 + $0x398] sm:$0xff]
        %v1234 = vld [vmem:[%s314 + $0x3a0] sm:$0xff]
        %v1235 = vld [vmem:[%s314 + $0x3a8] sm:$0xff]
        %v1236 = vld [vmem:[%s314 + $0x3b0] sm:$0xff]
        %v1237 = vld [vmem:[%s314 + $0x3b8] sm:$0xff]
        %v1238 = vld [vmem:[%s314 + $0x3c0] sm:$0xff]
        %v1239 = vld [vmem:[%s314 + $0x3c8] sm:$0xff]
        %v1240 = vld [vmem:[%s314 + $0x3d0] sm:$0xff]
        %v1241 = vld [vmem:[%s314 + $0x3d8] sm:$0xff]
        %v1242 = vld [vmem:[%s314 + $0x3e0] sm:$0xff]
        %v1243 = vld [vmem:[%s314 + $0x3e8] sm:$0xff]
        %v1244 = vld [vmem:[%s314 + $0x3f0] sm:$0xff]
        %v1245 = vld [vmem:[%s314 + $0x3f8] sm:$0xff]
        %v1246 = vld [vmem:[%s323] sm:$0xff]
        %v1248 = vlaneseq
        %v1249 = vshrl.u32 %v1248, 7
        %v1250 = vsub.s32 0, %v1249
        %v1251 = vrot.slane %v1246, %v1250
        %v1252 = vlaneseq
        %v1253 = vshrl.u32 %v1252, 7
        %v1254 = vsub.s32 1, %v1253
        %v1255 = vrot.slane %v1246, %v1254
        %v1256 = vlaneseq
        %v1257 = vshrl.u32 %v1256, 7
        %v1258 = vsub.s32 2, %v1257
        %v1259 = vrot.slane %v1246, %v1258
        %v1260 = vlaneseq
        %v1261 = vshrl.u32 %v1260, 7
        %v1262 = vsub.s32 3, %v1261
        %v1263 = vrot.slane %v1246, %v1262
        %v1264 = vlaneseq
        %v1265 = vshrl.u32 %v1264, 7
        %v1266 = vsub.s32 4, %v1265
        %v1267 = vrot.slane %v1246, %v1266
        %v1268 = vlaneseq
        %v1269 = vshrl.u32 %v1268, 7
        %v1270 = vsub.s32 5, %v1269
        %v1271 = vrot.slane %v1246, %v1270
        %v1272 = vlaneseq
        %v1273 = vshrl.u32 %v1272, 7
        %v1274 = vsub.s32 6, %v1273
        %v1275 = vrot.slane %v1246, %v1274
        %v1276 = vlaneseq
        %v1277 = vshrl.u32 %v1276, 7
        %v1278 = vsub.s32 7, %v1277
        %v1279 = vrot.slane %v1246, %v1278
        %v1416 = vunpack.c.l.b16 %v1118
        %v1417 = vunpack.c.h.b16 %v1118
        %v1418 = vunpack.c.l.b16 %v1119
        %v1419 = vunpack.c.h.b16 %v1119
        %v1420 = vunpack.c.l.b16 %v1120
        %v1421 = vunpack.c.h.b16 %v1120
        %v1422 = vunpack.c.l.b16 %v1121
        %v1423 = vunpack.c.h.b16 %v1121
        %v1424 = vunpack.c.l.b16 %v1122
        %v1425 = vunpack.c.h.b16 %v1122
        %v1426 = vunpack.c.l.b16 %v1123
        %v1427 = vunpack.c.h.b16 %v1123
        %v1428 = vunpack.c.l.b16 %v1124
        %v1429 = vunpack.c.h.b16 %v1124
        %v1430 = vunpack.c.l.b16 %v1125
        %v1431 = vunpack.c.h.b16 %v1125
        %v1432 = vunpack.c.l.b16 %v1126
        %v1433 = vunpack.c.h.b16 %v1126
        %v1434 = vunpack.c.l.b16 %v1127
        %v1435 = vunpack.c.h.b16 %v1127
        %v1436 = vunpack.c.l.b16 %v1128
        %v1437 = vunpack.c.h.b16 %v1128
        %v1438 = vunpack.c.l.b16 %v1129
        %v1439 = vunpack.c.h.b16 %v1129
        %v1440 = vunpack.c.l.b16 %v1130
        %v1441 = vunpack.c.h.b16 %v1130
        %v1442 = vunpack.c.l.b16 %v1131
        %v1443 = vunpack.c.h.b16 %v1131
        %v1444 = vunpack.c.l.b16 %v1132
        %v1445 = vunpack.c.h.b16 %v1132
        %v1446 = vunpack.c.l.b16 %v1133
        %v1447 = vunpack.c.h.b16 %v1133
        %v1448 = vunpack.c.l.b16 %v1134
        %v1449 = vunpack.c.h.b16 %v1134
        %v1450 = vunpack.c.l.b16 %v1135
        %v1451 = vunpack.c.h.b16 %v1135
        %v1452 = vunpack.c.l.b16 %v1136
        %v1453 = vunpack.c.h.b16 %v1136
        %v1454 = vunpack.c.l.b16 %v1137
        %v1455 = vunpack.c.h.b16 %v1137
        %v1456 = vunpack.c.l.b16 %v1138
        %v1457 = vunpack.c.h.b16 %v1138
        %v1458 = vunpack.c.l.b16 %v1139
        %v1459 = vunpack.c.h.b16 %v1139
        %v1460 = vunpack.c.l.b16 %v1140
        %v1461 = vunpack.c.h.b16 %v1140
        %v1462 = vunpack.c.l.b16 %v1141
        %v1463 = vunpack.c.h.b16 %v1141
        %v1464 = vunpack.c.l.b16 %v1142
        %v1465 = vunpack.c.h.b16 %v1142
        %v1466 = vunpack.c.l.b16 %v1143
        %v1467 = vunpack.c.h.b16 %v1143
        %v1468 = vunpack.c.l.b16 %v1144
        %v1469 = vunpack.c.h.b16 %v1144
        %v1470 = vunpack.c.l.b16 %v1145
        %v1471 = vunpack.c.h.b16 %v1145
        %v1472 = vunpack.c.l.b16 %v1146
        %v1473 = vunpack.c.h.b16 %v1146
        %v1474 = vunpack.c.l.b16 %v1147
        %v1475 = vunpack.c.h.b16 %v1147
        %v1476 = vunpack.c.l.b16 %v1148
        %v1477 = vunpack.c.h.b16 %v1148
        %v1478 = vunpack.c.l.b16 %v1149
        %v1479 = vunpack.c.h.b16 %v1149
        %v1480 = vunpack.c.l.b16 %v1150
        %v1481 = vunpack.c.h.b16 %v1150
        %v1482 = vunpack.c.l.b16 %v1151
        %v1483 = vunpack.c.h.b16 %v1151
        %v1484 = vunpack.c.l.b16 %v1152
        %v1485 = vunpack.c.h.b16 %v1152
        %v1486 = vunpack.c.l.b16 %v1153
        %v1487 = vunpack.c.h.b16 %v1153
        %v1488 = vunpack.c.l.b16 %v1154
        %v1489 = vunpack.c.h.b16 %v1154
        %v1490 = vunpack.c.l.b16 %v1155
        %v1491 = vunpack.c.h.b16 %v1155
        %v1492 = vunpack.c.l.b16 %v1156
        %v1493 = vunpack.c.h.b16 %v1156
        %v1494 = vunpack.c.l.b16 %v1157
        %v1495 = vunpack.c.h.b16 %v1157
        %v1496 = vunpack.c.l.b16 %v1158
        %v1497 = vunpack.c.h.b16 %v1158
        %v1498 = vunpack.c.l.b16 %v1159
        %v1499 = vunpack.c.h.b16 %v1159
        %v1500 = vunpack.c.l.b16 %v1160
        %v1501 = vunpack.c.h.b16 %v1160
        %v1502 = vunpack.c.l.b16 %v1161
        %v1503 = vunpack.c.h.b16 %v1161
        %v1504 = vunpack.c.l.b16 %v1162
        %v1505 = vunpack.c.h.b16 %v1162
        %v1506 = vunpack.c.l.b16 %v1163
        %v1507 = vunpack.c.h.b16 %v1163
        %v1508 = vunpack.c.l.b16 %v1164
        %v1509 = vunpack.c.h.b16 %v1164
        %v1510 = vunpack.c.l.b16 %v1165
        %v1511 = vunpack.c.h.b16 %v1165
        %v1512 = vunpack.c.l.b16 %v1166
        %v1513 = vunpack.c.h.b16 %v1166
        %v1514 = vunpack.c.l.b16 %v1167
        %v1515 = vunpack.c.h.b16 %v1167
        %v1516 = vunpack.c.l.b16 %v1168
        %v1517 = vunpack.c.h.b16 %v1168
        %v1518 = vunpack.c.l.b16 %v1169
        %v1519 = vunpack.c.h.b16 %v1169
        %v1520 = vunpack.c.l.b16 %v1170
        %v1521 = vunpack.c.h.b16 %v1170
        %v1522 = vunpack.c.l.b16 %v1171
        %v1523 = vunpack.c.h.b16 %v1171
        %v1524 = vunpack.c.l.b16 %v1172
        %v1525 = vunpack.c.h.b16 %v1172
        %v1526 = vunpack.c.l.b16 %v1173
        %v1527 = vunpack.c.h.b16 %v1173
        %v1528 = vunpack.c.l.b16 %v1174
        %v1529 = vunpack.c.h.b16 %v1174
        %v1530 = vunpack.c.l.b16 %v1175
        %v1531 = vunpack.c.h.b16 %v1175
        %v1532 = vunpack.c.l.b16 %v1176
        %v1533 = vunpack.c.h.b16 %v1176
        %v1534 = vunpack.c.l.b16 %v1177
        %v1535 = vunpack.c.h.b16 %v1177
        %v1536 = vunpack.c.l.b16 %v1178
        %v1537 = vunpack.c.h.b16 %v1178
        %v1538 = vunpack.c.l.b16 %v1179
        %v1539 = vunpack.c.h.b16 %v1179
        %v1540 = vunpack.c.l.b16 %v1180
        %v1541 = vunpack.c.h.b16 %v1180
        %v1542 = vunpack.c.l.b16 %v1181
        %v1543 = vunpack.c.h.b16 %v1181
        %v1544 = vunpack.c.l.b16 %v1182
        %v1545 = vunpack.c.h.b16 %v1182
        %v1546 = vunpack.c.l.b16 %v1183
        %v1547 = vunpack.c.h.b16 %v1183
        %v1548 = vunpack.c.l.b16 %v1184
        %v1549 = vunpack.c.h.b16 %v1184
        %v1550 = vunpack.c.l.b16 %v1185
        %v1551 = vunpack.c.h.b16 %v1185
        %v1552 = vunpack.c.l.b16 %v1186
        %v1553 = vunpack.c.h.b16 %v1186
        %v1554 = vunpack.c.l.b16 %v1187
        %v1555 = vunpack.c.h.b16 %v1187
        %v1556 = vunpack.c.l.b16 %v1188
        %v1557 = vunpack.c.h.b16 %v1188
        %v1558 = vunpack.c.l.b16 %v1189
        %v1559 = vunpack.c.h.b16 %v1189
        %v1560 = vunpack.c.l.b16 %v1190
        %v1561 = vunpack.c.h.b16 %v1190
        %v1562 = vunpack.c.l.b16 %v1191
        %v1563 = vunpack.c.h.b16 %v1191
        %v1564 = vunpack.c.l.b16 %v1192
        %v1565 = vunpack.c.h.b16 %v1192
        %v1566 = vunpack.c.l.b16 %v1193
        %v1567 = vunpack.c.h.b16 %v1193
        %v1568 = vunpack.c.l.b16 %v1194
        %v1569 = vunpack.c.h.b16 %v1194
        %v1570 = vunpack.c.l.b16 %v1195
        %v1571 = vunpack.c.h.b16 %v1195
        %v1572 = vunpack.c.l.b16 %v1196
        %v1573 = vunpack.c.h.b16 %v1196
        %v1574 = vunpack.c.l.b16 %v1197
        %v1575 = vunpack.c.h.b16 %v1197
        %v1576 = vunpack.c.l.b16 %v1198
        %v1577 = vunpack.c.h.b16 %v1198
        %v1578 = vunpack.c.l.b16 %v1199
        %v1579 = vunpack.c.h.b16 %v1199
        %v1580 = vunpack.c.l.b16 %v1200
        %v1581 = vunpack.c.h.b16 %v1200
        %v1582 = vunpack.c.l.b16 %v1201
        %v1583 = vunpack.c.h.b16 %v1201
        %v1584 = vunpack.c.l.b16 %v1202
        %v1585 = vunpack.c.h.b16 %v1202
        %v1586 = vunpack.c.l.b16 %v1203
        %v1587 = vunpack.c.h.b16 %v1203
        %v1588 = vunpack.c.l.b16 %v1204
        %v1589 = vunpack.c.h.b16 %v1204
        %v1590 = vunpack.c.l.b16 %v1205
        %v1591 = vunpack.c.h.b16 %v1205
        %v1592 = vunpack.c.l.b16 %v1206
        %v1593 = vunpack.c.h.b16 %v1206
        %v1594 = vunpack.c.l.b16 %v1207
        %v1595 = vunpack.c.h.b16 %v1207
        %v1596 = vunpack.c.l.b16 %v1208
        %v1597 = vunpack.c.h.b16 %v1208
        %v1598 = vunpack.c.l.b16 %v1209
        %v1599 = vunpack.c.h.b16 %v1209
        %v1600 = vunpack.c.l.b16 %v1210
        %v1601 = vunpack.c.h.b16 %v1210
        %v1602 = vunpack.c.l.b16 %v1211
        %v1603 = vunpack.c.h.b16 %v1211
        %v1604 = vunpack.c.l.b16 %v1212
        %v1605 = vunpack.c.h.b16 %v1212
        %v1606 = vunpack.c.l.b16 %v1213
        %v1607 = vunpack.c.h.b16 %v1213
        %v1608 = vunpack.c.l.b16 %v1214
        %v1609 = vunpack.c.h.b16 %v1214
        %v1610 = vunpack.c.l.b16 %v1215
        %v1611 = vunpack.c.h.b16 %v1215
        %v1612 = vunpack.c.l.b16 %v1216
        %v1613 = vunpack.c.h.b16 %v1216
        %v1614 = vunpack.c.l.b16 %v1217
        %v1615 = vunpack.c.h.b16 %v1217
        %v1616 = vunpack.c.l.b16 %v1218
        %v1617 = vunpack.c.h.b16 %v1218
        %v1618 = vunpack.c.l.b16 %v1219
        %v1619 = vunpack.c.h.b16 %v1219
        %v1620 = vunpack.c.l.b16 %v1220
        %v1621 = vunpack.c.h.b16 %v1220
        %v1622 = vunpack.c.l.b16 %v1221
        %v1623 = vunpack.c.h.b16 %v1221
        %v1624 = vunpack.c.l.b16 %v1222
        %v1625 = vunpack.c.h.b16 %v1222
        %v1626 = vunpack.c.l.b16 %v1223
        %v1627 = vunpack.c.h.b16 %v1223
        %v1628 = vunpack.c.l.b16 %v1224
        %v1629 = vunpack.c.h.b16 %v1224
        %v1630 = vunpack.c.l.b16 %v1225
        %v1631 = vunpack.c.h.b16 %v1225
        %v1632 = vunpack.c.l.b16 %v1226
        %v1633 = vunpack.c.h.b16 %v1226
        %v1634 = vunpack.c.l.b16 %v1227
        %v1635 = vunpack.c.h.b16 %v1227
        %v1636 = vunpack.c.l.b16 %v1228
        %v1637 = vunpack.c.h.b16 %v1228
        %v1638 = vunpack.c.l.b16 %v1229
        %v1639 = vunpack.c.h.b16 %v1229
        %v1640 = vunpack.c.l.b16 %v1230
        %v1641 = vunpack.c.h.b16 %v1230
        %v1642 = vunpack.c.l.b16 %v1231
        %v1643 = vunpack.c.h.b16 %v1231
        %v1644 = vunpack.c.l.b16 %v1232
        %v1645 = vunpack.c.h.b16 %v1232
        %v1646 = vunpack.c.l.b16 %v1233
        %v1647 = vunpack.c.h.b16 %v1233
        %v1648 = vunpack.c.l.b16 %v1234
        %v1649 = vunpack.c.h.b16 %v1234
        %v1650 = vunpack.c.l.b16 %v1235
        %v1651 = vunpack.c.h.b16 %v1235
        %v1652 = vunpack.c.l.b16 %v1236
        %v1653 = vunpack.c.h.b16 %v1236
        %v1654 = vunpack.c.l.b16 %v1237
        %v1655 = vunpack.c.h.b16 %v1237
        %v1656 = vunpack.c.l.b16 %v1238
        %v1657 = vunpack.c.h.b16 %v1238
        %v1658 = vunpack.c.l.b16 %v1239
        %v1659 = vunpack.c.h.b16 %v1239
        %v1660 = vunpack.c.l.b16 %v1240
        %v1661 = vunpack.c.h.b16 %v1240
        %v1662 = vunpack.c.l.b16 %v1241
        %v1663 = vunpack.c.h.b16 %v1241
        %v1664 = vunpack.c.l.b16 %v1242
        %v1665 = vunpack.c.h.b16 %v1242
        %v1666 = vunpack.c.l.b16 %v1243
        %v1667 = vunpack.c.h.b16 %v1243
        %v1668 = vunpack.c.l.b16 %v1244
        %v1669 = vunpack.c.h.b16 %v1244
        %v1670 = vunpack.c.l.b16 %v1245
        %v1671 = vunpack.c.h.b16 %v1245
        %v1672 = vpack.c.b16 %v1424, %v1416
        %v1673 = vpack.c.b16 %v1425, %v1417
        %v1674 = vpack.c.b16 %v1426, %v1418
        %v1675 = vpack.c.b16 %v1427, %v1419
        %v1676 = vpack.c.b16 %v1428, %v1420
        %v1677 = vpack.c.b16 %v1429, %v1421
        %v1678 = vpack.c.b16 %v1430, %v1422
        %v1679 = vpack.c.b16 %v1431, %v1423
        %v1680 = vpack.c.b16 %v1440, %v1432
        %v1681 = vpack.c.b16 %v1441, %v1433
        %v1682 = vpack.c.b16 %v1442, %v1434
        %v1683 = vpack.c.b16 %v1443, %v1435
        %v1684 = vpack.c.b16 %v1444, %v1436
        %v1685 = vpack.c.b16 %v1445, %v1437
        %v1686 = vpack.c.b16 %v1446, %v1438
        %v1687 = vpack.c.b16 %v1447, %v1439
        %v1688 = vpack.c.b16 %v1456, %v1448
        %v1689 = vpack.c.b16 %v1457, %v1449
        %v1690 = vpack.c.b16 %v1458, %v1450
        %v1691 = vpack.c.b16 %v1459, %v1451
        %v1692 = vpack.c.b16 %v1460, %v1452
        %v1693 = vpack.c.b16 %v1461, %v1453
        %v1694 = vpack.c.b16 %v1462, %v1454
        %v1695 = vpack.c.b16 %v1463, %v1455
        %v1696 = vpack.c.b16 %v1472, %v1464
        %v1697 = vpack.c.b16 %v1473, %v1465
        %v1698 = vpack.c.b16 %v1474, %v1466
        %v1699 = vpack.c.b16 %v1475, %v1467
        %v1700 = vpack.c.b16 %v1476, %v1468
        %v1701 = vpack.c.b16 %v1477, %v1469
        %v1702 = vpack.c.b16 %v1478, %v1470
        %v1703 = vpack.c.b16 %v1479, %v1471
        %v1704 = vpack.c.b16 %v1488, %v1480
        %v1705 = vpack.c.b16 %v1489, %v1481
        %v1706 = vpack.c.b16 %v1490, %v1482
        %v1707 = vpack.c.b16 %v1491, %v1483
        %v1708 = vpack.c.b16 %v1492, %v1484
        %v1709 = vpack.c.b16 %v1493, %v1485
        %v1710 = vpack.c.b16 %v1494, %v1486
        %v1711 = vpack.c.b16 %v1495, %v1487
        %v1712 = vpack.c.b16 %v1504, %v1496
        %v1713 = vpack.c.b16 %v1505, %v1497
        %v1714 = vpack.c.b16 %v1506, %v1498
        %v1715 = vpack.c.b16 %v1507, %v1499
        %v1716 = vpack.c.b16 %v1508, %v1500
        %v1717 = vpack.c.b16 %v1509, %v1501
        %v1718 = vpack.c.b16 %v1510, %v1502
        %v1719 = vpack.c.b16 %v1511, %v1503
        %v1720 = vpack.c.b16 %v1520, %v1512
        %v1721 = vpack.c.b16 %v1521, %v1513
        %v1722 = vpack.c.b16 %v1522, %v1514
        %v1723 = vpack.c.b16 %v1523, %v1515
        %v1724 = vpack.c.b16 %v1524, %v1516
        %v1725 = vpack.c.b16 %v1525, %v1517
        %v1726 = vpack.c.b16 %v1526, %v1518
        %v1727 = vpack.c.b16 %v1527, %v1519
        %v1728 = vpack.c.b16 %v1536, %v1528
        %v1729 = vpack.c.b16 %v1537, %v1529
        %v1730 = vpack.c.b16 %v1538, %v1530
        %v1731 = vpack.c.b16 %v1539, %v1531
        %v1732 = vpack.c.b16 %v1540, %v1532
        %v1733 = vpack.c.b16 %v1541, %v1533
        %v1734 = vpack.c.b16 %v1542, %v1534
        %v1735 = vpack.c.b16 %v1543, %v1535
        %v1736 = vpack.c.b16 %v1552, %v1544
        %v1737 = vpack.c.b16 %v1553, %v1545
        %v1738 = vpack.c.b16 %v1554, %v1546
        %v1739 = vpack.c.b16 %v1555, %v1547
        %v1740 = vpack.c.b16 %v1556, %v1548
        %v1741 = vpack.c.b16 %v1557, %v1549
        %v1742 = vpack.c.b16 %v1558, %v1550
        %v1743 = vpack.c.b16 %v1559, %v1551
        %v1744 = vpack.c.b16 %v1568, %v1560
        %v1745 = vpack.c.b16 %v1569, %v1561
        %v1746 = vpack.c.b16 %v1570, %v1562
        %v1747 = vpack.c.b16 %v1571, %v1563
        %v1748 = vpack.c.b16 %v1572, %v1564
        %v1749 = vpack.c.b16 %v1573, %v1565
        %v1750 = vpack.c.b16 %v1574, %v1566
        %v1751 = vpack.c.b16 %v1575, %v1567
        %v1752 = vpack.c.b16 %v1584, %v1576
        %v1753 = vpack.c.b16 %v1585, %v1577
        %v1754 = vpack.c.b16 %v1586, %v1578
        %v1755 = vpack.c.b16 %v1587, %v1579
        %v1756 = vpack.c.b16 %v1588, %v1580
        %v1757 = vpack.c.b16 %v1589, %v1581
        %v1758 = vpack.c.b16 %v1590, %v1582
        %v1759 = vpack.c.b16 %v1591, %v1583
        %v1760 = vpack.c.b16 %v1600, %v1592
        %v1761 = vpack.c.b16 %v1601, %v1593
        %v1762 = vpack.c.b16 %v1602, %v1594
        %v1763 = vpack.c.b16 %v1603, %v1595
        %v1764 = vpack.c.b16 %v1604, %v1596
        %v1765 = vpack.c.b16 %v1605, %v1597
        %v1766 = vpack.c.b16 %v1606, %v1598
        %v1767 = vpack.c.b16 %v1607, %v1599
        %v1768 = vpack.c.b16 %v1616, %v1608
        %v1769 = vpack.c.b16 %v1617, %v1609
        %v1770 = vpack.c.b16 %v1618, %v1610
        %v1771 = vpack.c.b16 %v1619, %v1611
        %v1772 = vpack.c.b16 %v1620, %v1612
        %v1773 = vpack.c.b16 %v1621, %v1613
        %v1774 = vpack.c.b16 %v1622, %v1614
        %v1775 = vpack.c.b16 %v1623, %v1615
        %v1776 = vpack.c.b16 %v1632, %v1624
        %v1777 = vpack.c.b16 %v1633, %v1625
        %v1778 = vpack.c.b16 %v1634, %v1626
        %v1779 = vpack.c.b16 %v1635, %v1627
        %v1780 = vpack.c.b16 %v1636, %v1628
        %v1781 = vpack.c.b16 %v1637, %v1629
        %v1782 = vpack.c.b16 %v1638, %v1630
        %v1783 = vpack.c.b16 %v1639, %v1631
        %v1784 = vpack.c.b16 %v1648, %v1640
        %v1785 = vpack.c.b16 %v1649, %v1641
        %v1786 = vpack.c.b16 %v1650, %v1642
        %v1787 = vpack.c.b16 %v1651, %v1643
        %v1788 = vpack.c.b16 %v1652, %v1644
        %v1789 = vpack.c.b16 %v1653, %v1645
        %v1790 = vpack.c.b16 %v1654, %v1646
        %v1791 = vpack.c.b16 %v1655, %v1647
        %v1792 = vpack.c.b16 %v1664, %v1656
        %v1793 = vpack.c.b16 %v1665, %v1657
        %v1794 = vpack.c.b16 %v1666, %v1658
        %v1795 = vpack.c.b16 %v1667, %v1659
        %v1796 = vpack.c.b16 %v1668, %v1660
        %v1797 = vpack.c.b16 %v1669, %v1661
        %v1798 = vpack.c.b16 %v1670, %v1662
        %v1799 = vpack.c.b16 %v1671, %v1663
        %1928 = vmatprep.subr.bf16.mxu0 %v1673
        %1929 = vmatpush1.bf16.msra.mxu0 %v1672
        %1930 = vmatprep.subr.bf16.mxu0 %v1681
        %1931 = vmatpush1.bf16.msra.mxu0 %v1680
        %1932 = vmatprep.subr.bf16.mxu0 %v1689
        %1933 = vmatpush1.bf16.msra.mxu0 %v1688
        %1934 = vmatprep.subr.bf16.mxu0 %v1697
        %1935 = vmatpush1.bf16.msra.mxu0 %v1696
        %1936 = vmatprep.subr.bf16.mxu0 %v1705
        %1937 = vmatpush1.bf16.msra.mxu0 %v1704
        %1938 = vmatprep.subr.bf16.mxu0 %v1713
        %1939 = vmatpush1.bf16.msra.mxu0 %v1712
        %1940 = vmatprep.subr.bf16.mxu0 %v1721
        %1941 = vmatpush1.bf16.msra.mxu0 %v1720
        %1942 = vmatprep.subr.bf16.mxu0 %v1729
        %1943 = vmatpush1.bf16.msra.mxu0 %v1728
        %1944 = vmatprep.subr.bf16.mxu0 %v1737
        %1945 = vmatpush1.bf16.msra.mxu0 %v1736
        %1946 = vmatprep.subr.bf16.mxu0 %v1745
        %1947 = vmatpush1.bf16.msra.mxu0 %v1744
        %1948 = vmatprep.subr.bf16.mxu0 %v1753
        %1949 = vmatpush1.bf16.msra.mxu0 %v1752
        %1950 = vmatprep.subr.bf16.mxu0 %v1761
        %1951 = vmatpush1.bf16.msra.mxu0 %v1760
        %1952 = vmatprep.subr.bf16.mxu0 %v1769
        %1953 = vmatpush1.bf16.msra.mxu0 %v1768
        %1954 = vmatprep.subr.bf16.mxu0 %v1777
        %1955 = vmatpush1.bf16.msra.mxu0 %v1776
        %1956 = vmatprep.subr.bf16.mxu0 %v1785
        %1957 = vmatpush1.bf16.msra.mxu0 %v1784
        %1958 = vmatprep.subr.bf16.mxu0 %v1793
        %1959 = vmatpush1.bf16.msra.mxu0 %v1792
        %1960 = vmatprep.mubr.bf16.mxu0 %v1087
        %1961 = vmatmul.mubr.bf16.gmra.mrb[0].mxu0 %v1086
        %v1962 = vpop.f32.mrb[0].mxu0
        %v1963 = vadd.f32 %v1251, %v1962
        %v1964 = vpop.f32.mrb[0].mxu0
        %v1965 = vadd.f32 %v1255, %v1964
        %v1966 = vpop.f32.mrb[0].mxu0
        %v1967 = vadd.f32 %v1251, %v1966
        %v1968 = vpop.f32.mrb[0].mxu0
        %v1969 = vadd.f32 %v1255, %v1968
        %1970 = vmatprep.mubr.bf16.mxu0 %v1089
        %1971 = vmatmul.mubr.bf16.gmra.mrb[0].mxu0 %v1088
        %v1972 = vpop.f32.mrb[0].mxu0
        %v1973 = vadd.f32 %v1251, %v1972
        %v1974 = vpop.f32.mrb[0].mxu0
        %v1975 = vadd.f32 %v1255, %v1974
        %v1976 = vpop.f32.mrb[0].mxu0
        %v1977 = vadd.f32 %v1251, %v1976
        %v1978 = vpop.f32.mrb[0].mxu0
        %v1979 = vadd.f32 %v1255, %v1978
        %1980 = vmatprep.mubr.bf16.mxu0 %v1091
        %1981 = vmatmul.mubr.bf16.gmra.mrb[0].mxu0 %v1090
        %v1982 = vpop.f32.mrb[0].mxu0
        %v1983 = vadd.f32 %v1251, %v1982
        %v1984 = vpop.f32.mrb[0].mxu0
        %v1985 = vadd.f32 %v1255, %v1984
        %v1986 = vpop.f32.mrb[0].mxu0
        %v1987 = vadd.f32 %v1251, %v1986
        %v1988 = vpop.f32.mrb[0].mxu0
        %v1989 = vadd.f32 %v1255, %v1988
        %1990 = vmatprep.mubr.bf16.mxu0 %v1093
        %1991 = vmatmul.mubr.bf16.gmra.mrb[0].mxu0 %v1092
        %v1992 = vpop.f32.mrb[0].mxu0
        %v1993 = vadd.f32 %v1251, %v1992
        %v1994 = vpop.f32.mrb[0].mxu0
        %v1995 = vadd.f32 %v1255, %v1994
        %v1996 = vpop.f32.mrb[0].mxu0
        %v1997 = vadd.f32 %v1251, %v1996
        %v1998 = vpop.f32.mrb[0].mxu0
        %v1999 = vadd.f32 %v1255, %v1998
        %2000 = vmatprep.mubr.bf16.mxu0 %v1095
        %2001 = vmatmul.mubr.bf16.gmra.mrb[0].mxu0 %v1094
        %v2002 = vpop.f32.mrb[0].mxu0
        %v2003 = vadd.f32 %v1251, %v2002
        %v2004 = vpop.f32.mrb[0].mxu0
        %v2005 = vadd.f32 %v1255, %v2004
        %v2006 = vpop.f32.mrb[0].mxu0
        %v2007 = vadd.f32 %v1251, %v2006
        %v2008 = vpop.f32.mrb[0].mxu0
        %v2009 = vadd.f32 %v1255, %v2008
        %2010 = vmatprep.mubr.bf16.mxu0 %v1097
        %2011 = vmatmul.mubr.bf16.gmra.mrb[0].mxu0 %v1096
        %v2012 = vpop.f32.mrb[0].mxu0
        %v2013 = vadd.f32 %v1251, %v2012
        %v2014 = vpop.f32.mrb[0].mxu0
        %v2015 = vadd.f32 %v1255, %v2014
        %v2016 = vpop.f32.mrb[0].mxu0
        %v2017 = vadd.f32 %v1251, %v2016
        %v2018 = vpop.f32.mrb[0].mxu0
        %v2019 = vadd.f32 %v1255, %v2018
        %2020 = vmatprep.mubr.bf16.mxu0 %v1099
        %2021 = vmatmul.mubr.bf16.gmra.mrb[0].mxu0 %v1098
        %v2022 = vpop.f32.mrb[0].mxu0
        %v2023 = vadd.f32 %v1251, %v2022
        %v2024 = vpop.f32.mrb[0].mxu0
        %v2025 = vadd.f32 %v1255, %v2024
        %v2026 = vpop.f32.mrb[0].mxu0
        %v2027 = vadd.f32 %v1251, %v2026
        %v2028 = vpop.f32.mrb[0].mxu0
        %v2029 = vadd.f32 %v1255, %v2028
        %2030 = vmatprep.mubr.bf16.mxu0 %v1101
        %2031 = vmatmul.mubr.bf16.gmra.mrb[0].mxu0 %v1100
        %v2032 = vpop.f32.mrb[0].mxu0
        %v2033 = vadd.f32 %v1251, %v2032
        %v2034 = vpop.f32.mrb[0].mxu0
        %v2035 = vadd.f32 %v1255, %v2034
        %v2036 = vpop.f32.mrb[0].mxu0
        %v2037 = vadd.f32 %v1251, %v2036
        %v2038 = vpop.f32.mrb[0].mxu0
        %v2039 = vadd.f32 %v1255, %v2038
        %2040 = vmatprep.mubr.bf16.mxu0 %v1103
        %2041 = vmatmul.mubr.bf16.gmra.mrb[0].mxu0 %v1102
        %v2042 = vpop.f32.mrb[0].mxu0
        %v2043 = vadd.f32 %v1251, %v2042
        %v2044 = vpop.f32.mrb[0].mxu0
        %v2045 = vadd.f32 %v1255, %v2044
        %v2046 = vpop.f32.mrb[0].mxu0
        %v2047 = vadd.f32 %v1251, %v2046
        %v2048 = vpop.f32.mrb[0].mxu0
        %v2049 = vadd.f32 %v1255, %v2048
        %2050 = vmatprep.mubr.bf16.mxu0 %v1105
        %2051 = vmatmul.mubr.bf16.gmra.mrb[0].mxu0 %v1104
        %v2052 = vpop.f32.mrb[0].mxu0
        %v2053 = vadd.f32 %v1251, %v2052
        %v2054 = vpop.f32.mrb[0].mxu0
        %v2055 = vadd.f32 %v1255, %v2054
        %v2056 = vpop.f32.mrb[0].mxu0
        %v2057 = vadd.f32 %v1251, %v2056
        %v2058 = vpop.f32.mrb[0].mxu0
        %v2059 = vadd.f32 %v1255, %v2058
        %2060 = vmatprep.mubr.bf16.mxu0 %v1107
        %2061 = vmatmul.mubr.bf16.gmra.mrb[0].mxu0 %v1106
        %v2062 = vpop.f32.mrb[0].mxu0
        %v2063 = vadd.f32 %v1251, %v2062
        %v2064 = vpop.f32.mrb[0].mxu0
        %v2065 = vadd.f32 %v1255, %v2064
        %v2066 = vpop.f32.mrb[0].mxu0
        %v2067 = vadd.f32 %v1251, %v2066
        %v2068 = vpop.f32.mrb[0].mxu0
        %v2069 = vadd.f32 %v1255, %v2068
        %2070 = vmatprep.mubr.bf16.mxu0 %v1109
        %2071 = vmatmul.mubr.bf16.gmra.mrb[0].mxu0 %v1108
        %v2072 = vpop.f32.mrb[0].mxu0
        %v2073 = vadd.f32 %v1251, %v2072
        %v2074 = vpop.f32.mrb[0].mxu0
        %v2075 = vadd.f32 %v1255, %v2074
        %v2076 = vpop.f32.mrb[0].mxu0
        %v2077 = vadd.f32 %v1251, %v2076
        %v2078 = vpop.f32.mrb[0].mxu0
        %v2079 = vadd.f32 %v1255, %v2078
        %2080 = vmatprep.mubr.bf16.mxu0 %v1111
        %2081 = vmatmul.mubr.bf16.gmra.mrb[0].mxu0 %v1110
        %v2082 = vpop.f32.mrb[0].mxu0
        %v2083 = vadd.f32 %v1251, %v2082
        %v2084 = vpop.f32.mrb[0].mxu0
        %v2085 = vadd.f32 %v1255, %v2084
        %v2086 = vpop.f32.mrb[0].mxu0
        %v2087 = vadd.f32 %v1251, %v2086
        %v2088 = vpop.f32.mrb[0].mxu0
        %v2089 = vadd.f32 %v1255, %v2088
        %2090 = vmatprep.mubr.bf16.mxu0 %v1113
        %2091 = vmatmul.mubr.bf16.gmra.mrb[0].mxu0 %v1112
        %v2092 = vpop.f32.mrb[0].mxu0
        %v2093 = vadd.f32 %v1251, %v2092
        %v2094 = vpop.f32.mrb[0].mxu0
        %v2095 = vadd.f32 %v1255, %v2094
        %v2096 = vpop.f32.mrb[0].mxu0
        %v2097 = vadd.f32 %v1251, %v2096
        %v2098 = vpop.f32.mrb[0].mxu0
        %v2099 = vadd.f32 %v1255, %v2098
        %2100 = vmatprep.mubr.bf16.mxu0 %v1115
        %2101 = vmatmul.mubr.bf16.gmra.mrb[0].mxu0 %v1114
        %v2102 = vpop.f32.mrb[0].mxu0
        %v2103 = vadd.f32 %v1251, %v2102
        %v2104 = vpop.f32.mrb[0].mxu0
        %v2105 = vadd.f32 %v1255, %v2104
        %v2106 = vpop.f32.mrb[0].mxu0
        %v2107 = vadd.f32 %v1251, %v2106
        %v2108 = vpop.f32.mrb[0].mxu0
        %v2109 = vadd.f32 %v1255, %v2108
        %2110 = vmatprep.mubr.bf16.mxu0 %v1117
        %2111 = vmatmul.mubr.bf16.gmra.mrb[0].mxu0 %v1116
        %v2112 = vpop.f32.mrb[0].mxu0
        %v2113 = vadd.f32 %v1251, %v2112
        %v2114 = vpop.f32.mrb[0].mxu0
        %v2115 = vadd.f32 %v1255, %v2114
        %v2116 = vpop.f32.mrb[0].mxu0
        %v2117 = vadd.f32 %v1251, %v2116
        %v2118 = vpop.f32.mrb[0].mxu0
        %v2119 = vadd.f32 %v1255, %v2118
        %2120 = vdwg.mxu0
        %2121 = vmatprep.subr.bf16.mxu0 %v1675
        %2122 = vmatpush1.bf16.msra.mxu0 %v1674
        %2123 = vmatprep.subr.bf16.mxu0 %v1683
        %2124 = vmatpush1.bf16.msra.mxu0 %v1682
        %2125 = vmatprep.subr.bf16.mxu0 %v1691
        %2126 = vmatpush1.bf16.msra.mxu0 %v1690
        %2127 = vmatprep.subr.bf16.mxu0 %v1699
        %2128 = vmatpush1.bf16.msra.mxu0 %v1698
        %2129 = vmatprep.subr.bf16.mxu0 %v1707
        %2130 = vmatpush1.bf16.msra.mxu0 %v1706
        %2131 = vmatprep.subr.bf16.mxu0 %v1715
        %2132 = vmatpush1.bf16.msra.mxu0 %v1714
        %2133 = vmatprep.subr.bf16.mxu0 %v1723
        %2134 = vmatpush1.bf16.msra.mxu0 %v1722
        %2135 = vmatprep.subr.bf16.mxu0 %v1731
        %2136 = vmatpush1.bf16.msra.mxu0 %v1730
        %2137 = vmatprep.subr.bf16.mxu0 %v1739
        %2138 = vmatpush1.bf16.msra.mxu0 %v1738
        %2139 = vmatprep.subr.bf16.mxu0 %v1747
        %2140 = vmatpush1.bf16.msra.mxu0 %v1746
        %2141 = vmatprep.subr.bf16.mxu0 %v1755
        %2142 = vmatpush1.bf16.msra.mxu0 %v1754
        %2143 = vmatprep.subr.bf16.mxu0 %v1763
        %2144 = vmatpush1.bf16.msra.mxu0 %v1762
        %2145 = vmatprep.subr.bf16.mxu0 %v1771
        %2146 = vmatpush1.bf16.msra.mxu0 %v1770
        %2147 = vmatprep.subr.bf16.mxu0 %v1779
        %2148 = vmatpush1.bf16.msra.mxu0 %v1778
        %2149 = vmatprep.subr.bf16.mxu0 %v1787
        %2150 = vmatpush1.bf16.msra.mxu0 %v1786
        %2151 = vmatprep.subr.bf16.mxu0 %v1795
        %2152 = vmatpush1.bf16.msra.mxu0 %v1794
        %2153 = vmatprep.mubr.bf16.mxu0 %v1087
        %2154 = vmatmul.mubr.bf16.gmra.mrb[0].mxu0 %v1086
        %v2155 = vpop.f32.mrb[0].mxu0
        %v2156 = vadd.f32 %v1259, %v2155
        %v2157 = vpop.f32.mrb[0].mxu0
        %v2158 = vadd.f32 %v1263, %v2157
        %v2159 = vpop.f32.mrb[0].mxu0
        %v2160 = vadd.f32 %v1259, %v2159
        %v2161 = vpop.f32.mrb[0].mxu0
        %v2162 = vadd.f32 %v1263, %v2161
        %2163 = vmatprep.mubr.bf16.mxu0 %v1089
        %2164 = vmatmul.mubr.bf16.gmra.mrb[0].mxu0 %v1088
        %v2165 = vpop.f32.mrb[0].mxu0
        %v2166 = vadd.f32 %v1259, %v2165
        %v2167 = vpop.f32.mrb[0].mxu0
        %v2168 = vadd.f32 %v1263, %v2167
        %v2169 = vpop.f32.mrb[0].mxu0
        %v2170 = vadd.f32 %v1259, %v2169
        %v2171 = vpop.f32.mrb[0].mxu0
        %v2172 = vadd.f32 %v1263, %v2171
        %2173 = vmatprep.mubr.bf16.mxu0 %v1091
        %2174 = vmatmul.mubr.bf16.gmra.mrb[0].mxu0 %v1090
        %v2175 = vpop.f32.mrb[0].mxu0
        %v2176 = vadd.f32 %v1259, %v2175
        %v2177 = vpop.f32.mrb[0].mxu0
        %v2178 = vadd.f32 %v1263, %v2177
        %v2179 = vpop.f32.mrb[0].mxu0
        %v2180 = vadd.f32 %v1259, %v2179
        %v2181 = vpop.f32.mrb[0].mxu0
        %v2182 = vadd.f32 %v1263, %v2181
        %2183 = vmatprep.mubr.bf16.mxu0 %v1093
        %2184 = vmatmul.mubr.bf16.gmra.mrb[0].mxu0 %v1092
        %v2185 = vpop.f32.mrb[0].mxu0
        %v2186 = vadd.f32 %v1259, %v2185
        %v2187 = vpop.f32.mrb[0].mxu0
        %v2188 = vadd.f32 %v1263, %v2187
        %v2189 = vpop.f32.mrb[0].mxu0
        %v2190 = vadd.f32 %v1259, %v2189
        %v2191 = vpop.f32.mrb[0].mxu0
        %v2192 = vadd.f32 %v1263, %v2191
        %2193 = vmatprep.mubr.bf16.mxu0 %v1095
        %2194 = vmatmul.mubr.bf16.gmra.mrb[0].mxu0 %v1094
        %v2195 = vpop.f32.mrb[0].mxu0
        %v2196 = vadd.f32 %v1259, %v2195
        %v2197 = vpop.f32.mrb[0].mxu0
        %v2198 = vadd.f32 %v1263, %v2197
        %v2199 = vpop.f32.mrb[0].mxu0
        %v2200 = vadd.f32 %v1259, %v2199
        %v2201 = vpop.f32.mrb[0].mxu0
        %v2202 = vadd.f32 %v1263, %v2201
        %2203 = vmatprep.mubr.bf16.mxu0 %v1097
        %2204 = vmatmul.mubr.bf16.gmra.mrb[0].mxu0 %v1096
        %v2205 = vpop.f32.mrb[0].mxu0
        %v2206 = vadd.f32 %v1259, %v2205
        %v2207 = vpop.f32.mrb[0].mxu0
        %v2208 = vadd.f32 %v1263, %v2207
        %v2209 = vpop.f32.mrb[0].mxu0
        %v2210 = vadd.f32 %v1259, %v2209
        %v2211 = vpop.f32.mrb[0].mxu0
        %v2212 = vadd.f32 %v1263, %v2211
        %2213 = vmatprep.mubr.bf16.mxu0 %v1099
        %2214 = vmatmul.mubr.bf16.gmra.mrb[0].mxu0 %v1098
        %v2215 = vpop.f32.mrb[0].mxu0
        %v2216 = vadd.f32 %v1259, %v2215
        %v2217 = vpop.f32.mrb[0].mxu0
        %v2218 = vadd.f32 %v1263, %v2217
        %v2219 = vpop.f32.mrb[0].mxu0
        %v2220 = vadd.f32 %v1259, %v2219
        %v2221 = vpop.f32.mrb[0].mxu0
        %v2222 = vadd.f32 %v1263, %v2221
        %2223 = vmatprep.mubr.bf16.mxu0 %v1101
        %2224 = vmatmul.mubr.bf16.gmra.mrb[0].mxu0 %v1100
        %v2225 = vpop.f32.mrb[0].mxu0
        %v2226 = vadd.f32 %v1259, %v2225
        %v2227 = vpop.f32.mrb[0].mxu0
        %v2228 = vadd.f32 %v1263, %v2227
        %v2229 = vpop.f32.mrb[0].mxu0
        %v2230 = vadd.f32 %v1259, %v2229
        %v2231 = vpop.f32.mrb[0].mxu0
        %v2232 = vadd.f32 %v1263, %v2231
        %2233 = vmatprep.mubr.bf16.mxu0 %v1103
        %2234 = vmatmul.mubr.bf16.gmra.mrb[0].mxu0 %v1102
        %v2235 = vpop.f32.mrb[0].mxu0
        %v2236 = vadd.f32 %v1259, %v2235
        %v2237 = vpop.f32.mrb[0].mxu0
        %v2238 = vadd.f32 %v1263, %v2237
        %v2239 = vpop.f32.mrb[0].mxu0
        %v2240 = vadd.f32 %v1259, %v2239
        %v2241 = vpop.f32.mrb[0].mxu0
        %v2242 = vadd.f32 %v1263, %v2241
        %2243 = vmatprep.mubr.bf16.mxu0 %v1105
        %2244 = vmatmul.mubr.bf16.gmra.mrb[0].mxu0 %v1104
        %v2245 = vpop.f32.mrb[0].mxu0
        %v2246 = vadd.f32 %v1259, %v2245
        %v2247 = vpop.f32.mrb[0].mxu0
        %v2248 = vadd.f32 %v1263, %v2247
        %v2249 = vpop.f32.mrb[0].mxu0
        %v2250 = vadd.f32 %v1259, %v2249
        %v2251 = vpop.f32.mrb[0].mxu0
        %v2252 = vadd.f32 %v1263, %v2251
        %2253 = vmatprep.mubr.bf16.mxu0 %v1107
        %2254 = vmatmul.mubr.bf16.gmra.mrb[0].mxu0 %v1106
        %v2255 = vpop.f32.mrb[0].mxu0
        %v2256 = vadd.f32 %v1259, %v2255
        %v2257 = vpop.f32.mrb[0].mxu0
        %v2258 = vadd.f32 %v1263, %v2257
        %v2259 = vpop.f32.mrb[0].mxu0
        %v2260 = vadd.f32 %v1259, %v2259
        %v2261 = vpop.f32.mrb[0].mxu0
        %v2262 = vadd.f32 %v1263, %v2261
        %2263 = vmatprep.mubr.bf16.mxu0 %v1109
        %2264 = vmatmul.mubr.bf16.gmra.mrb[0].mxu0 %v1108
        %v2265 = vpop.f32.mrb[0].mxu0
        %v2266 = vadd.f32 %v1259, %v2265
        %v2267 = vpop.f32.mrb[0].mxu0
        %v2268 = vadd.f32 %v1263, %v2267
        %v2269 = vpop.f32.mrb[0].mxu0
        %v2270 = vadd.f32 %v1259, %v2269
        %v2271 = vpop.f32.mrb[0].mxu0
        %v2272 = vadd.f32 %v1263, %v2271
        %2273 = vmatprep.mubr.bf16.mxu0 %v1111
        %2274 = vmatmul.mubr.bf16.gmra.mrb[0].mxu0 %v1110
        %v2275 = vpop.f32.mrb[0].mxu0
        %v2276 = vadd.f32 %v1259, %v2275
        %v2277 = vpop.f32.mrb[0].mxu0
        %v2278 = vadd.f32 %v1263, %v2277
        %v2279 = vpop.f32.mrb[0].mxu0
        %v2280 = vadd.f32 %v1259, %v2279
        %v2281 = vpop.f32.mrb[0].mxu0
        %v2282 = vadd.f32 %v1263, %v2281
        %2283 = vmatprep.mubr.bf16.mxu0 %v1113
        %2284 = vmatmul.mubr.bf16.gmra.mrb[0].mxu0 %v1112
        %v2285 = vpop.f32.mrb[0].mxu0
        %v2286 = vadd.f32 %v1259, %v2285
        %v2287 = vpop.f32.mrb[0].mxu0
        %v2288 = vadd.f32 %v1263, %v2287
        %v2289 = vpop.f32.mrb[0].mxu0
        %v2290 = vadd.f32 %v1259, %v2289
        %v2291 = vpop.f32.mrb[0].mxu0
        %v2292 = vadd.f32 %v1263, %v2291
        %2293 = vmatprep.mubr.bf16.mxu0 %v1115
        %2294 = vmatmul.mubr.bf16.gmra.mrb[0].mxu0 %v1114
        %v2295 = vpop.f32.mrb[0].mxu0
        %v2296 = vadd.f32 %v1259, %v2295
        %v2297 = vpop.f32.mrb[0].mxu0
        %v2298 = vadd.f32 %v1263, %v2297
        %v2299 = vpop.f32.mrb[0].mxu0
        %v2300 = vadd.f32 %v1259, %v2299
        %v2301 = vpop.f32.mrb[0].mxu0
        %v2302 = vadd.f32 %v1263, %v2301
        %2303 = vmatprep.mubr.bf16.mxu0 %v1117
        %2304 = vmatmul.mubr.bf16.gmra.mrb[0].mxu0 %v1116
        %v2305 = vpop.f32.mrb[0].mxu0
        %v2306 = vadd.f32 %v1259, %v2305
        %v2307 = vpop.f32.mrb[0].mxu0
        %v2308 = vadd.f32 %v1263, %v2307
        %v2309 = vpop.f32.mrb[0].mxu0
        %v2310 = vadd.f32 %v1259, %v2309
        %v2311 = vpop.f32.mrb[0].mxu0
        %v2312 = vadd.f32 %v1263, %v2311
        %2313 = vdwg.mxu0
        %2314 = vmatprep.subr.bf16.mxu0 %v1677
        %2315 = vmatpush1.bf16.msra.mxu0 %v1676
        %2316 = vmatprep.subr.bf16.mxu0 %v1685
        %2317 = vmatpush1.bf16.msra.mxu0 %v1684
        %2318 = vmatprep.subr.bf16.mxu0 %v1693
        %2319 = vmatpush1.bf16.msra.mxu0 %v1692
        %2320 = vmatprep.subr.bf16.mxu0 %v1701
        %2321 = vmatpush1.bf16.msra.mxu0 %v1700
        %2322 = vmatprep.subr.bf16.mxu0 %v1709
        %2323 = vmatpush1.bf16.msra.mxu0 %v1708
        %2324 = vmatprep.subr.bf16.mxu0 %v1717
        %2325 = vmatpush1.bf16.msra.mxu0 %v1716
        %2326 = vmatprep.subr.bf16.mxu0 %v1725
        %2327 = vmatpush1.bf16.msra.mxu0 %v1724
        %2328 = vmatprep.subr.bf16.mxu0 %v1733
        %2329 = vmatpush1.bf16.msra.mxu0 %v1732
        %2330 = vmatprep.subr.bf16.mxu0 %v1741
        %2331 = vmatpush1.bf16.msra.mxu0 %v1740
        %2332 = vmatprep.subr.bf16.mxu0 %v1749
        %2333 = vmatpush1.bf16.msra.mxu0 %v1748
        %2334 = vmatprep.subr.bf16.mxu0 %v1757
        %2335 = vmatpush1.bf16.msra.mxu0 %v1756
        %2336 = vmatprep.subr.bf16.mxu0 %v1765
        %2337 = vmatpush1.bf16.msra.mxu0 %v1764
        %2338 = vmatprep.subr.bf16.mxu0 %v1773
        %2339 = vmatpush1.bf16.msra.mxu0 %v1772
        %2340 = vmatprep.subr.bf16.mxu0 %v1781
        %2341 = vmatpush1.bf16.msra.mxu0 %v1780
        %2342 = vmatprep.subr.bf16.mxu0 %v1789
        %2343 = vmatpush1.bf16.msra.mxu0 %v1788
        %2344 = vmatprep.subr.bf16.mxu0 %v1797
        %2345 = vmatpush1.bf16.msra.mxu0 %v1796
        %2346 = vmatprep.mubr.bf16.mxu0 %v1087
        %2347 = vmatmul.mubr.bf16.gmra.mrb[0].mxu0 %v1086
        %v2348 = vpop.f32.mrb[0].mxu0
        %v2349 = vadd.f32 %v1267, %v2348
        %v2350 = vpop.f32.mrb[0].mxu0
        %v2351 = vadd.f32 %v1271, %v2350
        %v2352 = vpop.f32.mrb[0].mxu0
        %v2353 = vadd.f32 %v1267, %v2352
        %v2354 = vpop.f32.mrb[0].mxu0
        %v2355 = vadd.f32 %v1271, %v2354
        %2356 = vmatprep.mubr.bf16.mxu0 %v1089
        %2357 = vmatmul.mubr.bf16.gmra.mrb[0].mxu0 %v1088
        %v2358 = vpop.f32.mrb[0].mxu0
        %v2359 = vadd.f32 %v1267, %v2358
        %v2360 = vpop.f32.mrb[0].mxu0
        %v2361 = vadd.f32 %v1271, %v2360
        %v2362 = vpop.f32.mrb[0].mxu0
        %v2363 = vadd.f32 %v1267, %v2362
        %v2364 = vpop.f32.mrb[0].mxu0
        %v2365 = vadd.f32 %v1271, %v2364
        %2366 = vmatprep.mubr.bf16.mxu0 %v1091
        %2367 = vmatmul.mubr.bf16.gmra.mrb[0].mxu0 %v1090
        %v2368 = vpop.f32.mrb[0].mxu0
        %v2369 = vadd.f32 %v1267, %v2368
        %v2370 = vpop.f32.mrb[0].mxu0
        %v2371 = vadd.f32 %v1271, %v2370
        %v2372 = vpop.f32.mrb[0].mxu0
        %v2373 = vadd.f32 %v1267, %v2372
        %v2374 = vpop.f32.mrb[0].mxu0
        %v2375 = vadd.f32 %v1271, %v2374
        %2376 = vmatprep.mubr.bf16.mxu0 %v1093
        %2377 = vmatmul.mubr.bf16.gmra.mrb[0].mxu0 %v1092
        %v2378 = vpop.f32.mrb[0].mxu0
        %v2379 = vadd.f32 %v1267, %v2378
        %v2380 = vpop.f32.mrb[0].mxu0
        %v2381 = vadd.f32 %v1271, %v2380
        %v2382 = vpop.f32.mrb[0].mxu0
        %v2383 = vadd.f32 %v1267, %v2382
        %v2384 = vpop.f32.mrb[0].mxu0
        %v2385 = vadd.f32 %v1271, %v2384
        %2386 = vmatprep.mubr.bf16.mxu0 %v1095
        %2387 = vmatmul.mubr.bf16.gmra.mrb[0].mxu0 %v1094
        %v2388 = vpop.f32.mrb[0].mxu0
        %v2389 = vadd.f32 %v1267, %v2388
        %v2390 = vpop.f32.mrb[0].mxu0
        %v2391 = vadd.f32 %v1271, %v2390
        %v2392 = vpop.f32.mrb[0].mxu0
        %v2393 = vadd.f32 %v1267, %v2392
        %v2394 = vpop.f32.mrb[0].mxu0
        %v2395 = vadd.f32 %v1271, %v2394
        %2396 = vmatprep.mubr.bf16.mxu0 %v1097
        %2397 = vmatmul.mubr.bf16.gmra.mrb[0].mxu0 %v1096
        %v2398 = vpop.f32.mrb[0].mxu0
        %v2399 = vadd.f32 %v1267, %v2398
        %v2400 = vpop.f32.mrb[0].mxu0
        %v2401 = vadd.f32 %v1271, %v2400
        %v2402 = vpop.f32.mrb[0].mxu0
        %v2403 = vadd.f32 %v1267, %v2402
        %v2404 = vpop.f32.mrb[0].mxu0
        %v2405 = vadd.f32 %v1271, %v2404
        %2406 = vmatprep.mubr.bf16.mxu0 %v1099
        %2407 = vmatmul.mubr.bf16.gmra.mrb[0].mxu0 %v1098
        %v2408 = vpop.f32.mrb[0].mxu0
        %v2409 = vadd.f32 %v1267, %v2408
        %v2410 = vpop.f32.mrb[0].mxu0
        %v2411 = vadd.f32 %v1271, %v2410
        %v2412 = vpop.f32.mrb[0].mxu0
        %v2413 = vadd.f32 %v1267, %v2412
        %v2414 = vpop.f32.mrb[0].mxu0
        %v2415 = vadd.f32 %v1271, %v2414
        %2416 = vmatprep.mubr.bf16.mxu0 %v1101
        %2417 = vmatmul.mubr.bf16.gmra.mrb[0].mxu0 %v1100
        %v2418 = vpop.f32.mrb[0].mxu0
        %v2419 = vadd.f32 %v1267, %v2418
        %v2420 = vpop.f32.mrb[0].mxu0
        %v2421 = vadd.f32 %v1271, %v2420
        %v2422 = vpop.f32.mrb[0].mxu0
        %v2423 = vadd.f32 %v1267, %v2422
        %v2424 = vpop.f32.mrb[0].mxu0
        %v2425 = vadd.f32 %v1271, %v2424
        %2426 = vmatprep.mubr.bf16.mxu0 %v1103
        %2427 = vmatmul.mubr.bf16.gmra.mrb[0].mxu0 %v1102
        %v2428 = vpop.f32.mrb[0].mxu0
        %v2429 = vadd.f32 %v1267, %v2428
        %v2430 = vpop.f32.mrb[0].mxu0
        %v2431 = vadd.f32 %v1271, %v2430
        %v2432 = vpop.f32.mrb[0].mxu0
        %v2433 = vadd.f32 %v1267, %v2432
        %v2434 = vpop.f32.mrb[0].mxu0
        %v2435 = vadd.f32 %v1271, %v2434
        %2436 = vmatprep.mubr.bf16.mxu0 %v1105
        %2437 = vmatmul.mubr.bf16.gmra.mrb[0].mxu0 %v1104
        %v2438 = vpop.f32.mrb[0].mxu0
        %v2439 = vadd.f32 %v1267, %v2438
        %v2440 = vpop.f32.mrb[0].mxu0
        %v2441 = vadd.f32 %v1271, %v2440
        %v2442 = vpop.f32.mrb[0].mxu0
        %v2443 = vadd.f32 %v1267, %v2442
        %v2444 = vpop.f32.mrb[0].mxu0
        %v2445 = vadd.f32 %v1271, %v2444
        %2446 = vmatprep.mubr.bf16.mxu0 %v1107
        %2447 = vmatmul.mubr.bf16.gmra.mrb[0].mxu0 %v1106
        %v2448 = vpop.f32.mrb[0].mxu0
        %v2449 = vadd.f32 %v1267, %v2448
        %v2450 = vpop.f32.mrb[0].mxu0
        %v2451 = vadd.f32 %v1271, %v2450
        %v2452 = vpop.f32.mrb[0].mxu0
        %v2453 = vadd.f32 %v1267, %v2452
        %v2454 = vpop.f32.mrb[0].mxu0
        %v2455 = vadd.f32 %v1271, %v2454
        %2456 = vmatprep.mubr.bf16.mxu0 %v1109
        %2457 = vmatmul.mubr.bf16.gmra.mrb[0].mxu0 %v1108
        %v2458 = vpop.f32.mrb[0].mxu0
        %v2459 = vadd.f32 %v1267, %v2458
        %v2460 = vpop.f32.mrb[0].mxu0
        %v2461 = vadd.f32 %v1271, %v2460
        %v2462 = vpop.f32.mrb[0].mxu0
        %v2463 = vadd.f32 %v1267, %v2462
        %v2464 = vpop.f32.mrb[0].mxu0
        %v2465 = vadd.f32 %v1271, %v2464
        %2466 = vmatprep.mubr.bf16.mxu0 %v1111
        %2467 = vmatmul.mubr.bf16.gmra.mrb[0].mxu0 %v1110
        %v2468 = vpop.f32.mrb[0].mxu0
        %v2469 = vadd.f32 %v1267, %v2468
        %v2470 = vpop.f32.mrb[0].mxu0
        %v2471 = vadd.f32 %v1271, %v2470
        %v2472 = vpop.f32.mrb[0].mxu0
        %v2473 = vadd.f32 %v1267, %v2472
        %v2474 = vpop.f32.mrb[0].mxu0
        %v2475 = vadd.f32 %v1271, %v2474
        %2476 = vmatprep.mubr.bf16.mxu0 %v1113
        %2477 = vmatmul.mubr.bf16.gmra.mrb[0].mxu0 %v1112
        %v2478 = vpop.f32.mrb[0].mxu0
        %v2479 = vadd.f32 %v1267, %v2478
        %v2480 = vpop.f32.mrb[0].mxu0
        %v2481 = vadd.f32 %v1271, %v2480
        %v2482 = vpop.f32.mrb[0].mxu0
        %v2483 = vadd.f32 %v1267, %v2482
        %v2484 = vpop.f32.mrb[0].mxu0
        %v2485 = vadd.f32 %v1271, %v2484
        %2486 = vmatprep.mubr.bf16.mxu0 %v1115
        %2487 = vmatmul.mubr.bf16.gmra.mrb[0].mxu0 %v1114
        %v2488 = vpop.f32.mrb[0].mxu0
        %v2489 = vadd.f32 %v1267, %v2488
        %v2490 = vpop.f32.mrb[0].mxu0
        %v2491 = vadd.f32 %v1271, %v2490
        %v2492 = vpop.f32.mrb[0].mxu0
        %v2493 = vadd.f32 %v1267, %v2492
        %v2494 = vpop.f32.mrb[0].mxu0
        %v2495 = vadd.f32 %v1271, %v2494
        %2496 = vmatprep.mubr.bf16.mxu0 %v1117
        %2497 = vmatmul.mubr.bf16.gmra.mrb[0].mxu0 %v1116
        %v2498 = vpop.f32.mrb[0].mxu0
        %v2499 = vadd.f32 %v1267, %v2498
        %v2500 = vpop.f32.mrb[0].mxu0
        %v2501 = vadd.f32 %v1271, %v2500
        %v2502 = vpop.f32.mrb[0].mxu0
        %v2503 = vadd.f32 %v1267, %v2502
        %v2504 = vpop.f32.mrb[0].mxu0
        %v2505 = vadd.f32 %v1271, %v2504
        %2506 = vdwg.mxu0
        %2507 = vmatprep.subr.bf16.mxu0 %v1679
        %2508 = vmatpush1.bf16.msra.mxu0 %v1678
        %2509 = vmatprep.subr.bf16.mxu0 %v1687
        %2510 = vmatpush1.bf16.msra.mxu0 %v1686
        %2511 = vmatprep.subr.bf16.mxu0 %v1695
        %2512 = vmatpush1.bf16.msra.mxu0 %v1694
        %2513 = vmatprep.subr.bf16.mxu0 %v1703
        %2514 = vmatpush1.bf16.msra.mxu0 %v1702
        %2515 = vmatprep.subr.bf16.mxu0 %v1711
        %2516 = vmatpush1.bf16.msra.mxu0 %v1710
        %2517 = vmatprep.subr.bf16.mxu0 %v1719
        %2518 = vmatpush1.bf16.msra.mxu0 %v1718
        %2519 = vmatprep.subr.bf16.mxu0 %v1727
        %2520 = vmatpush1.bf16.msra.mxu0 %v1726
        %2521 = vmatprep.subr.bf16.mxu0 %v1735
        %2522 = vmatpush1.bf16.msra.mxu0 %v1734
        %2523 = vmatprep.subr.bf16.mxu0 %v1743
        %2524 = vmatpush1.bf16.msra.mxu0 %v1742
        %2525 = vmatprep.subr.bf16.mxu0 %v1751
        %2526 = vmatpush1.bf16.msra.mxu0 %v1750
        %2527 = vmatprep.subr.bf16.mxu0 %v1759
        %2528 = vmatpush1.bf16.msra.mxu0 %v1758
        %2529 = vmatprep.subr.bf16.mxu0 %v1767
        %2530 = vmatpush1.bf16.msra.mxu0 %v1766
        %2531 = vmatprep.subr.bf16.mxu0 %v1775
        %2532 = vmatpush1.bf16.msra.mxu0 %v1774
        %2533 = vmatprep.subr.bf16.mxu0 %v1783
        %2534 = vmatpush1.bf16.msra.mxu0 %v1782
        %2535 = vmatprep.subr.bf16.mxu0 %v1791
        %2536 = vmatpush1.bf16.msra.mxu0 %v1790
        %2537 = vmatprep.subr.bf16.mxu0 %v1799
        %2538 = vmatpush1.bf16.msra.mxu0 %v1798
        %2539 = vmatprep.mubr.bf16.mxu0 %v1087
        %2540 = vmatmul.mubr.bf16.gmra.mrb[0].mxu0 %v1086
        %v2541 = vpop.f32.mrb[0].mxu0
        %v2542 = vadd.f32 %v1275, %v2541
        %v2543 = vpop.f32.mrb[0].mxu0
        %v2544 = vadd.f32 %v1279, %v2543
        %v2545 = vpop.f32.mrb[0].mxu0
        %v2546 = vadd.f32 %v1275, %v2545
        %v2547 = vpop.f32.mrb[0].mxu0
        %v2548 = vadd.f32 %v1279, %v2547
        %2549 = vmatprep.mubr.bf16.mxu0 %v1089
        %2550 = vmatmul.mubr.bf16.gmra.mrb[0].mxu0 %v1088
        %v2551 = vpop.f32.mrb[0].mxu0
        %v2552 = vadd.f32 %v1275, %v2551
        %v2553 = vpop.f32.mrb[0].mxu0
        %v2554 = vadd.f32 %v1279, %v2553
        %v2555 = vpop.f32.mrb[0].mxu0
        %v2556 = vadd.f32 %v1275, %v2555
        %v2557 = vpop.f32.mrb[0].mxu0
        %v2558 = vadd.f32 %v1279, %v2557
        %2559 = vmatprep.mubr.bf16.mxu0 %v1091
        %2560 = vmatmul.mubr.bf16.gmra.mrb[0].mxu0 %v1090
        %v2561 = vpop.f32.mrb[0].mxu0
        %v2562 = vadd.f32 %v1275, %v2561
        %v2563 = vpop.f32.mrb[0].mxu0
        %v2564 = vadd.f32 %v1279, %v2563
        %v2565 = vpop.f32.mrb[0].mxu0
        %v2566 = vadd.f32 %v1275, %v2565
        %v2567 = vpop.f32.mrb[0].mxu0
        %v2568 = vadd.f32 %v1279, %v2567
        %2569 = vmatprep.mubr.bf16.mxu0 %v1093
        %2570 = vmatmul.mubr.bf16.gmra.mrb[0].mxu0 %v1092
        %v2571 = vpop.f32.mrb[0].mxu0
        %v2572 = vadd.f32 %v1275, %v2571
        %v2573 = vpop.f32.mrb[0].mxu0
        %v2574 = vadd.f32 %v1279, %v2573
        %v2575 = vpop.f32.mrb[0].mxu0
        %v2576 = vadd.f32 %v1275, %v2575
        %v2577 = vpop.f32.mrb[0].mxu0
        %v2578 = vadd.f32 %v1279, %v2577
        %2579 = vmatprep.mubr.bf16.mxu0 %v1095
        %2580 = vmatmul.mubr.bf16.gmra.mrb[0].mxu0 %v1094
        %v2581 = vpop.f32.mrb[0].mxu0
        %v2582 = vadd.f32 %v1275, %v2581
        %v2583 = vpop.f32.mrb[0].mxu0
        %v2584 = vadd.f32 %v1279, %v2583
        %v2585 = vpop.f32.mrb[0].mxu0
        %v2586 = vadd.f32 %v1275, %v2585
        %v2587 = vpop.f32.mrb[0].mxu0
        %v2588 = vadd.f32 %v1279, %v2587
        %2589 = vmatprep.mubr.bf16.mxu0 %v1097
        %2590 = vmatmul.mubr.bf16.gmra.mrb[0].mxu0 %v1096
        %v2591 = vpop.f32.mrb[0].mxu0
        %v2592 = vadd.f32 %v1275, %v2591
        %v2593 = vpop.f32.mrb[0].mxu0
        %v2594 = vadd.f32 %v1279, %v2593
        %v2595 = vpop.f32.mrb[0].mxu0
        %v2596 = vadd.f32 %v1275, %v2595
        %v2597 = vpop.f32.mrb[0].mxu0
        %v2598 = vadd.f32 %v1279, %v2597
        %2599 = vmatprep.mubr.bf16.mxu0 %v1099
        %2600 = vmatmul.mubr.bf16.gmra.mrb[0].mxu0 %v1098
        %v2601 = vpop.f32.mrb[0].mxu0
        %v2602 = vadd.f32 %v1275, %v2601
        %v2603 = vpop.f32.mrb[0].mxu0
        %v2604 = vadd.f32 %v1279, %v2603
        %v2605 = vpop.f32.mrb[0].mxu0
        %v2606 = vadd.f32 %v1275, %v2605
        %v2607 = vpop.f32.mrb[0].mxu0
        %v2608 = vadd.f32 %v1279, %v2607
        %2609 = vmatprep.mubr.bf16.mxu0 %v1101
        %2610 = vmatmul.mubr.bf16.gmra.mrb[0].mxu0 %v1100
        %v2611 = vpop.f32.mrb[0].mxu0
        %v2612 = vadd.f32 %v1275, %v2611
        %v2613 = vpop.f32.mrb[0].mxu0
        %v2614 = vadd.f32 %v1279, %v2613
        %v2615 = vpop.f32.mrb[0].mxu0
        %v2616 = vadd.f32 %v1275, %v2615
        %v2617 = vpop.f32.mrb[0].mxu0
        %v2618 = vadd.f32 %v1279, %v2617
        %2619 = vmatprep.mubr.bf16.mxu0 %v1103
        %2620 = vmatmul.mubr.bf16.gmra.mrb[0].mxu0 %v1102
        %v2621 = vpop.f32.mrb[0].mxu0
        %v2622 = vadd.f32 %v1275, %v2621
        %v2623 = vpop.f32.mrb[0].mxu0
        %v2624 = vadd.f32 %v1279, %v2623
        %v2625 = vpop.f32.mrb[0].mxu0
        %v2626 = vadd.f32 %v1275, %v2625
        %v2627 = vpop.f32.mrb[0].mxu0
        %v2628 = vadd.f32 %v1279, %v2627
        %2629 = vmatprep.mubr.bf16.mxu0 %v1105
        %2630 = vmatmul.mubr.bf16.gmra.mrb[0].mxu0 %v1104
        %v2631 = vpop.f32.mrb[0].mxu0
        %v2632 = vadd.f32 %v1275, %v2631
        %v2633 = vpop.f32.mrb[0].mxu0
        %v2634 = vadd.f32 %v1279, %v2633
        %v2635 = vpop.f32.mrb[0].mxu0
        %v2636 = vadd.f32 %v1275, %v2635
        %v2637 = vpop.f32.mrb[0].mxu0
        %v2638 = vadd.f32 %v1279, %v2637
        %2639 = vmatprep.mubr.bf16.mxu0 %v1107
        %2640 = vmatmul.mubr.bf16.gmra.mrb[0].mxu0 %v1106
        %v2641 = vpop.f32.mrb[0].mxu0
        %v2642 = vadd.f32 %v1275, %v2641
        %v2643 = vpop.f32.mrb[0].mxu0
        %v2644 = vadd.f32 %v1279, %v2643
        %v2645 = vpop.f32.mrb[0].mxu0
        %v2646 = vadd.f32 %v1275, %v2645
        %v2647 = vpop.f32.mrb[0].mxu0
        %v2648 = vadd.f32 %v1279, %v2647
        %2649 = vmatprep.mubr.bf16.mxu0 %v1109
        %2650 = vmatmul.mubr.bf16.gmra.mrb[0].mxu0 %v1108
        %v2651 = vpop.f32.mrb[0].mxu0
        %v2652 = vadd.f32 %v1275, %v2651
        %v2653 = vpop.f32.mrb[0].mxu0
        %v2654 = vadd.f32 %v1279, %v2653
        %v2655 = vpop.f32.mrb[0].mxu0
        %v2656 = vadd.f32 %v1275, %v2655
        %v2657 = vpop.f32.mrb[0].mxu0
        %v2658 = vadd.f32 %v1279, %v2657
        %2659 = vmatprep.mubr.bf16.mxu0 %v1111
        %2660 = vmatmul.mubr.bf16.gmra.mrb[0].mxu0 %v1110
        %v2661 = vpop.f32.mrb[0].mxu0
        %v2662 = vadd.f32 %v1275, %v2661
        %v2663 = vpop.f32.mrb[0].mxu0
        %v2664 = vadd.f32 %v1279, %v2663
        %v2665 = vpop.f32.mrb[0].mxu0
        %v2666 = vadd.f32 %v1275, %v2665
        %v2667 = vpop.f32.mrb[0].mxu0
        %v2668 = vadd.f32 %v1279, %v2667
        %2669 = vmatprep.mubr.bf16.mxu0 %v1113
        %2670 = vmatmul.mubr.bf16.gmra.mrb[0].mxu0 %v1112
        %v2671 = vpop.f32.mrb[0].mxu0
        %v2672 = vadd.f32 %v1275, %v2671
        %v2673 = vpop.f32.mrb[0].mxu0
        %v2674 = vadd.f32 %v1279, %v2673
        %v2675 = vpop.f32.mrb[0].mxu0
        %v2676 = vadd.f32 %v1275, %v2675
        %v2677 = vpop.f32.mrb[0].mxu0
        %v2678 = vadd.f32 %v1279, %v2677
        %2679 = vmatprep.mubr.bf16.mxu0 %v1115
        %2680 = vmatmul.mubr.bf16.gmra.mrb[0].mxu0 %v1114
        %v2681 = vpop.f32.mrb[0].mxu0
        %v2682 = vadd.f32 %v1275, %v2681
        %v2683 = vpop.f32.mrb[0].mxu0
        %v2684 = vadd.f32 %v1279, %v2683
        %v2685 = vpop.f32.mrb[0].mxu0
        %v2686 = vadd.f32 %v1275, %v2685
        %v2687 = vpop.f32.mrb[0].mxu0
        %v2688 = vadd.f32 %v1279, %v2687
        %2689 = vmatprep.mubr.bf16.mxu0 %v1117
        %2690 = vmatmul.mubr.bf16.gmra.mrb[0].mxu0 %v1116
        %v2691 = vpop.f32.mrb[0].mxu0
        %v2692 = vadd.f32 %v1275, %v2691
        %v2693 = vpop.f32.mrb[0].mxu0
        %v2694 = vadd.f32 %v1279, %v2693
        %v2695 = vpop.f32.mrb[0].mxu0
        %v2696 = vadd.f32 %v1275, %v2695
        %v2697 = vpop.f32.mrb[0].mxu0
        %v2698 = vadd.f32 %v1279, %v2697
        %2699 = vdwg.mxu0
        %v2700 = vpack.c.bf16 %v1967, %v1963
        %v2701 = vpack.c.bf16 %v1969, %v1965
        %v2702 = vpack.c.bf16 %v2160, %v2156
        %v2703 = vpack.c.bf16 %v2162, %v2158
        %v2704 = vpack.c.bf16 %v2353, %v2349
        %v2705 = vpack.c.bf16 %v2355, %v2351
        %v2706 = vpack.c.bf16 %v2546, %v2542
        %v2707 = vpack.c.bf16 %v2548, %v2544
        %v2708 = vpack.c.bf16 %v1977, %v1973
        %v2709 = vpack.c.bf16 %v1979, %v1975
        %v2710 = vpack.c.bf16 %v2170, %v2166
        %v2711 = vpack.c.bf16 %v2172, %v2168
        %v2712 = vpack.c.bf16 %v2363, %v2359
        %v2713 = vpack.c.bf16 %v2365, %v2361
        %v2714 = vpack.c.bf16 %v2556, %v2552
        %v2715 = vpack.c.bf16 %v2558, %v2554
        %v2716 = vpack.c.bf16 %v1987, %v1983
        %v2717 = vpack.c.bf16 %v1989, %v1985
        %v2718 = vpack.c.bf16 %v2180, %v2176
        %v2719 = vpack.c.bf16 %v2182, %v2178
        %v2720 = vpack.c.bf16 %v2373, %v2369
        %v2721 = vpack.c.bf16 %v2375, %v2371
        %v2722 = vpack.c.bf16 %v2566, %v2562
        %v2723 = vpack.c.bf16 %v2568, %v2564
        %v2724 = vpack.c.bf16 %v1997, %v1993
        %v2725 = vpack.c.bf16 %v1999, %v1995
        %v2726 = vpack.c.bf16 %v2190, %v2186
        %v2727 = vpack.c.bf16 %v2192, %v2188
        %v2728 = vpack.c.bf16 %v2383, %v2379
        %v2729 = vpack.c.bf16 %v2385, %v2381
        %v2730 = vpack.c.bf16 %v2576, %v2572
        %v2731 = vpack.c.bf16 %v2578, %v2574
        %v2732 = vpack.c.bf16 %v2007, %v2003
        %v2733 = vpack.c.bf16 %v2009, %v2005
        %v2734 = vpack.c.bf16 %v2200, %v2196
        %v2735 = vpack.c.bf16 %v2202, %v2198
        %v2736 = vpack.c.bf16 %v2393, %v2389
        %v2737 = vpack.c.bf16 %v2395, %v2391
        %v2738 = vpack.c.bf16 %v2586, %v2582
        %v2739 = vpack.c.bf16 %v2588, %v2584
        %v2740 = vpack.c.bf16 %v2017, %v2013
        %v2741 = vpack.c.bf16 %v2019, %v2015
        %v2742 = vpack.c.bf16 %v2210, %v2206
        %v2743 = vpack.c.bf16 %v2212, %v2208
        %v2744 = vpack.c.bf16 %v2403, %v2399
        %v2745 = vpack.c.bf16 %v2405, %v2401
        %v2746 = vpack.c.bf16 %v2596, %v2592
        %v2747 = vpack.c.bf16 %v2598, %v2594
        %v2748 = vpack.c.bf16 %v2027, %v2023
        %v2749 = vpack.c.bf16 %v2029, %v2025
        %v2750 = vpack.c.bf16 %v2220, %v2216
        %v2751 = vpack.c.bf16 %v2222, %v2218
        %v2752 = vpack.c.bf16 %v2413, %v2409
        %v2753 = vpack.c.bf16 %v2415, %v2411
        %v2754 = vpack.c.bf16 %v2606, %v2602
        %v2755 = vpack.c.bf16 %v2608, %v2604
        %v2756 = vpack.c.bf16 %v2037, %v2033
        %v2757 = vpack.c.bf16 %v2039, %v2035
        %v2758 = vpack.c.bf16 %v2230, %v2226
        %v2759 = vpack.c.bf16 %v2232, %v2228
        %v2760 = vpack.c.bf16 %v2423, %v2419
        %v2761 = vpack.c.bf16 %v2425, %v2421
        %v2762 = vpack.c.bf16 %v2616, %v2612
        %v2763 = vpack.c.bf16 %v2618, %v2614
        %v2764 = vpack.c.bf16 %v2047, %v2043
        %v2765 = vpack.c.bf16 %v2049, %v2045
        %v2766 = vpack.c.bf16 %v2240, %v2236
        %v2767 = vpack.c.bf16 %v2242, %v2238
        %v2768 = vpack.c.bf16 %v2433, %v2429
        %v2769 = vpack.c.bf16 %v2435, %v2431
        %v2770 = vpack.c.bf16 %v2626, %v2622
        %v2771 = vpack.c.bf16 %v2628, %v2624
        %v2772 = vpack.c.bf16 %v2057, %v2053
        %v2773 = vpack.c.bf16 %v2059, %v2055
        %v2774 = vpack.c.bf16 %v2250, %v2246
        %v2775 = vpack.c.bf16 %v2252, %v2248
        %v2776 = vpack.c.bf16 %v2443, %v2439
        %v2777 = vpack.c.bf16 %v2445, %v2441
        %v2778 = vpack.c.bf16 %v2636, %v2632
        %v2779 = vpack.c.bf16 %v2638, %v2634
        %v2780 = vpack.c.bf16 %v2067, %v2063
        %v2781 = vpack.c.bf16 %v2069, %v2065
        %v2782 = vpack.c.bf16 %v2260, %v2256
        %v2783 = vpack.c.bf16 %v2262, %v2258
        %v2784 = vpack.c.bf16 %v2453, %v2449
        %v2785 = vpack.c.bf16 %v2455, %v2451
        %v2786 = vpack.c.bf16 %v2646, %v2642
        %v2787 = vpack.c.bf16 %v2648, %v2644
        %v2788 = vpack.c.bf16 %v2077, %v2073
        %v2789 = vpack.c.bf16 %v2079, %v2075
        %v2790 = vpack.c.bf16 %v2270, %v2266
        %v2791 = vpack.c.bf16 %v2272, %v2268
        %v2792 = vpack.c.bf16 %v2463, %v2459
        %v2793 = vpack.c.bf16 %v2465, %v2461
        %v2794 = vpack.c.bf16 %v2656, %v2652
        %v2795 = vpack.c.bf16 %v2658, %v2654
        %v2796 = vpack.c.bf16 %v2087, %v2083
        %v2797 = vpack.c.bf16 %v2089, %v2085
        %v2798 = vpack.c.bf16 %v2280, %v2276
        %v2799 = vpack.c.bf16 %v2282, %v2278
        %v2800 = vpack.c.bf16 %v2473, %v2469
        %v2801 = vpack.c.bf16 %v2475, %v2471
        %v2802 = vpack.c.bf16 %v2666, %v2662
        %v2803 = vpack.c.bf16 %v2668, %v2664
        %v2804 = vpack.c.bf16 %v2097, %v2093
        %v2805 = vpack.c.bf16 %v2099, %v2095
        %v2806 = vpack.c.bf16 %v2290, %v2286
        %v2807 = vpack.c.bf16 %v2292, %v2288
        %v2808 = vpack.c.bf16 %v2483, %v2479
        %v2809 = vpack.c.bf16 %v2485, %v2481
        %v2810 = vpack.c.bf16 %v2676, %v2672
        %v2811 = vpack.c.bf16 %v2678, %v2674
        %v2812 = vpack.c.bf16 %v2107, %v2103
        %v2813 = vpack.c.bf16 %v2109, %v2105
        %v2814 = vpack.c.bf16 %v2300, %v2296
        %v2815 = vpack.c.bf16 %v2302, %v2298
        %v2816 = vpack.c.bf16 %v2493, %v2489
        %v2817 = vpack.c.bf16 %v2495, %v2491
        %v2818 = vpack.c.bf16 %v2686, %v2682
        %v2819 = vpack.c.bf16 %v2688, %v2684
        %v2820 = vpack.c.bf16 %v2117, %v2113
        %v2821 = vpack.c.bf16 %v2119, %v2115
        %v2822 = vpack.c.bf16 %v2310, %v2306
        %v2823 = vpack.c.bf16 %v2312, %v2308
        %v2824 = vpack.c.bf16 %v2503, %v2499
        %v2825 = vpack.c.bf16 %v2505, %v2501
        %v2826 = vpack.c.bf16 %v2696, %v2692
        %v2827 = vpack.c.bf16 %v2698, %v2694
        %v2956 = vunpack.c.l.b16 %v2700
        %v2957 = vunpack.c.l.b16 %v2701
        %v2958 = vunpack.c.l.b16 %v2702
        %v2959 = vunpack.c.l.b16 %v2703
        %v2960 = vunpack.c.l.b16 %v2704
        %v2961 = vunpack.c.l.b16 %v2705
        %v2962 = vunpack.c.l.b16 %v2706
        %v2963 = vunpack.c.l.b16 %v2707
        %v2964 = vunpack.c.h.b16 %v2700
        %v2965 = vunpack.c.h.b16 %v2701
        %v2966 = vunpack.c.h.b16 %v2702
        %v2967 = vunpack.c.h.b16 %v2703
        %v2968 = vunpack.c.h.b16 %v2704
        %v2969 = vunpack.c.h.b16 %v2705
        %v2970 = vunpack.c.h.b16 %v2706
        %v2971 = vunpack.c.h.b16 %v2707
        %v2972 = vunpack.c.l.b16 %v2708
        %v2973 = vunpack.c.l.b16 %v2709
        %v2974 = vunpack.c.l.b16 %v2710
        %v2975 = vunpack.c.l.b16 %v2711
        %v2976 = vunpack.c.l.b16 %v2712
        %v2977 = vunpack.c.l.b16 %v2713
        %v2978 = vunpack.c.l.b16 %v2714
        %v2979 = vunpack.c.l.b16 %v2715
        %v2980 = vunpack.c.h.b16 %v2708
        %v2981 = vunpack.c.h.b16 %v2709
        %v2982 = vunpack.c.h.b16 %v2710
        %v2983 = vunpack.c.h.b16 %v2711
        %v2984 = vunpack.c.h.b16 %v2712
        %v2985 = vunpack.c.h.b16 %v2713
        %v2986 = vunpack.c.h.b16 %v2714
        %v2987 = vunpack.c.h.b16 %v2715
        %v2988 = vunpack.c.l.b16 %v2716
        %v2989 = vunpack.c.l.b16 %v2717
        %v2990 = vunpack.c.l.b16 %v2718
        %v2991 = vunpack.c.l.b16 %v2719
        %v2992 = vunpack.c.l.b16 %v2720
        %v2993 = vunpack.c.l.b16 %v2721
        %v2994 = vunpack.c.l.b16 %v2722
        %v2995 = vunpack.c.l.b16 %v2723
        %v2996 = vunpack.c.h.b16 %v2716
        %v2997 = vunpack.c.h.b16 %v2717
        %v2998 = vunpack.c.h.b16 %v2718
        %v2999 = vunpack.c.h.b16 %v2719
        %v3000 = vunpack.c.h.b16 %v2720
        %v3001 = vunpack.c.h.b16 %v2721
        %v3002 = vunpack.c.h.b16 %v2722
        %v3003 = vunpack.c.h.b16 %v2723
        %v3004 = vunpack.c.l.b16 %v2724
        %v3005 = vunpack.c.l.b16 %v2725
        %v3006 = vunpack.c.l.b16 %v2726
        %v3007 = vunpack.c.l.b16 %v2727
        %v3008 = vunpack.c.l.b16 %v2728
        %v3009 = vunpack.c.l.b16 %v2729
        %v3010 = vunpack.c.l.b16 %v2730
        %v3011 = vunpack.c.l.b16 %v2731
        %v3012 = vunpack.c.h.b16 %v2724
        %v3013 = vunpack.c.h.b16 %v2725
        %v3014 = vunpack.c.h.b16 %v2726
        %v3015 = vunpack.c.h.b16 %v2727
        %v3016 = vunpack.c.h.b16 %v2728
        %v3017 = vunpack.c.h.b16 %v2729
        %v3018 = vunpack.c.h.b16 %v2730
        %v3019 = vunpack.c.h.b16 %v2731
        %v3020 = vunpack.c.l.b16 %v2732
        %v3021 = vunpack.c.l.b16 %v2733
        %v3022 = vunpack.c.l.b16 %v2734
        %v3023 = vunpack.c.l.b16 %v2735
        %v3024 = vunpack.c.l.b16 %v2736
        %v3025 = vunpack.c.l.b16 %v2737
        %v3026 = vunpack.c.l.b16 %v2738
        %v3027 = vunpack.c.l.b16 %v2739
        %v3028 = vunpack.c.h.b16 %v2732
        %v3029 = vunpack.c.h.b16 %v2733
        %v3030 = vunpack.c.h.b16 %v2734
        %v3031 = vunpack.c.h.b16 %v2735
        %v3032 = vunpack.c.h.b16 %v2736
        %v3033 = vunpack.c.h.b16 %v2737
        %v3034 = vunpack.c.h.b16 %v2738
        %v3035 = vunpack.c.h.b16 %v2739
        %v3036 = vunpack.c.l.b16 %v2740
        %v3037 = vunpack.c.l.b16 %v2741
        %v3038 = vunpack.c.l.b16 %v2742
        %v3039 = vunpack.c.l.b16 %v2743
        %v3040 = vunpack.c.l.b16 %v2744
        %v3041 = vunpack.c.l.b16 %v2745
        %v3042 = vunpack.c.l.b16 %v2746
        %v3043 = vunpack.c.l.b16 %v2747
        %v3044 = vunpack.c.h.b16 %v2740
        %v3045 = vunpack.c.h.b16 %v2741
        %v3046 = vunpack.c.h.b16 %v2742
        %v3047 = vunpack.c.h.b16 %v2743
        %v3048 = vunpack.c.h.b16 %v2744
        %v3049 = vunpack.c.h.b16 %v2745
        %v3050 = vunpack.c.h.b16 %v2746
        %v3051 = vunpack.c.h.b16 %v2747
        %v3052 = vunpack.c.l.b16 %v2748
        %v3053 = vunpack.c.l.b16 %v2749
        %v3054 = vunpack.c.l.b16 %v2750
        %v3055 = vunpack.c.l.b16 %v2751
        %v3056 = vunpack.c.l.b16 %v2752
        %v3057 = vunpack.c.l.b16 %v2753
        %v3058 = vunpack.c.l.b16 %v2754
        %v3059 = vunpack.c.l.b16 %v2755
        %v3060 = vunpack.c.h.b16 %v2748
        %v3061 = vunpack.c.h.b16 %v2749
        %v3062 = vunpack.c.h.b16 %v2750
        %v3063 = vunpack.c.h.b16 %v2751
        %v3064 = vunpack.c.h.b16 %v2752
        %v3065 = vunpack.c.h.b16 %v2753
        %v3066 = vunpack.c.h.b16 %v2754
        %v3067 = vunpack.c.h.b16 %v2755
        %v3068 = vunpack.c.l.b16 %v2756
        %v3069 = vunpack.c.l.b16 %v2757
        %v3070 = vunpack.c.l.b16 %v2758
        %v3071 = vunpack.c.l.b16 %v2759
        %v3072 = vunpack.c.l.b16 %v2760
        %v3073 = vunpack.c.l.b16 %v2761
        %v3074 = vunpack.c.l.b16 %v2762
        %v3075 = vunpack.c.l.b16 %v2763
        %v3076 = vunpack.c.h.b16 %v2756
        %v3077 = vunpack.c.h.b16 %v2757
        %v3078 = vunpack.c.h.b16 %v2758
        %v3079 = vunpack.c.h.b16 %v2759
        %v3080 = vunpack.c.h.b16 %v2760
        %v3081 = vunpack.c.h.b16 %v2761
        %v3082 = vunpack.c.h.b16 %v2762
        %v3083 = vunpack.c.h.b16 %v2763
        %v3084 = vunpack.c.l.b16 %v2764
        %v3085 = vunpack.c.l.b16 %v2765
        %v3086 = vunpack.c.l.b16 %v2766
        %v3087 = vunpack.c.l.b16 %v2767
        %v3088 = vunpack.c.l.b16 %v2768
        %v3089 = vunpack.c.l.b16 %v2769
        %v3090 = vunpack.c.l.b16 %v2770
        %v3091 = vunpack.c.l.b16 %v2771
        %v3092 = vunpack.c.h.b16 %v2764
        %v3093 = vunpack.c.h.b16 %v2765
        %v3094 = vunpack.c.h.b16 %v2766
        %v3095 = vunpack.c.h.b16 %v2767
        %v3096 = vunpack.c.h.b16 %v2768
        %v3097 = vunpack.c.h.b16 %v2769
        %v3098 = vunpack.c.h.b16 %v2770
        %v3099 = vunpack.c.h.b16 %v2771
        %v3100 = vunpack.c.l.b16 %v2772
        %v3101 = vunpack.c.l.b16 %v2773
        %v3102 = vunpack.c.l.b16 %v2774
        %v3103 = vunpack.c.l.b16 %v2775
        %v3104 = vunpack.c.l.b16 %v2776
        %v3105 = vunpack.c.l.b16 %v2777
        %v3106 = vunpack.c.l.b16 %v2778
        %v3107 = vunpack.c.l.b16 %v2779
        %v3108 = vunpack.c.h.b16 %v2772
        %v3109 = vunpack.c.h.b16 %v2773
        %v3110 = vunpack.c.h.b16 %v2774
        %v3111 = vunpack.c.h.b16 %v2775
        %v3112 = vunpack.c.h.b16 %v2776
        %v3113 = vunpack.c.h.b16 %v2777
        %v3114 = vunpack.c.h.b16 %v2778
        %v3115 = vunpack.c.h.b16 %v2779
        %v3116 = vunpack.c.l.b16 %v2780
        %v3117 = vunpack.c.l.b16 %v2781
        %v3118 = vunpack.c.l.b16 %v2782
        %v3119 = vunpack.c.l.b16 %v2783
        %v3120 = vunpack.c.l.b16 %v2784
        %v3121 = vunpack.c.l.b16 %v2785
        %v3122 = vunpack.c.l.b16 %v2786
        %v3123 = vunpack.c.l.b16 %v2787
        %v3124 = vunpack.c.h.b16 %v2780
        %v3125 = vunpack.c.h.b16 %v2781
        %v3126 = vunpack.c.h.b16 %v2782
        %v3127 = vunpack.c.h.b16 %v2783
        %v3128 = vunpack.c.h.b16 %v2784
        %v3129 = vunpack.c.h.b16 %v2785
        %v3130 = vunpack.c.h.b16 %v2786
        %v3131 = vunpack.c.h.b16 %v2787
        %v3132 = vunpack.c.l.b16 %v2788
        %v3133 = vunpack.c.l.b16 %v2789
        %v3134 = vunpack.c.l.b16 %v2790
        %v3135 = vunpack.c.l.b16 %v2791
        %v3136 = vunpack.c.l.b16 %v2792
        %v3137 = vunpack.c.l.b16 %v2793
        %v3138 = vunpack.c.l.b16 %v2794
        %v3139 = vunpack.c.l.b16 %v2795
        %v3140 = vunpack.c.h.b16 %v2788
        %v3141 = vunpack.c.h.b16 %v2789
        %v3142 = vunpack.c.h.b16 %v2790
        %v3143 = vunpack.c.h.b16 %v2791
        %v3144 = vunpack.c.h.b16 %v2792
        %v3145 = vunpack.c.h.b16 %v2793
        %v3146 = vunpack.c.h.b16 %v2794
        %v3147 = vunpack.c.h.b16 %v2795
        %v3148 = vunpack.c.l.b16 %v2796
        %v3149 = vunpack.c.l.b16 %v2797
        %v3150 = vunpack.c.l.b16 %v2798
        %v3151 = vunpack.c.l.b16 %v2799
        %v3152 = vunpack.c.l.b16 %v2800
        %v3153 = vunpack.c.l.b16 %v2801
        %v3154 = vunpack.c.l.b16 %v2802
        %v3155 = vunpack.c.l.b16 %v2803
        %v3156 = vunpack.c.h.b16 %v2796
        %v3157 = vunpack.c.h.b16 %v2797
        %v3158 = vunpack.c.h.b16 %v2798
        %v3159 = vunpack.c.h.b16 %v2799
        %v3160 = vunpack.c.h.b16 %v2800
        %v3161 = vunpack.c.h.b16 %v2801
        %v3162 = vunpack.c.h.b16 %v2802
        %v3163 = vunpack.c.h.b16 %v2803
        %v3164 = vunpack.c.l.b16 %v2804
        %v3165 = vunpack.c.l.b16 %v2805
        %v3166 = vunpack.c.l.b16 %v2806
        %v3167 = vunpack.c.l.b16 %v2807
        %v3168 = vunpack.c.l.b16 %v2808
        %v3169 = vunpack.c.l.b16 %v2809
        %v3170 = vunpack.c.l.b16 %v2810
        %v3171 = vunpack.c.l.b16 %v2811
        %v3172 = vunpack.c.h.b16 %v2804
        %v3173 = vunpack.c.h.b16 %v2805
        %v3174 = vunpack.c.h.b16 %v2806
        %v3175 = vunpack.c.h.b16 %v2807
        %v3176 = vunpack.c.h.b16 %v2808
        %v3177 = vunpack.c.h.b16 %v2809
        %v3178 = vunpack.c.h.b16 %v2810
        %v3179 = vunpack.c.h.b16 %v2811
        %v3180 = vunpack.c.l.b16 %v2812
        %v3181 = vunpack.c.l.b16 %v2813
        %v3182 = vunpack.c.l.b16 %v2814
        %v3183 = vunpack.c.l.b16 %v2815
        %v3184 = vunpack.c.l.b16 %v2816
        %v3185 = vunpack.c.l.b16 %v2817
        %v3186 = vunpack.c.l.b16 %v2818
        %v3187 = vunpack.c.l.b16 %v2819
        %v3188 = vunpack.c.h.b16 %v2812
        %v3189 = vunpack.c.h.b16 %v2813
        %v3190 = vunpack.c.h.b16 %v2814
        %v3191 = vunpack.c.h.b16 %v2815
        %v3192 = vunpack.c.h.b16 %v2816
        %v3193 = vunpack.c.h.b16 %v2817
        %v3194 = vunpack.c.h.b16 %v2818
        %v3195 = vunpack.c.h.b16 %v2819
        %v3196 = vunpack.c.l.b16 %v2820
        %v3197 = vunpack.c.l.b16 %v2821
        %v3198 = vunpack.c.l.b16 %v2822
        %v3199 = vunpack.c.l.b16 %v2823
        %v3200 = vunpack.c.l.b16 %v2824
        %v3201 = vunpack.c.l.b16 %v2825
        %v3202 = vunpack.c.l.b16 %v2826
        %v3203 = vunpack.c.l.b16 %v2827
        %v3204 = vunpack.c.h.b16 %v2820
        %v3205 = vunpack.c.h.b16 %v2821
        %v3206 = vunpack.c.h.b16 %v2822
        %v3207 = vunpack.c.h.b16 %v2823
        %v3208 = vunpack.c.h.b16 %v2824
        %v3209 = vunpack.c.h.b16 %v2825
        %v3210 = vunpack.c.h.b16 %v2826
        %v3211 = vunpack.c.h.b16 %v2827
        %v3212 = vpack.c.b16 %v2957, %v2956
        %v3213 = vpack.c.b16 %v2959, %v2958
        %v3214 = vpack.c.b16 %v2961, %v2960
        %v3215 = vpack.c.b16 %v2963, %v2962
        %v3216 = vpack.c.b16 %v2965, %v2964
        %v3217 = vpack.c.b16 %v2967, %v2966
        %v3218 = vpack.c.b16 %v2969, %v2968
        %v3219 = vpack.c.b16 %v2971, %v2970
        %v3220 = vpack.c.b16 %v2973, %v2972
        %v3221 = vpack.c.b16 %v2975, %v2974
        %v3222 = vpack.c.b16 %v2977, %v2976
        %v3223 = vpack.c.b16 %v2979, %v2978
        %v3224 = vpack.c.b16 %v2981, %v2980
        %v3225 = vpack.c.b16 %v2983, %v2982
        %v3226 = vpack.c.b16 %v2985, %v2984
        %v3227 = vpack.c.b16 %v2987, %v2986
        %v3228 = vpack.c.b16 %v2989, %v2988
        %v3229 = vpack.c.b16 %v2991, %v2990
        %v3230 = vpack.c.b16 %v2993, %v2992
        %v3231 = vpack.c.b16 %v2995, %v2994
        %v3232 = vpack.c.b16 %v2997, %v2996
        %v3233 = vpack.c.b16 %v2999, %v2998
        %v3234 = vpack.c.b16 %v3001, %v3000
        %v3235 = vpack.c.b16 %v3003, %v3002
        %v3236 = vpack.c.b16 %v3005, %v3004
        %v3237 = vpack.c.b16 %v3007, %v3006
        %v3238 = vpack.c.b16 %v3009, %v3008
        %v3239 = vpack.c.b16 %v3011, %v3010
        %v3240 = vpack.c.b16 %v3013, %v3012
        %v3241 = vpack.c.b16 %v3015, %v3014
        %v3242 = vpack.c.b16 %v3017, %v3016
        %v3243 = vpack.c.b16 %v3019, %v3018
        %v3244 = vpack.c.b16 %v3021, %v3020
        %v3245 = vpack.c.b16 %v3023, %v3022
        %v3246 = vpack.c.b16 %v3025, %v3024
        %v3247 = vpack.c.b16 %v3027, %v3026
        %v3248 = vpack.c.b16 %v3029, %v3028
        %v3249 = vpack.c.b16 %v3031, %v3030
        %v3250 = vpack.c.b16 %v3033, %v3032
        %v3251 = vpack.c.b16 %v3035, %v3034
        %v3252 = vpack.c.b16 %v3037, %v3036
        %v3253 = vpack.c.b16 %v3039, %v3038
        %v3254 = vpack.c.b16 %v3041, %v3040
        %v3255 = vpack.c.b16 %v3043, %v3042
        %v3256 = vpack.c.b16 %v3045, %v3044
        %v3257 = vpack.c.b16 %v3047, %v3046
        %v3258 = vpack.c.b16 %v3049, %v3048
        %v3259 = vpack.c.b16 %v3051, %v3050
        %v3260 = vpack.c.b16 %v3053, %v3052
        %v3261 = vpack.c.b16 %v3055, %v3054
        %v3262 = vpack.c.b16 %v3057, %v3056
        %v3263 = vpack.c.b16 %v3059, %v3058
        %v3264 = vpack.c.b16 %v3061, %v3060
        %v3265 = vpack.c.b16 %v3063, %v3062
        %v3266 = vpack.c.b16 %v3065, %v3064
        %v3267 = vpack.c.b16 %v3067, %v3066
        %v3268 = vpack.c.b16 %v3069, %v3068
        %v3269 = vpack.c.b16 %v3071, %v3070
        %v3270 = vpack.c.b16 %v3073, %v3072
        %v3271 = vpack.c.b16 %v3075, %v3074
        %v3272 = vpack.c.b16 %v3077, %v3076
        %v3273 = vpack.c.b16 %v3079, %v3078
        %v3274 = vpack.c.b16 %v3081, %v3080
        %v3275 = vpack.c.b16 %v3083, %v3082
        %v3276 = vpack.c.b16 %v3085, %v3084
        %v3277 = vpack.c.b16 %v3087, %v3086
        %v3278 = vpack.c.b16 %v3089, %v3088
        %v3279 = vpack.c.b16 %v3091, %v3090
        %v3280 = vpack.c.b16 %v3093, %v3092
        %v3281 = vpack.c.b16 %v3095, %v3094
        %v3282 = vpack.c.b16 %v3097, %v3096
        %v3283 = vpack.c.b16 %v3099, %v3098
        %v3284 = vpack.c.b16 %v3101, %v3100
        %v3285 = vpack.c.b16 %v3103, %v3102
        %v3286 = vpack.c.b16 %v3105, %v3104
        %v3287 = vpack.c.b16 %v3107, %v3106
        %v3288 = vpack.c.b16 %v3109, %v3108
        %v3289 = vpack.c.b16 %v3111, %v3110
        %v3290 = vpack.c.b16 %v3113, %v3112
        %v3291 = vpack.c.b16 %v3115, %v3114
        %v3292 = vpack.c.b16 %v3117, %v3116
        %v3293 = vpack.c.b16 %v3119, %v3118
        %v3294 = vpack.c.b16 %v3121, %v3120
        %v3295 = vpack.c.b16 %v3123, %v3122
        %v3296 = vpack.c.b16 %v3125, %v3124
        %v3297 = vpack.c.b16 %v3127, %v3126
        %v3298 = vpack.c.b16 %v3129, %v3128
        %v3299 = vpack.c.b16 %v3131, %v3130
        %v3300 = vpack.c.b16 %v3133, %v3132
        %v3301 = vpack.c.b16 %v3135, %v3134
        %v3302 = vpack.c.b16 %v3137, %v3136
        %v3303 = vpack.c.b16 %v3139, %v3138
        %v3304 = vpack.c.b16 %v3141, %v3140
        %v3305 = vpack.c.b16 %v3143, %v3142
        %v3306 = vpack.c.b16 %v3145, %v3144
        %v3307 = vpack.c.b16 %v3147, %v3146
        %v3308 = vpack.c.b16 %v3149, %v3148
        %v3309 = vpack.c.b16 %v3151, %v3150
        %v3310 = vpack.c.b16 %v3153, %v3152
        %v3311 = vpack.c.b16 %v3155, %v3154
        %v3312 = vpack.c.b16 %v3157, %v3156
        %v3313 = vpack.c.b16 %v3159, %v3158
        %v3314 = vpack.c.b16 %v3161, %v3160
        %v3315 = vpack.c.b16 %v3163, %v3162
        %v3316 = vpack.c.b16 %v3165, %v3164
        %v3317 = vpack.c.b16 %v3167, %v3166
        %v3318 = vpack.c.b16 %v3169, %v3168
        %v3319 = vpack.c.b16 %v3171, %v3170
        %v3320 = vpack.c.b16 %v3173, %v3172
        %v3321 = vpack.c.b16 %v3175, %v3174
        %v3322 = vpack.c.b16 %v3177, %v3176
        %v3323 = vpack.c.b16 %v3179, %v3178
        %v3324 = vpack.c.b16 %v3181, %v3180
        %v3325 = vpack.c.b16 %v3183, %v3182
        %v3326 = vpack.c.b16 %v3185, %v3184
        %v3327 = vpack.c.b16 %v3187, %v3186
        %v3328 = vpack.c.b16 %v3189, %v3188
        %v3329 = vpack.c.b16 %v3191, %v3190
        %v3330 = vpack.c.b16 %v3193, %v3192
        %v3331 = vpack.c.b16 %v3195, %v3194
        %v3332 = vpack.c.b16 %v3197, %v3196
        %v3333 = vpack.c.b16 %v3199, %v3198
        %v3334 = vpack.c.b16 %v3201, %v3200
        %v3335 = vpack.c.b16 %v3203, %v3202
        %v3336 = vpack.c.b16 %v3205, %v3204
        %v3337 = vpack.c.b16 %v3207, %v3206
        %v3338 = vpack.c.b16 %v3209, %v3208
        %v3339 = vpack.c.b16 %v3211, %v3210
        %3468 = vst [vmem:[%s359] sm:$0xff] %v3212
        %3469 = vst [vmem:[%s359 + $0x8] sm:$0xff] %v3213
        %3470 = vst [vmem:[%s359 + $0x10] sm:$0xff] %v3214
        %3471 = vst [vmem:[%s359 + $0x18] sm:$0xff] %v3215
        %3472 = vst [vmem:[%s359 + $0x20] sm:$0xff] %v3216
        %3473 = vst [vmem:[%s359 + $0x28] sm:$0xff] %v3217
        %3474 = vst [vmem:[%s359 + $0x30] sm:$0xff] %v3218
        %3475 = vst [vmem:[%s359 + $0x38] sm:$0xff] %v3219
        %3476 = vst [vmem:[%s359 + $0x40] sm:$0xff] %v3220
        %3477 = vst [vmem:[%s359 + $0x48] sm:$0xff] %v3221
        %3478 = vst [vmem:[%s359 + $0x50] sm:$0xff] %v3222
        %3479 = vst [vmem:[%s359 + $0x58] sm:$0xff] %v3223
        %3480 = vst [vmem:[%s359 + $0x60] sm:$0xff] %v3224
        %3481 = vst [vmem:[%s359 + $0x68] sm:$0xff] %v3225
        %3482 = vst [vmem:[%s359 + $0x70] sm:$0xff] %v3226
        %3483 = vst [vmem:[%s359 + $0x78] sm:$0xff] %v3227
        %3484 = vst [vmem:[%s359 + $0x80] sm:$0xff] %v3228
        %3485 = vst [vmem:[%s359 + $0x88] sm:$0xff] %v3229
        %3486 = vst [vmem:[%s359 + $0x90] sm:$0xff] %v3230
        %3487 = vst [vmem:[%s359 + $0x98] sm:$0xff] %v3231
        %3488 = vst [vmem:[%s359 + $0xa0] sm:$0xff] %v3232
        %3489 = vst [vmem:[%s359 + $0xa8] sm:$0xff] %v3233
        %3490 = vst [vmem:[%s359 + $0xb0] sm:$0xff] %v3234
        %3491 = vst [vmem:[%s359 + $0xb8] sm:$0xff] %v3235
        %3492 = vst [vmem:[%s359 + $0xc0] sm:$0xff] %v3236
        %3493 = vst [vmem:[%s359 + $0xc8] sm:$0xff] %v3237
        %3494 = vst [vmem:[%s359 + $0xd0] sm:$0xff] %v3238
        %3495 = vst [vmem:[%s359 + $0xd8] sm:$0xff] %v3239
        %3496 = vst [vmem:[%s359 + $0xe0] sm:$0xff] %v3240
        %3497 = vst [vmem:[%s359 + $0xe8] sm:$0xff] %v3241
        %3498 = vst [vmem:[%s359 + $0xf0] sm:$0xff] %v3242
        %3499 = vst [vmem:[%s359 + $0xf8] sm:$0xff] %v3243
        %3500 = vst [vmem:[%s359 + $0x100] sm:$0xff] %v3244
        %3501 = vst [vmem:[%s359 + $0x108] sm:$0xff] %v3245
        %3502 = vst [vmem:[%s359 + $0x110] sm:$0xff] %v3246
        %3503 = vst [vmem:[%s359 + $0x118] sm:$0xff] %v3247
        %3504 = vst [vmem:[%s359 + $0x120] sm:$0xff] %v3248
        %3505 = vst [vmem:[%s359 + $0x128] sm:$0xff] %v3249
        %3506 = vst [vmem:[%s359 + $0x130] sm:$0xff] %v3250
        %3507 = vst [vmem:[%s359 + $0x138] sm:$0xff] %v3251
        %3508 = vst [vmem:[%s359 + $0x140] sm:$0xff] %v3252
        %3509 = vst [vmem:[%s359 + $0x148] sm:$0xff] %v3253
        %3510 = vst [vmem:[%s359 + $0x150] sm:$0xff] %v3254
        %3511 = vst [vmem:[%s359 + $0x158] sm:$0xff] %v3255
        %3512 = vst [vmem:[%s359 + $0x160] sm:$0xff] %v3256
        %3513 = vst [vmem:[%s359 + $0x168] sm:$0xff] %v3257
        %3514 = vst [vmem:[%s359 + $0x170] sm:$0xff] %v3258
        %3515 = vst [vmem:[%s359 + $0x178] sm:$0xff] %v3259
        %3516 = vst [vmem:[%s359 + $0x180] sm:$0xff] %v3260
        %3517 = vst [vmem:[%s359 + $0x188] sm:$0xff] %v3261
        %3518 = vst [vmem:[%s359 + $0x190] sm:$0xff] %v3262
        %3519 = vst [vmem:[%s359 + $0x198] sm:$0xff] %v3263
        %3520 = vst [vmem:[%s359 + $0x1a0] sm:$0xff] %v3264
        %3521 = vst [vmem:[%s359 + $0x1a8] sm:$0xff] %v3265
        %3522 = vst [vmem:[%s359 + $0x1b0] sm:$0xff] %v3266
        %3523 = vst [vmem:[%s359 + $0x1b8] sm:$0xff] %v3267
        %3524 = vst [vmem:[%s359 + $0x1c0] sm:$0xff] %v3268
        %3525 = vst [vmem:[%s359 + $0x1c8] sm:$0xff] %v3269
        %3526 = vst [vmem:[%s359 + $0x1d0] sm:$0xff] %v3270
        %3527 = vst [vmem:[%s359 + $0x1d8] sm:$0xff] %v3271
        %3528 = vst [vmem:[%s359 + $0x1e0] sm:$0xff] %v3272
        %3529 = vst [vmem:[%s359 + $0x1e8] sm:$0xff] %v3273
        %3530 = vst [vmem:[%s359 + $0x1f0] sm:$0xff] %v3274
        %3531 = vst [vmem:[%s359 + $0x1f8] sm:$0xff] %v3275
        %3532 = vst [vmem:[%s359 + $0x200] sm:$0xff] %v3276
        %3533 = vst [vmem:[%s359 + $0x208] sm:$0xff] %v3277
        %3534 = vst [vmem:[%s359 + $0x210] sm:$0xff] %v3278
        %3535 = vst [vmem:[%s359 + $0x218] sm:$0xff] %v3279
        %3536 = vst [vmem:[%s359 + $0x220] sm:$0xff] %v3280
        %3537 = vst [vmem:[%s359 + $0x228] sm:$0xff] %v3281
        %3538 = vst [vmem:[%s359 + $0x230] sm:$0xff] %v3282
        %3539 = vst [vmem:[%s359 + $0x238] sm:$0xff] %v3283
        %3540 = vst [vmem:[%s359 + $0x240] sm:$0xff] %v3284
        %3541 = vst [vmem:[%s359 + $0x248] sm:$0xff] %v3285
        %3542 = vst [vmem:[%s359 + $0x250] sm:$0xff] %v3286
        %3543 = vst [vmem:[%s359 + $0x258] sm:$0xff] %v3287
        %3544 = vst [vmem:[%s359 + $0x260] sm:$0xff] %v3288
        %3545 = vst [vmem:[%s359 + $0x268] sm:$0xff] %v3289
        %3546 = vst [vmem:[%s359 + $0x270] sm:$0xff] %v3290
        %3547 = vst [vmem:[%s359 + $0x278] sm:$0xff] %v3291
        %3548 = vst [vmem:[%s359 + $0x280] sm:$0xff] %v3292
        %3549 = vst [vmem:[%s359 + $0x288] sm:$0xff] %v3293
        %3550 = vst [vmem:[%s359 + $0x290] sm:$0xff] %v3294
        %3551 = vst [vmem:[%s359 + $0x298] sm:$0xff] %v3295
        %3552 = vst [vmem:[%s359 + $0x2a0] sm:$0xff] %v3296
        %3553 = vst [vmem:[%s359 + $0x2a8] sm:$0xff] %v3297
        %3554 = vst [vmem:[%s359 + $0x2b0] sm:$0xff] %v3298
        %3555 = vst [vmem:[%s359 + $0x2b8] sm:$0xff] %v3299
        %3556 = vst [vmem:[%s359 + $0x2c0] sm:$0xff] %v3300
        %3557 = vst [vmem:[%s359 + $0x2c8] sm:$0xff] %v3301
        %3558 = vst [vmem:[%s359 + $0x2d0] sm:$0xff] %v3302
        %3559 = vst [vmem:[%s359 + $0x2d8] sm:$0xff] %v3303
        %3560 = vst [vmem:[%s359 + $0x2e0] sm:$0xff] %v3304
        %3561 = vst [vmem:[%s359 + $0x2e8] sm:$0xff] %v3305
        %3562 = vst [vmem:[%s359 + $0x2f0] sm:$0xff] %v3306
        %3563 = vst [vmem:[%s359 + $0x2f8] sm:$0xff] %v3307
        %3564 = vst [vmem:[%s359 + $0x300] sm:$0xff] %v3308
        %3565 = vst [vmem:[%s359 + $0x308] sm:$0xff] %v3309
        %3566 = vst [vmem:[%s359 + $0x310] sm:$0xff] %v3310
        %3567 = vst [vmem:[%s359 + $0x318] sm:$0xff] %v3311
        %3568 = vst [vmem:[%s359 + $0x320] sm:$0xff] %v3312
        %3569 = vst [vmem:[%s359 + $0x328] sm:$0xff] %v3313
        %3570 = vst [vmem:[%s359 + $0x330] sm:$0xff] %v3314
        %3571 = vst [vmem:[%s359 + $0x338] sm:$0xff] %v3315
        %3572 = vst [vmem:[%s359 + $0x340] sm:$0xff] %v3316
        %3573 = vst [vmem:[%s359 + $0x348] sm:$0xff] %v3317
        %3574 = vst [vmem:[%s359 + $0x350] sm:$0xff] %v3318
        %3575 = vst [vmem:[%s359 + $0x358] sm:$0xff] %v3319
        %3576 = vst [vmem:[%s359 + $0x360] sm:$0xff] %v3320
        %3577 = vst [vmem:[%s359 + $0x368] sm:$0xff] %v3321
        %3578 = vst [vmem:[%s359 + $0x370] sm:$0xff] %v3322
        %3579 = vst [vmem:[%s359 + $0x378] sm:$0xff] %v3323
        %3580 = vst [vmem:[%s359 + $0x380] sm:$0xff] %v3324
        %3581 = vst [vmem:[%s359 + $0x388] sm:$0xff] %v3325
        %3582 = vst [vmem:[%s359 + $0x390] sm:$0xff] %v3326
        %3583 = vst [vmem:[%s359 + $0x398] sm:$0xff] %v3327
        %3584 = vst [vmem:[%s359 + $0x3a0] sm:$0xff] %v3328
        %3585 = vst [vmem:[%s359 + $0x3a8] sm:$0xff] %v3329
        %3586 = vst [vmem:[%s359 + $0x3b0] sm:$0xff] %v3330
        %3587 = vst [vmem:[%s359 + $0x3b8] sm:$0xff] %v3331
        %3588 = vst [vmem:[%s359 + $0x3c0] sm:$0xff] %v3332
        %3589 = vst [vmem:[%s359 + $0x3c8] sm:$0xff] %v3333
        %3590 = vst [vmem:[%s359 + $0x3d0] sm:$0xff] %v3334
        %3591 = vst [vmem:[%s359 + $0x3d8] sm:$0xff] %v3335
        %3592 = vst [vmem:[%s359 + $0x3e0] sm:$0xff] %v3336
        %3593 = vst [vmem:[%s359 + $0x3e8] sm:$0xff] %v3337
        %3594 = vst [vmem:[%s359 + $0x3f0] sm:$0xff] %v3338
        %3595 = vst [vmem:[%s359 + $0x3f8] sm:$0xff] %v3339
        %s3596 = sand.u32 %s168, 1
        %s3597 = scalar_lea.sflag [#allocation5], %s3596
        %s3598 = sand.u32 %s168, 1
        %s3599 = smul.addr %s3598, 1024
        %s3600 = scalar_lea.vmem [#allocation12], %s3599
        // Predicated region
        $region65: #{tpu_custom_call.1} parent=39 // pred_check
          %p3601 = pneg %p178
        $region66: #{tpu_custom_call.1} parent=39 // pred_check_branch
          %3603 = sbr.rel (%p3601) target = $region68
        $region67: #{tpu_custom_call.1} parent=39 // pred_region
          %s3604 = smul.u32 32, %s30
          %s3605 = smul.u32 8, %s31
          %s3607 = ssub.s32 16384, 16384
          %3608 = vsyncadd %s3597, %s3607
          %s3609 = smul.addr %s3604, 16
          %s3610 = sadd.s32 %s3605, %s3609
          %s3611 = smul.addr %s3610, 64
          %s3612 = scalar_lea.hbm %s5, %s3611
          %s3613 = sshll.u32 %s3600, 4
          %s3614 = int_to_ptr.vmem [resolvable:$true] %s3613
          %3619 = dma.vmem_to_hbm [thread:$0]  %s3614, 16384, %s3612, %s3597, 512, 1024, 32
        $region68: #{tpu_custom_call.1} parent=39 // pred_fallthru
          _
      $region40: #{tpu_custom_call.1} parent=5 // pred_fallthru
        _
      %p3620 = scmp.le.s32.totalorder 2, %s21
      // Predicated region
      $region69: #{tpu_custom_call.1} parent=5 // pred_check
        %p3621 = pneg %p3620
      $region70: #{tpu_custom_call.1} parent=5 // pred_check_branch
        %3623 = sbr.rel (%p3621) target = $region72
      $region71: #{tpu_custom_call.1} parent=5 // pred_region
        %s3624 = ssub.s32 %s21, 2
        // Predicated region
        $region73: #{tpu_custom_call.1} parent=71 // pred_check
          %p3625 = pneg %p184
        $region74: #{tpu_custom_call.1} parent=71 // pred_check_branch
          %3627 = sbr.rel (%p3625) target = $region76
        $region75: #{tpu_custom_call.1} parent=71 // pred_region
          %s3628 = sand.u32 %s169, 1
          %s3629 = scalar_lea.sflag [#allocation5], %s3628
          %s3630 = sand.u32 %s169, 1
          %s3631 = smul.addr %s3630, 1024
          %s3632 = scalar_lea.vmem [#allocation12], %s3631
          %3633 = dma.done %s3629, 16384
        $region76: #{tpu_custom_call.1} parent=71 // pred_fallthru
          _
      $region72: #{tpu_custom_call.1} parent=5 // pred_fallthru
        _
    $region6: #{tpu_custom_call.1} parent=1 // loop_footer
      %s25 = sadd.s32 1, %s21
    $region7: #{tpu_custom_call.1} parent=1 // loop_footer_branch
      %20 = sbr.rel target = $region3
    $region8: #{tpu_custom_call.1} parent=1 // loop_exit
      _
    %3634 = vsyncpa [#allocation4], 1
    %s3635 = scalar_lea.sflag [#allocation4], 1
    %3636 = vsyncpa %s3635, 1
    %3637 = vsyncpa [#allocation7], 1
    %3638 = vsyncpa [#allocation10], 1
    %s3639 = scalar_lea.sflag [#allocation10], 1
    %3640 = vsyncpa %s3639, 1
    %3641 = vsyncpa [#allocation5], 1
    %s3642 = scalar_lea.sflag [#allocation5], 1
    %3643 = vsyncpa %s3642, 1

</llo_original>
